<compile_context>
chip_gen: v7x
topology: tpu7x:2x2x1
jax: 0.10.0
libtpu: 0.0.40
codegen_flags: <defaults>
</compile_context>

<pallas_src>
import functools

import jax
import jax.numpy as jnp
import numpy as np
from jax.experimental import pallas as pl
from jax.experimental.pallas import tpu as pltpu

FEAT_DIM = 512            # fixed by nn.Linear(512, n_points)
LEAKY_SLOPE = 0.01        # nn.LeakyReLU default negative_slope
LANE = 128


def _round_up(x, m):
    return (x + m - 1) // m * m


def _vmem_capacity_bytes():
    """Generation-aware VMEM capacity (64 MiB on v7x, 128 MiB on v5e/v6e)."""
    try:
        cap = getattr(pltpu.get_tpu_info(), "vmem_capacity_bytes", None)
        if cap:
            return int(cap)
    except Exception:
        pass
    return 64 * 1024 * 1024   # conservative fallback (v7x per-TC VMEM)


_VMEM_CAPACITY = _vmem_capacity_bytes()
_VMEM_BUDGET = int(_VMEM_CAPACITY * 0.60)   # sizing target for tile selection
_VMEM_LIMIT = int(_VMEM_CAPACITY * 0.75)    # explicit scoped-VMEM limit
_VMEM_SLACK = 2 * 1024 * 1024               # headroom for Mosaic internal scratch


def _choose_col_tile(n_pad, d_pad, batch, budget):
    """Pick the output-column tile width tn.

    Constraints / preferences:
      * tn is a multiple of 128 and divides d_pad exactly (no over-padded columns).
      * double-buffered working set (including the resident feat/w0/b0 inputs,
        which Pallas also double-buffers) fits `budget` with slack.
      * prefer an even grid length >= 4 (v7x: both TensorCores get equal work and
        can each pipeline the next w1-tile DMA), then any even grid, then any.
      * within a preference class, take the largest tn (lane-dense stores,
        fewer per-step overheads, >=512 keeps HBM roofline fraction high).
    """
    resident = 2 * (batch * FEAT_DIM * 2        # feat (bf16)
                    + FEAT_DIM * n_pad * 2      # w0 (bf16)
                    + n_pad * 4)                # b0 (f32)

    def fits(tn):
        streamed = 2 * (n_pad * tn * 2          # w1 tile (bf16)
                        + tn * 4                # b1 tile (f32)
                        + batch * tn * 4)       # out tile (f32)
        return resident + streamed + _VMEM_SLACK <= budget

    divisors = [t for t in range(LANE, d_pad + 1, LANE) if d_pad % t == 0]
    fitting = [t for t in divisors if fits(t)]
    if not fitting:
        return LANE                              # best effort

    def grid_len(t):
        return d_pad // t

    for pred in (lambda g: g % 2 == 0 and g >= 4,   # v7x: 2 TCs, >=2 steps each
                 lambda g: g % 2 == 0,
                 lambda g: True):
        cands = [t for t in fitting if pred(grid_len(t))]
        if cands:
            return max(cands)
    return LANE


# ------------------------- fused point-head kernel -------------------------
# Resident (index (0,0), fetched once): feat (B,512) bf16, w0 (512,n_pad) bf16,
#   b0 (1,n_pad) f32.
# Streamed per grid step j: w1 tile (1,n_pad,tn) bf16 (contiguous block),
#   b1 tile (1,tn) f32, out tile (B,tn) f32.
def _point_head_kernel(feat_ref, w0_ref, b0_ref, w1_ref, b1_ref, out_ref):
    # layer 0 recomputed per column tile: ~1 MFLOP, hidden under the w1 DMA.
    h = jnp.dot(feat_ref[...], w0_ref[...],
                preferred_element_type=jnp.float32) + b0_ref[...]
    h = jnp.where(h >= 0.0, h, LEAKY_SLOPE * h)
    # layer 1 column slab: bf16 x bf16 MXU matmul, f32 accumulate, tanh in f32.
    y = jnp.dot(h.astype(jnp.bfloat16), w1_ref[0],
                preferred_element_type=jnp.float32) + b1_ref[...]
    out_ref[...] = jnp.tanh(y).astype(out_ref.dtype)


def prepare_point_head(w0, b0, w1, b1, *, n_points, batch_size):
    """One-time weight prep (NOT part of the per-call forward).

    Pads weights to lane-dense shapes, keeps streamed weights in bf16, and
    pre-lays-out w1 as contiguous (T, n_pad, tn) column-tile blocks so every
    streamed tile is a single contiguous DMA.
    """
    out_dim = 3 * n_points
    n_pad = _round_up(n_points, LANE)
    d_pad = _round_up(out_dim, LANE)
    tn = _choose_col_tile(n_pad, d_pad, batch_size, _VMEM_BUDGET)
    T = d_pad // tn

    w0p = jnp.pad(jnp.asarray(w0, jnp.bfloat16), ((0, 0), (0, n_pad - n_points)))
    b0p = jnp.pad(jnp.asarray(b0, jnp.float32), ((0, 0), (0, n_pad - n_points)))
    w1p = jnp.pad(jnp.asarray(w1, jnp.bfloat16),
                  ((0, n_pad - n_points), (0, d_pad - out_dim)))
    # (n_pad, d_pad) -> (T, n_pad, tn): tile j holds columns [j*tn, (j+1)*tn).
    w1t = w1p.reshape(n_pad, T, tn).transpose(1, 0, 2)
    b1p = jnp.pad(jnp.asarray(b1, jnp.float32), ((0, 0), (0, d_pad - out_dim)))

    prepped = (w0p, b0p, w1t, b1p)
    for a in prepped:                       # materialize once, outside the forward
        jax.block_until_ready(a)
    return prepped


@functools.partial(jax.jit, static_argnames=("n_points",))
def single_view_to_3d_point(encoded_feat, w0p, b0p, w1t, b1p, *, n_points):
    """Pallas forward for the 'point' branch of SingleViewto3D.

    encoded_feat: (B, 512) float32 (args.load_feat=True => already-encoded features)
    w0p: (512, n_pad) bf16, b0p: (1, n_pad) f32            [pre-padded]
    w1t: (T, n_pad, tn) bf16 column-tile blocks, b1p: (1, d_pad) f32
    returns: (B, n_points, 3) float32
    """
    B = encoded_feat.shape[0]
    out_dim = 3 * n_points
    n_pad = w0p.shape[1]
    T, _, tn = w1t.shape
    d_pad = T * tn

    feat = encoded_feat.astype(jnp.bfloat16)   # tiny (B x 512); no in-kernel cast

    cost = pl.CostEstimate(
        flops=2 * B * FEAT_DIM * n_pad * T + 2 * B * n_pad * d_pad,
        transcendentals=B * d_pad,
        bytes_accessed=(T * n_pad * tn * 2          # streamed w1 (dominant)
                        + FEAT_DIM * n_pad * 2 + n_pad * 4 + d_pad * 4
                        + B * FEAT_DIM * 2 + B * d_pad * 4))

    out = pl.pallas_call(
        _point_head_kernel,
        out_shape=jax.ShapeDtypeStruct((B, d_pad), jnp.float32),
        grid=(T,),
        in_specs=[
            pl.BlockSpec((B, FEAT_DIM), lambda j: (0, 0)),     # resident
            pl.BlockSpec((FEAT_DIM, n_pad), lambda j: (0, 0)),  # resident
            pl.BlockSpec((1, n_pad), lambda j: (0, 0)),         # resident
            pl.BlockSpec((1, n_pad, tn), lambda j: (j, 0, 0)),  # streamed w1 tile
            pl.BlockSpec((1, tn), lambda j: (0, j)),            # streamed b1 tile
        ],
        out_specs=pl.BlockSpec((B, tn), lambda j: (0, j)),
        compiler_params=pltpu.CompilerParams(
            dimension_semantics=("parallel",),
            vmem_limit_bytes=_VMEM_LIMIT),
        cost_estimate=cost,
    )(feat, w0p, b0p, w1t, b1p)

    # torch: x.reshape(-1, n_points, 3) -- row-major, identical to jnp reshape.
    return out[:, :out_dim].reshape(B, n_points, 3)


def init_params(key, n_points):
    """Deterministic init matching nn.Linear default (uniform +/- 1/sqrt(fan_in)).

    Weights are stored in bf16 (the streamed dtype); biases stay f32.
    """
    k0, k1, k2, k3 = jax.random.split(key, 4)
    lim0 = 1.0 / np.sqrt(FEAT_DIM)
    lim1 = 1.0 / np.sqrt(n_points)
    w0 = jax.random.uniform(k0, (FEAT_DIM, n_points), jnp.float32,
                            -lim0, lim0).astype(jnp.bfloat16)
    b0 = jax.random.uniform(k1, (1, n_points), jnp.float32, -lim0, lim0)
    w1 = jax.random.uniform(k2, (n_points, 3 * n_points), jnp.float32,
                            -lim1, lim1).astype(jnp.bfloat16)
    b1 = jax.random.uniform(k3, (1, 3 * n_points), jnp.float32, -lim1, lim1)
    return w0, b0, w1, b1


def reference_forward(encoded_feat, w0, b0, w1, b1, n_points):
    """Pure-JAX reference with the same bf16-weight / f32-accumulate recipe.

    NOTE: weights (and the inter-layer activation) are bf16 by design; a pure-f32
    PyTorch run would differ beyond ~2e-3 -- the bf16 recipe is intentional.
    """
    h = jnp.dot(encoded_feat.astype(jnp.bfloat16), w0,
                preferred_element_type=jnp.float32) + b0
    h = jnp.where(h >= 0.0, h, LEAKY_SLOPE * h)
    y = jnp.dot(h.astype(jnp.bfloat16), w1,
                preferred_element_type=jnp.float32) + b1
    return jnp.tanh(y).reshape(-1, n_points, 3)


if __name__ == "__main__":
    B = 2
    N_POINTS = 1000   # non-multiple of 128: exercises lane padding + multi-step column grid

    key = jax.random.PRNGKey(0)
    k_feat, k_param = jax.random.split(key)

    # args.load_feat=True => `images` are already encoded features of shape (B, 512).
    encoded_feat = jax.random.normal(k_feat, (B, FEAT_DIM), jnp.float32)
    w0, b0, w1, b1 = init_params(k_param, N_POINTS)

    # One-time weight prep (padding / bf16 / tile layout) -- outside the forward.
    w0p, b0p, w1t, b1p = prepare_point_head(w0, b0, w1, b1,
                                            n_points=N_POINTS, batch_size=B)

    pred = single_view_to_3d_point(encoded_feat, w0p, b0p, w1t, b1p,
                                   n_points=N_POINTS)
    pred = jax.block_until_ready(pred)

    ref = reference_forward(encoded_feat, w0, b0, w1, b1, N_POINTS)
    np.testing.assert_allclose(np.asarray(pred), np.asarray(ref), rtol=2e-3, atol=2e-3)
    assert pred.shape == (B, N_POINTS, 3)

    print("KERNEL_OK")
</pallas_src>

<mosaic_0001>
module attributes {stable_mosaic.version = 11 : i64} {
  func.func @_point_head_kernel(%arg0: i32, %arg1: memref<2x512xbf16, #tpu.memory_space<vmem>>, %arg2: memref<512x1024xbf16, #tpu.memory_space<vmem>>, %arg3: memref<1x1024xf32, #tpu.memory_space<vmem>>, %arg4: memref<1x1024x768xbf16, #tpu.memory_space<vmem>>, %arg5: memref<1x768xf32, #tpu.memory_space<vmem>>, %arg6: memref<2x768xf32, #tpu.memory_space<vmem>>) attributes {dimension_semantics = [#tpu.dimension_semantics<parallel>], iteration_bounds = array<i64: 4>, scalar_prefetch = 0 : i64, scratch_operands = 0 : i64, tpu.core_type = #tpu.core_type<tc>, window_params = [{pipeline_mode = #tpu.pipeline_mode<synchronous>, transform_indices = @transform_0, window_bounds = array<i64: 2, 512>}, {pipeline_mode = #tpu.pipeline_mode<synchronous>, transform_indices = @transform_1, window_bounds = array<i64: 512, 1024>}, {pipeline_mode = #tpu.pipeline_mode<synchronous>, transform_indices = @transform_2, window_bounds = array<i64: 1, 1024>}, {transform_indices = @transform_3, window_bounds = array<i64: 1, 1024, 768>}, {transform_indices = @transform_4, window_bounds = array<i64: 1, 768>}, {transform_indices = @transform_5, window_bounds = array<i64: 2, 768>}]} {
    %c0 = arith.constant 0 : index
    %c0_0 = arith.constant 0 : index
    %0 = vector.load %arg1[%c0, %c0_0] : memref<2x512xbf16, #tpu.memory_space<vmem>>, vector<2x512xbf16>
    %c0_1 = arith.constant 0 : index
    %c0_2 = arith.constant 0 : index
    %1 = vector.load %arg2[%c0_1, %c0_2] : memref<512x1024xbf16, #tpu.memory_space<vmem>>, vector<512x1024xbf16>
    %cst = arith.constant dense<0.000000e+00> : vector<2x1024xf32>
    %2 = tpu.matmul %0, %1, %cst {dimension_numbers = #tpu.dot_dimension_numbers<[1], [0], [0], [1], [0, 0, 1, 1], [], []>} : vector<2x512xbf16>, vector<512x1024xbf16>, vector<2x1024xf32> -> vector<2x1024xf32>
    %c0_3 = arith.constant 0 : index
    %c0_4 = arith.constant 0 : index
    %3 = vector.load %arg3[%c0_3, %c0_4] : memref<1x1024xf32, #tpu.memory_space<vmem>>, vector<1x1024xf32>
    %4 = vector.broadcast %3 : vector<1x1024xf32> to vector<2x1024xf32>
    %5 = arith.addf %2, %4 : vector<2x1024xf32>
    %cst_5 = arith.constant 0.000000e+00 : f32
    %6 = vector.broadcast %cst_5 : f32 to vector<2x1024xf32>
    %7 = arith.cmpf oge, %5, %6 : vector<2x1024xf32>
    %cst_6 = arith.constant 0.00999999977 : f32
    %8 = vector.broadcast %cst_6 : f32 to vector<2x1024xf32>
    %9 = arith.mulf %8, %5 : vector<2x1024xf32>
    %10 = arith.select %7, %5, %9 : vector<2x1024xi1>, vector<2x1024xf32>
    %11 = arith.truncf %10 : vector<2x1024xf32> to vector<2x1024xbf16>
    %c0_7 = arith.constant 0 : index
    %c0_8 = arith.constant 0 : index
    %c0_9 = arith.constant 0 : index
    %12 = vector.load %arg4[%c0_7, %c0_8, %c0_9] : memref<1x1024x768xbf16, #tpu.memory_space<vmem>>, vector<1x1024x768xbf16>
    %13 = vector.shape_cast %12 : vector<1x1024x768xbf16> to vector<1024x768xbf16>
    %cst_10 = arith.constant dense<0.000000e+00> : vector<2x768xf32>
    %14 = tpu.matmul %11, %13, %cst_10 {dimension_numbers = #tpu.dot_dimension_numbers<[1], [0], [0], [1], [0, 0, 1, 1], [], []>} : vector<2x1024xbf16>, vector<1024x768xbf16>, vector<2x768xf32> -> vector<2x768xf32>
    %c0_11 = arith.constant 0 : index
    %c0_12 = arith.constant 0 : index
    %15 = vector.load %arg5[%c0_11, %c0_12] : memref<1x768xf32, #tpu.memory_space<vmem>>, vector<1x768xf32>
    %16 = vector.broadcast %15 : vector<1x768xf32> to vector<2x768xf32>
    %17 = arith.addf %14, %16 : vector<2x768xf32>
    %18 = math.tanh %17 : vector<2x768xf32>
    %c0_13 = arith.constant 0 : index
    %c0_14 = arith.constant 0 : index
    %19 = vector.load %arg6[%c0_13, %c0_14] : memref<2x768xf32, #tpu.memory_space<vmem>>, vector<2x768xf32>
    tpu.vector_store %arg6[%c0_13, %c0_14], %18 {strides = array<i32>} : memref<2x768xf32, #tpu.memory_space<vmem>>, vector<2x768xf32>,
    return
  }
  func.func @transform_0(%arg0: i32) -> (i32, i32) {
    %c0_i32 = arith.constant 0 : i32
    %c0_i32_0 = arith.constant 0 : i32
    %c0_i32_1 = arith.constant 0 : i32
    return %c0_i32, %c0_i32_0 : i32, i32
  }
  func.func @transform_1(%arg0: i32) -> (i32, i32) {
    %c0_i32 = arith.constant 0 : i32
    %c0_i32_0 = arith.constant 0 : i32
    %c0_i32_1 = arith.constant 0 : i32
    return %c0_i32, %c0_i32_0 : i32, i32
  }
  func.func @transform_2(%arg0: i32) -> (i32, i32) {
    %c0_i32 = arith.constant 0 : i32
    %c0_i32_0 = arith.constant 0 : i32
    %c0_i32_1 = arith.constant 0 : i32
    return %c0_i32, %c0_i32_0 : i32, i32
  }
  func.func @transform_3(%arg0: i32) -> (i32, i32, i32) {
    %c0_i32 = arith.constant 0 : i32
    %c0_i32_0 = arith.constant 0 : i32
    %c0_i32_1 = arith.constant 0 : i32
    return %arg0, %c0_i32, %c0_i32_0 : i32, i32, i32
  }
  func.func @transform_4(%arg0: i32) -> (i32, i32) {
    %c0_i32 = arith.constant 0 : i32
    %c0_i32_0 = arith.constant 0 : i32
    return %c0_i32, %arg0 : i32, i32
  }
  func.func @transform_5(%arg0: i32) -> (i32, i32) {
    %c0_i32 = arith.constant 0 : i32
    %c0_i32_0 = arith.constant 0 : i32
    return %c0_i32, %arg0 : i32, i32
  }
}

</mosaic_0001>

<llo_original>
// kernel: single_view_to_3d_point.1
$region0: #{single_view_to_3d_point.1}
  #allocation0 [shape = 'u32[]', space=smem, size = 0x4, offset = 0x4, fixed_abs, tag = 'smem constant byte address 0x4 - core index']
  #allocation1 [shape = 'u32[144,128]{1,0:T(1,128)}', space=vmem, size = 0x12000, scoped, tag = 'internal scratch']
  %s0 = inlined_call_operand.vmem [shape: bf16[2,512], index: 0, kind: input, shape index: {}]
  %s1 = inlined_call_operand.hbm [shape: bf16[512,1024], index: 1, kind: input, shape index: {}]
  %s2 = inlined_call_operand.hbm [shape: f32[1,1024], index: 2, kind: input, shape index: {}]
  %s3 = inlined_call_operand.hbm [shape: bf16[4,1024,768], index: 3, kind: input, shape index: {}]
  %s4 = inlined_call_operand.hbm [shape: f32[1,3072], index: 4, kind: input, shape index: {}]
  %s5 = inlined_call_operand.vmem [shape: f32[2,3072], index: 5, kind: output, shape index: {}]
  %s6 = sld [smem:[#allocation0]]
  $region69: #{single_view_to_3d_point.1} parent=0
    _
  %s8 = ssub.s32 1, %s6
  %s9 = scalar_select 0, %s8, %s6
  $region1: #{single_view_to_3d_point.1} parent=0
    #allocation2 [shape = 'u8[1048576]{0}', space=vmem, size = 0x100000, scoped, tag = 'input window, operand 1, single buffered']
    #allocation3 [shape = 's32[2]{0}', space=sflag, size = 0x8, scoped, tag = 'scoped memory for single_view_to_3d_point.1']
    #allocation4 [shape = 'u8[4096]{0}', space=vmem, size = 0x1000, scoped, tag = 'input window, operand 2, single buffered']
    #allocation5 [shape = 's32[1]{0}', space=sflag, size = 0x4, scoped, tag = 'scoped memory for single_view_to_3d_point.1']
    #allocation6 [shape = 'u8[3145728]{0}', space=vmem, size = 0x300000, scoped, tag = 'input window, operand 3']
    #allocation7 [shape = 'u8[6144]{0}', space=vmem, size = 0x1800, scoped, tag = 'input window, operand 4']
    %10 = vsyncpa [#allocation3], 0
    %11 = vsyncpa [#allocation5], 0
    loop: start=0, step=1, limit=6
    $region2: #{single_view_to_3d_point.1} parent=1 // loop_pre_header
      _
    $region3: #{single_view_to_3d_point.1} parent=1 // loop_header
      %s13 = sphi 0, %s17
      %p14 = scmp.ge.s32.totalorder %s13, 6
      %s21 = sphi 0, %s21
      %s23 = sphi 0, %s21
      %s24 = sphi 0, %s23
      %s38 = sphi 0, %s24
      %s42 = sphi 0, %s42
      %s44 = sphi 0, %s42
      %s45 = sphi 0, %s44
      %s59 = sphi 0, %s45
      %s63 = sphi 0, %s63
      %s65 = sphi 0, %s63
      %s66 = sphi 0, %s65
      %s80 = sphi 0, %s66
      %s86 = sphi 0, %s88
      %s89 = sphi 0, %s86
      %s90 = sphi 0, %s89
      %s106 = sphi 0, %s90
      %s112 = sphi 0, %s114
      %s115 = sphi 0, %s112
      %s116 = sphi 0, %s115
      %s132 = sphi 0, %s116
      %s138 = sphi 0, %s140
      %s141 = sphi 0, %s138
      %s142 = sphi 0, %s141
      %s158 = sphi 0, %s142
    $region4: #{single_view_to_3d_point.1} parent=1 // loop_header_branch
      %16 = sbr.rel (%p14) target = $region8
    $region5: #{single_view_to_3d_point.1} parent=1 // loop_body
      %s18 = ssub.s32 %s13, 1
      %s19 = ssub.s32 %s13, 2
      %s20 = sadd.s32 %s13, 1
      %s22 = sadd.s32 %s21, 1
      %p25 = scmp.eq.s32.totalorder %s13, 3
      %p26 = scmp.ne.s32.totalorder %s21, %s23
      %p27 = scmp.eq.s32.totalorder %s13, 0
      %p28 = por %p26, %p27
      %p29 = scmp.ne.s32.totalorder %s21, %s23
      %p30 = scmp.eq.s32.totalorder %s18, 3
      %p31 = por %p29, %p30
      %p32 = scmp.ne.s32.totalorder %s23, %s24
      %p33 = scmp.eq.s32.totalorder %s18, 0
      %p34 = por %p32, %p33
      %p35 = scmp.ne.s32.totalorder %s23, %s24
      %p36 = scmp.eq.s32.totalorder %s19, 3
      %p37 = por %p35, %p36
      %p39 = scmp.ne.s32.totalorder %s24, %s38
      %p40 = scmp.eq.s32.totalorder %s19, 0
      %p41 = por %p39, %p40
      %s43 = sadd.s32 %s42, 1
      %p46 = scmp.eq.s32.totalorder %s13, 3
      %p47 = scmp.ne.s32.totalorder %s42, %s44
      %p48 = scmp.eq.s32.totalorder %s13, 0
      %p49 = por %p47, %p48
      %p50 = scmp.ne.s32.totalorder %s42, %s44
      %p51 = scmp.eq.s32.totalorder %s18, 3
      %p52 = por %p50, %p51
      %p53 = scmp.ne.s32.totalorder %s44, %s45
      %p54 = scmp.eq.s32.totalorder %s18, 0
      %p55 = por %p53, %p54
      %p56 = scmp.ne.s32.totalorder %s44, %s45
      %p57 = scmp.eq.s32.totalorder %s19, 3
      %p58 = por %p56, %p57
      %p60 = scmp.ne.s32.totalorder %s45, %s59
      %p61 = scmp.eq.s32.totalorder %s19, 0
      %p62 = por %p60, %p61
      %s64 = sadd.s32 %s63, 1
      %p67 = scmp.eq.s32.totalorder %s13, 3
      %p68 = scmp.ne.s32.totalorder %s63, %s65
      %p69 = scmp.eq.s32.totalorder %s13, 0
      %p70 = por %p68, %p69
      %p71 = scmp.ne.s32.totalorder %s63, %s65
      %p72 = scmp.eq.s32.totalorder %s18, 3
      %p73 = por %p71, %p72
      %p74 = scmp.ne.s32.totalorder %s65, %s66
      %p75 = scmp.eq.s32.totalorder %s18, 0
      %p76 = por %p74, %p75
      %p77 = scmp.ne.s32.totalorder %s65, %s66
      %p78 = scmp.eq.s32.totalorder %s19, 3
      %p79 = por %p77, %p78
      %p81 = scmp.ne.s32.totalorder %s66, %s80
      %p82 = scmp.eq.s32.totalorder %s19, 0
      %p83 = por %p81, %p82
      %s84 = ssub.s32 %s13, %s20
      %p85 = scmp.eq.s32.totalorder %s84, 0
      %s87 = sadd.s32 %s86, 1
      %s88 = scalar_select %p85, %s86, %s87
      %p91 = pneg %p85
      %p92 = scmp.eq.s32.totalorder %s13, 3
      %p93 = por %p91, %p92
      %p94 = scmp.ne.s32.totalorder %s86, %s89
      %p95 = scmp.eq.s32.totalorder %s13, 0
      %p96 = por %p94, %p95
      %p97 = scmp.ne.s32.totalorder %s86, %s89
      %p98 = scmp.eq.s32.totalorder %s18, 3
      %p99 = por %p97, %p98
      %p100 = scmp.ne.s32.totalorder %s89, %s90
      %p101 = scmp.eq.s32.totalorder %s18, 0
      %p102 = por %p100, %p101
      %p103 = scmp.ne.s32.totalorder %s89, %s90
      %p104 = scmp.eq.s32.totalorder %s19, 3
      %p105 = por %p103, %p104
      %p107 = scmp.ne.s32.totalorder %s90, %s106
      %p108 = scmp.eq.s32.totalorder %s19, 0
      %p109 = por %p107, %p108
      %s110 = ssub.s32 %s13, %s20
      %p111 = scmp.eq.s32.totalorder %s110, 0
      %s113 = sadd.s32 %s112, 1
      %s114 = scalar_select %p111, %s112, %s113
      %p117 = pneg %p111
      %p118 = scmp.eq.s32.totalorder %s13, 3
      %p119 = por %p117, %p118
      %p120 = scmp.ne.s32.totalorder %s112, %s115
      %p121 = scmp.eq.s32.totalorder %s13, 0
      %p122 = por %p120, %p121
      %p123 = scmp.ne.s32.totalorder %s112, %s115
      %p124 = scmp.eq.s32.totalorder %s18, 3
      %p125 = por %p123, %p124
      %p126 = scmp.ne.s32.totalorder %s115, %s116
      %p127 = scmp.eq.s32.totalorder %s18, 0
      %p128 = por %p126, %p127
      %p129 = scmp.ne.s32.totalorder %s115, %s116
      %p130 = scmp.eq.s32.totalorder %s19, 3
      %p131 = por %p129, %p130
      %p133 = scmp.ne.s32.totalorder %s116, %s132
      %p134 = scmp.eq.s32.totalorder %s19, 0
      %p135 = por %p133, %p134
      %s136 = ssub.s32 %s13, %s20
      %p137 = scmp.eq.s32.totalorder %s136, 0
      %s139 = sadd.s32 %s138, 1
      %s140 = scalar_select %p137, %s138, %s139
      %p143 = pneg %p137
      %p144 = scmp.eq.s32.totalorder %s13, 3
      %p145 = por %p143, %p144
      %p146 = scmp.ne.s32.totalorder %s138, %s141
      %p147 = scmp.eq.s32.totalorder %s13, 0
      %p148 = por %p146, %p147
      %p149 = scmp.ne.s32.totalorder %s138, %s141
      %p150 = scmp.eq.s32.totalorder %s18, 3
      %p151 = por %p149, %p150
      %p152 = scmp.ne.s32.totalorder %s141, %s142
      %p153 = scmp.eq.s32.totalorder %s18, 0
      %p154 = por %p152, %p153
      %p155 = scmp.ne.s32.totalorder %s141, %s142
      %p156 = scmp.eq.s32.totalorder %s19, 3
      %p157 = por %p155, %p156
      %p159 = scmp.ne.s32.totalorder %s142, %s158
      %p160 = scmp.eq.s32.totalorder %s19, 0
      %p161 = por %p159, %p160
      %p162 = scmp.le.s32.totalorder 1, %s13
      %p163 = scmp.lt.s32.totalorder %s13, 5
      %p164 = pnand %p162, %p163
      %p165 = pneg %p164
      // Predicated region
      $region9: #{single_view_to_3d_point.1} parent=5 // pred_check
        _
      $region10: #{single_view_to_3d_point.1} parent=5 // pred_check_branch
        %167 = sbr.rel (%p164) target = $region12
      $region11: #{single_view_to_3d_point.1} parent=5 // pred_region
        %s168 = ssub.s32 %s13, 1
        // Predicated region
        $region13: #{single_view_to_3d_point.1} parent=11 // pred_check
          %p169 = pneg %p34
        $region14: #{single_view_to_3d_point.1} parent=11 // pred_check_branch
          %171 = sbr.rel (%p169) target = $region16
        $region15: #{single_view_to_3d_point.1} parent=11 // pred_region
          _
        $region16: #{single_view_to_3d_point.1} parent=11 // pred_fallthru
          _
        // Predicated region
        $region17: #{single_view_to_3d_point.1} parent=11 // pred_check
          %p172 = pneg %p55
        $region18: #{single_view_to_3d_point.1} parent=11 // pred_check_branch
          %174 = sbr.rel (%p172) target = $region20
        $region19: #{single_view_to_3d_point.1} parent=11 // pred_region
          %s176 = ssub.s32 32768, 32768
          %177 = vsyncadd [#allocation3], %s176
          %s178 = sshll.u32 [#allocation2], 4
          %s179 = int_to_ptr.vmem [resolvable:$true] %s178
          %184 = dma.hbm_to_vmem [thread:$0]  %s1, 32768, %s179, [#allocation3], 512, 512, 32
        $region20: #{single_view_to_3d_point.1} parent=11 // pred_fallthru
          _
        // Predicated region
        $region21: #{single_view_to_3d_point.1} parent=11 // pred_check
          %p185 = pneg %p76
        $region22: #{single_view_to_3d_point.1} parent=11 // pred_check_branch
          %187 = sbr.rel (%p185) target = $region24
        $region23: #{single_view_to_3d_point.1} parent=11 // pred_region
          %s189 = ssub.s32 128, 128
          %190 = vsyncadd [#allocation5], %s189
          %s192 = sshll.u32 [#allocation4], 4
          %s193 = int_to_ptr.vmem [resolvable:$true] %s192
          %195 = dma.hbm_to_vmem [thread:$0]  %s2, 128, %s193, [#allocation5]
        $region24: #{single_view_to_3d_point.1} parent=11 // pred_fallthru
          _
      $region12: #{single_view_to_3d_point.1} parent=5 // pred_fallthru
        _
      %p196 = scmp.lt.s32.totalorder %s13, 4
      // Predicated region
      $region25: #{single_view_to_3d_point.1} parent=5 // pred_check
        %p197 = pneg %p196
      $region26: #{single_view_to_3d_point.1} parent=5 // pred_check_branch
        %199 = sbr.rel (%p197) target = $region28
      $region27: #{single_view_to_3d_point.1} parent=5 // pred_region
        // Predicated region
        $region29: #{single_view_to_3d_point.1} parent=27 // pred_check
          %p200 = pneg %p96
        $region30: #{single_view_to_3d_point.1} parent=27 // pred_check_branch
          %202 = sbr.rel (%p200) target = $region32
        $region31: #{single_view_to_3d_point.1} parent=27 // pred_region
          %s203 = sand.u32 %s13, 1
          %s204 = scalar_lea.sflag [#allocation3], %s203
          %s205 = sand.u32 %s86, 1
          %s206 = smul.addr %s205, 3072
          %s207 = scalar_lea.vmem [#allocation6], %s206
          %s209 = ssub.s32 49152, 49152
          %210 = vsyncadd %s204, %s209
          %s211 = smul.addr %s13, 768
          %s212 = smul.addr %s211, 64
          %s213 = scalar_lea.hbm %s3, %s212
          %s214 = sshll.u32 %s207, 4
          %s215 = int_to_ptr.vmem [resolvable:$true] %s214
          %220 = dma.hbm_to_vmem [thread:$0]  %s213, 49152, %s215, %s204, 384, 384, 24
        $region32: #{single_view_to_3d_point.1} parent=27 // pred_fallthru
          _
        // Predicated region
        $region33: #{single_view_to_3d_point.1} parent=27 // pred_check
          %p221 = pneg %p122
        $region34: #{single_view_to_3d_point.1} parent=27 // pred_check_branch
          %223 = sbr.rel (%p221) target = $region36
        $region35: #{single_view_to_3d_point.1} parent=27 // pred_region
          %s224 = sand.u32 %s13, 1
          %s225 = scalar_lea.sflag [#allocation3], %s224
          %s226 = sand.u32 %s112, 1
          %s227 = smul.addr %s226, 6
          %s228 = scalar_lea.vmem [#allocation7], %s227
          %s229 = smul.u32 6, %s13
          %s231 = ssub.s32 96, 96
          %232 = vsyncadd %s225, %s231
          %s233 = smul.addr %s229, 16
          %s234 = scalar_lea.hbm %s4, %s233
          %s236 = sshll.u32 %s228, 4
          %s237 = int_to_ptr.vmem [resolvable:$true] %s236
          %239 = dma.hbm_to_vmem [thread:$0]  %s234, 96, %s237, %s225
        $region36: #{single_view_to_3d_point.1} parent=27 // pred_fallthru
          _
      $region28: #{single_view_to_3d_point.1} parent=5 // pred_fallthru
        _
      %p240 = scmp.le.s32.totalorder 1, %s13
      %p241 = scmp.lt.s32.totalorder %s13, 5
      %p242 = pnand %p240, %p241
      %p243 = pneg %p242
      // Predicated region
      $region37: #{single_view_to_3d_point.1} parent=5 // pred_check
        _
      $region38: #{single_view_to_3d_point.1} parent=5 // pred_check_branch
        %245 = sbr.rel (%p242) target = $region40
      $region39: #{single_view_to_3d_point.1} parent=5 // pred_region
        %s246 = ssub.s32 %s13, 1
        // Predicated region
        $region41: #{single_view_to_3d_point.1} parent=39 // pred_check
          %p247 = pneg %p55
        $region42: #{single_view_to_3d_point.1} parent=39 // pred_check_branch
          %249 = sbr.rel (%p247) target = $region44
        $region43: #{single_view_to_3d_point.1} parent=39 // pred_region
          %250 = dma.done [#allocation3], 32768
        $region44: #{single_view_to_3d_point.1} parent=39 // pred_fallthru
          _
        // Predicated region
        $region45: #{single_view_to_3d_point.1} parent=39 // pred_check
          %p251 = pneg %p76
        $region46: #{single_view_to_3d_point.1} parent=39 // pred_check_branch
          %253 = sbr.rel (%p251) target = $region48
        $region47: #{single_view_to_3d_point.1} parent=39 // pred_region
          %254 = dma.done [#allocation5], 128
        $region48: #{single_view_to_3d_point.1} parent=39 // pred_fallthru
          _
        %s255 = sand.u32 %s18, 1
        %s256 = scalar_lea.sflag [#allocation3], %s255
        %s257 = sand.u32 %s89, 1
        %s258 = smul.addr %s257, 3072
        %s259 = scalar_lea.vmem [#allocation6], %s258
        // Predicated region
        $region49: #{single_view_to_3d_point.1} parent=39 // pred_check
          %p260 = pneg %p102
        $region50: #{single_view_to_3d_point.1} parent=39 // pred_check_branch
          %262 = sbr.rel (%p260) target = $region52
        $region51: #{single_view_to_3d_point.1} parent=39 // pred_region
          %263 = dma.done %s256, 49152
        $region52: #{single_view_to_3d_point.1} parent=39 // pred_fallthru
          _
        %s264 = sand.u32 %s18, 1
        %s265 = scalar_lea.sflag [#allocation3], %s264
        %s266 = sand.u32 %s115, 1
        %s267 = smul.addr %s266, 6
        %s268 = scalar_lea.vmem [#allocation7], %s267
        // Predicated region
        $region53: #{single_view_to_3d_point.1} parent=39 // pred_check
          %p269 = pneg %p128
        $region54: #{single_view_to_3d_point.1} parent=39 // pred_check_branch
          %271 = sbr.rel (%p269) target = $region56
        $region55: #{single_view_to_3d_point.1} parent=39 // pred_region
          %272 = dma.done %s265, 96
        $region56: #{single_view_to_3d_point.1} parent=39 // pred_fallthru
          _
        %p273 = pneg %p34
        %p274 = pneg %p31
        %p275 = pneg %p55
        %p276 = pneg %p52
        %p277 = pneg %p76
        %p278 = pneg %p73
        %s279 = sand.u32 %s18, 1
        %s280 = scalar_lea.sflag [#allocation3], %s279
        %s281 = sand.u32 %s89, 1
        %s282 = smul.addr %s281, 3072
        %s283 = scalar_lea.vmem [#allocation6], %s282
        %p284 = pneg %p102
        %p285 = pneg %p99
        %s286 = sand.u32 %s18, 1
        %s287 = scalar_lea.sflag [#allocation3], %s286
        %s288 = sand.u32 %s115, 1
        %s289 = smul.addr %s288, 6
        %s290 = scalar_lea.vmem [#allocation7], %s289
        %p291 = pneg %p128
        %p292 = pneg %p125
        %p293 = pneg %p154
        %p294 = pneg %p151
        %s295 = smul.u32 6, %s18
        %p296 = scmp.lt.s32.totalorder %s295, 23
        %s297 = scalar_select %p296, %s295, 23
        %s298 = smul.addr %s297, 2
        %s299 = scalar_lea.vmem %s5, %s298
        %s300 = smul.u32 6, %s18
        %s301 = smul.u32 6, %s18
        %p302 = scmp.lt.s32.totalorder %s301, 23
        %s303 = scalar_select %p302, %s301, 23
        %s304 = smul.addr %s303, 2
        %s305 = scalar_lea.vmem %s5, %s304
        %s306 = smul.u32 6, %s18
        %v307 = vld [vmem:[%s0] sm:$0xf]
        %v308 = vld [vmem:[#allocation2] sm:$0xff]
        %v309 = vld [vmem:[#allocation2 + $0x8] sm:$0xff]
        %v310 = vld [vmem:[#allocation2 + $0x10] sm:$0xff]
        %v311 = vld [vmem:[#allocation2 + $0x18] sm:$0xff]
        %v312 = vld [vmem:[#allocation2 + $0x20] sm:$0xff]
        %v313 = vld [vmem:[#allocation2 + $0x28] sm:$0xff]
        %v314 = vld [vmem:[#allocation2 + $0x30] sm:$0xff]
        %v315 = vld [vmem:[#allocation2 + $0x38] sm:$0xff]
        %v316 = vld [vmem:[#allocation2 + $0x40] sm:$0xff]
        %v317 = vld [vmem:[#allocation2 + $0x48] sm:$0xff]
        %v318 = vld [vmem:[#allocation2 + $0x50] sm:$0xff]
        %v319 = vld [vmem:[#allocation2 + $0x58] sm:$0xff]
        %v320 = vld [vmem:[#allocation2 + $0x60] sm:$0xff]
        %v321 = vld [vmem:[#allocation2 + $0x68] sm:$0xff]
        %v322 = vld [vmem:[#allocation2 + $0x70] sm:$0xff]
        %v323 = vld [vmem:[#allocation2 + $0x78] sm:$0xff]
        %v324 = vld [vmem:[#allocation2 + $0x80] sm:$0xff]
        %v325 = vld [vmem:[#allocation2 + $0x88] sm:$0xff]
        %v326 = vld [vmem:[#allocation2 + $0x90] sm:$0xff]
        %v327 = vld [vmem:[#allocation2 + $0x98] sm:$0xff]
        %v328 = vld [vmem:[#allocation2 + $0xa0] sm:$0xff]
        %v329 = vld [vmem:[#allocation2 + $0xa8] sm:$0xff]
        %v330 = vld [vmem:[#allocation2 + $0xb0] sm:$0xff]
        %v331 = vld [vmem:[#allocation2 + $0xb8] sm:$0xff]
        %v332 = vld [vmem:[#allocation2 + $0xc0] sm:$0xff]
        %v333 = vld [vmem:[#allocation2 + $0xc8] sm:$0xff]
        %v334 = vld [vmem:[#allocation2 + $0xd0] sm:$0xff]
        %v335 = vld [vmem:[#allocation2 + $0xd8] sm:$0xff]
        %v336 = vld [vmem:[#allocation2 + $0xe0] sm:$0xff]
        %v337 = vld [vmem:[#allocation2 + $0xe8] sm:$0xff]
        %v338 = vld [vmem:[#allocation2 + $0xf0] sm:$0xff]
        %v339 = vld [vmem:[#allocation2 + $0xf8] sm:$0xff]
        %v340 = vld [vmem:[#allocation2 + $0x100] sm:$0xff]
        %v341 = vld [vmem:[#allocation2 + $0x108] sm:$0xff]
        %v342 = vld [vmem:[#allocation2 + $0x110] sm:$0xff]
        %v343 = vld [vmem:[#allocation2 + $0x118] sm:$0xff]
        %v344 = vld [vmem:[#allocation2 + $0x120] sm:$0xff]
        %v345 = vld [vmem:[#allocation2 + $0x128] sm:$0xff]
        %v346 = vld [vmem:[#allocation2 + $0x130] sm:$0xff]
        %v347 = vld [vmem:[#allocation2 + $0x138] sm:$0xff]
        %v348 = vld [vmem:[#allocation2 + $0x140] sm:$0xff]
        %v349 = vld [vmem:[#allocation2 + $0x148] sm:$0xff]
        %v350 = vld [vmem:[#allocation2 + $0x150] sm:$0xff]
        %v351 = vld [vmem:[#allocation2 + $0x158] sm:$0xff]
        %v352 = vld [vmem:[#allocation2 + $0x160] sm:$0xff]
        %v353 = vld [vmem:[#allocation2 + $0x168] sm:$0xff]
        %v354 = vld [vmem:[#allocation2 + $0x170] sm:$0xff]
        %v355 = vld [vmem:[#allocation2 + $0x178] sm:$0xff]
        %v356 = vld [vmem:[#allocation2 + $0x180] sm:$0xff]
        %v357 = vld [vmem:[#allocation2 + $0x188] sm:$0xff]
        %v358 = vld [vmem:[#allocation2 + $0x190] sm:$0xff]
        %v359 = vld [vmem:[#allocation2 + $0x198] sm:$0xff]
        %v360 = vld [vmem:[#allocation2 + $0x1a0] sm:$0xff]
        %v361 = vld [vmem:[#allocation2 + $0x1a8] sm:$0xff]
        %v362 = vld [vmem:[#allocation2 + $0x1b0] sm:$0xff]
        %v363 = vld [vmem:[#allocation2 + $0x1b8] sm:$0xff]
        %v364 = vld [vmem:[#allocation2 + $0x1c0] sm:$0xff]
        %v365 = vld [vmem:[#allocation2 + $0x1c8] sm:$0xff]
        %v366 = vld [vmem:[#allocation2 + $0x1d0] sm:$0xff]
        %v367 = vld [vmem:[#allocation2 + $0x1d8] sm:$0xff]
        %v368 = vld [vmem:[#allocation2 + $0x1e0] sm:$0xff]
        %v369 = vld [vmem:[#allocation2 + $0x1e8] sm:$0xff]
        %v370 = vld [vmem:[#allocation2 + $0x1f0] sm:$0xff]
        %v371 = vld [vmem:[#allocation2 + $0x1f8] sm:$0xff]
        %v372 = vld [vmem:[#allocation2 + $0x200] sm:$0xff]
        %v373 = vld [vmem:[#allocation2 + $0x208] sm:$0xff]
        %v374 = vld [vmem:[#allocation2 + $0x210] sm:$0xff]
        %v375 = vld [vmem:[#allocation2 + $0x218] sm:$0xff]
        %v376 = vld [vmem:[#allocation2 + $0x220] sm:$0xff]
        %v377 = vld [vmem:[#allocation2 + $0x228] sm:$0xff]
        %v378 = vld [vmem:[#allocation2 + $0x230] sm:$0xff]
        %v379 = vld [vmem:[#allocation2 + $0x238] sm:$0xff]
        %v380 = vld [vmem:[#allocation2 + $0x240] sm:$0xff]
        %v381 = vld [vmem:[#allocation2 + $0x248] sm:$0xff]
        %v382 = vld [vmem:[#allocation2 + $0x250] sm:$0xff]
        %v383 = vld [vmem:[#allocation2 + $0x258] sm:$0xff]
        %v384 = vld [vmem:[#allocation2 + $0x260] sm:$0xff]
        %v385 = vld [vmem:[#allocation2 + $0x268] sm:$0xff]
        %v386 = vld [vmem:[#allocation2 + $0x270] sm:$0xff]
        %v387 = vld [vmem:[#allocation2 + $0x278] sm:$0xff]
        %v388 = vld [vmem:[#allocation2 + $0x280] sm:$0xff]
        %v389 = vld [vmem:[#allocation2 + $0x288] sm:$0xff]
        %v390 = vld [vmem:[#allocation2 + $0x290] sm:$0xff]
        %v391 = vld [vmem:[#allocation2 + $0x298] sm:$0xff]
        %v392 = vld [vmem:[#allocation2 + $0x2a0] sm:$0xff]
        %v393 = vld [vmem:[#allocation2 + $0x2a8] sm:$0xff]
        %v394 = vld [vmem:[#allocation2 + $0x2b0] sm:$0xff]
        %v395 = vld [vmem:[#allocation2 + $0x2b8] sm:$0xff]
        %v396 = vld [vmem:[#allocation2 + $0x2c0] sm:$0xff]
        %v397 = vld [vmem:[#allocation2 + $0x2c8] sm:$0xff]
        %v398 = vld [vmem:[#allocation2 + $0x2d0] sm:$0xff]
        %v399 = vld [vmem:[#allocation2 + $0x2d8] sm:$0xff]
        %v400 = vld [vmem:[#allocation2 + $0x2e0] sm:$0xff]
        %v401 = vld [vmem:[#allocation2 + $0x2e8] sm:$0xff]
        %v402 = vld [vmem:[#allocation2 + $0x2f0] sm:$0xff]
        %v403 = vld [vmem:[#allocation2 + $0x2f8] sm:$0xff]
        %v404 = vld [vmem:[#allocation2 + $0x300] sm:$0xff]
        %v405 = vld [vmem:[#allocation2 + $0x308] sm:$0xff]
        %v406 = vld [vmem:[#allocation2 + $0x310] sm:$0xff]
        %v407 = vld [vmem:[#allocation2 + $0x318] sm:$0xff]
        %v408 = vld [vmem:[#allocation2 + $0x320] sm:$0xff]
        %v409 = vld [vmem:[#allocation2 + $0x328] sm:$0xff]
        %v410 = vld [vmem:[#allocation2 + $0x330] sm:$0xff]
        %v411 = vld [vmem:[#allocation2 + $0x338] sm:$0xff]
        %v412 = vld [vmem:[#allocation2 + $0x340] sm:$0xff]
        %v413 = vld [vmem:[#allocation2 + $0x348] sm:$0xff]
        %v414 = vld [vmem:[#allocation2 + $0x350] sm:$0xff]
        %v415 = vld [vmem:[#allocation2 + $0x358] sm:$0xff]
        %v416 = vld [vmem:[#allocation2 + $0x360] sm:$0xff]
        %v417 = vld [vmem:[#allocation2 + $0x368] sm:$0xff]
        %v418 = vld [vmem:[#allocation2 + $0x370] sm:$0xff]
        %v419 = vld [vmem:[#allocation2 + $0x378] sm:$0xff]
        %v420 = vld [vmem:[#allocation2 + $0x380] sm:$0xff]
        %v421 = vld [vmem:[#allocation2 + $0x388] sm:$0xff]
        %v422 = vld [vmem:[#allocation2 + $0x390] sm:$0xff]
        %v423 = vld [vmem:[#allocation2 + $0x398] sm:$0xff]
        %v424 = vld [vmem:[#allocation2 + $0x3a0] sm:$0xff]
        %v425 = vld [vmem:[#allocation2 + $0x3a8] sm:$0xff]
        %v426 = vld [vmem:[#allocation2 + $0x3b0] sm:$0xff]
        %v427 = vld [vmem:[#allocation2 + $0x3b8] sm:$0xff]
        %v428 = vld [vmem:[#allocation2 + $0x3c0] sm:$0xff]
        %v429 = vld [vmem:[#allocation2 + $0x3c8] sm:$0xff]
        %v430 = vld [vmem:[#allocation2 + $0x3d0] sm:$0xff]
        %v431 = vld [vmem:[#allocation2 + $0x3d8] sm:$0xff]
        %v432 = vld [vmem:[#allocation2 + $0x3e0] sm:$0xff]
        %v433 = vld [vmem:[#allocation2 + $0x3e8] sm:$0xff]
        %v434 = vld [vmem:[#allocation2 + $0x3f0] sm:$0xff]
        %v435 = vld [vmem:[#allocation2 + $0x3f8] sm:$0xff]
        %v436 = vld [vmem:[#allocation2 + $0x400] sm:$0xff]
        %v437 = vld [vmem:[#allocation2 + $0x408] sm:$0xff]
        %v438 = vld [vmem:[#allocation2 + $0x410] sm:$0xff]
        %v439 = vld [vmem:[#allocation2 + $0x418] sm:$0xff]
        %v440 = vld [vmem:[#allocation2 + $0x420] sm:$0xff]
        %v441 = vld [vmem:[#allocation2 + $0x428] sm:$0xff]
        %v442 = vld [vmem:[#allocation2 + $0x430] sm:$0xff]
        %v443 = vld [vmem:[#allocation2 + $0x438] sm:$0xff]
        %v444 = vld [vmem:[#allocation2 + $0x440] sm:$0xff]
        %v445 = vld [vmem:[#allocation2 + $0x448] sm:$0xff]
        %v446 = vld [vmem:[#allocation2 + $0x450] sm:$0xff]
        %v447 = vld [vmem:[#allocation2 + $0x458] sm:$0xff]
        %v448 = vld [vmem:[#allocation2 + $0x460] sm:$0xff]
        %v449 = vld [vmem:[#allocation2 + $0x468] sm:$0xff]
        %v450 = vld [vmem:[#allocation2 + $0x470] sm:$0xff]
        %v451 = vld [vmem:[#allocation2 + $0x478] sm:$0xff]
        %v452 = vld [vmem:[#allocation2 + $0x480] sm:$0xff]
        %v453 = vld [vmem:[#allocation2 + $0x488] sm:$0xff]
        %v454 = vld [vmem:[#allocation2 + $0x490] sm:$0xff]
        %v455 = vld [vmem:[#allocation2 + $0x498] sm:$0xff]
        %v456 = vld [vmem:[#allocation2 + $0x4a0] sm:$0xff]
        %v457 = vld [vmem:[#allocation2 + $0x4a8] sm:$0xff]
        %v458 = vld [vmem:[#allocation2 + $0x4b0] sm:$0xff]
        %v459 = vld [vmem:[#allocation2 + $0x4b8] sm:$0xff]
        %v460 = vld [vmem:[#allocation2 + $0x4c0] sm:$0xff]
        %v461 = vld [vmem:[#allocation2 + $0x4c8] sm:$0xff]
        %v462 = vld [vmem:[#allocation2 + $0x4d0] sm:$0xff]
        %v463 = vld [vmem:[#allocation2 + $0x4d8] sm:$0xff]
        %v464 = vld [vmem:[#allocation2 + $0x4e0] sm:$0xff]
        %v465 = vld [vmem:[#allocation2 + $0x4e8] sm:$0xff]
        %v466 = vld [vmem:[#allocation2 + $0x4f0] sm:$0xff]
        %v467 = vld [vmem:[#allocation2 + $0x4f8] sm:$0xff]
        %v468 = vld [vmem:[#allocation2 + $0x500] sm:$0xff]
        %v469 = vld [vmem:[#allocation2 + $0x508] sm:$0xff]
        %v470 = vld [vmem:[#allocation2 + $0x510] sm:$0xff]
        %v471 = vld [vmem:[#allocation2 + $0x518] sm:$0xff]
        %v472 = vld [vmem:[#allocation2 + $0x520] sm:$0xff]
        %v473 = vld [vmem:[#allocation2 + $0x528] sm:$0xff]
        %v474 = vld [vmem:[#allocation2 + $0x530] sm:$0xff]
        %v475 = vld [vmem:[#allocation2 + $0x538] sm:$0xff]
        %v476 = vld [vmem:[#allocation2 + $0x540] sm:$0xff]
        %v477 = vld [vmem:[#allocation2 + $0x548] sm:$0xff]
        %v478 = vld [vmem:[#allocation2 + $0x550] sm:$0xff]
        %v479 = vld [vmem:[#allocation2 + $0x558] sm:$0xff]
        %v480 = vld [vmem:[#allocation2 + $0x560] sm:$0xff]
        %v481 = vld [vmem:[#allocation2 + $0x568] sm:$0xff]
        %v482 = vld [vmem:[#allocation2 + $0x570] sm:$0xff]
        %v483 = vld [vmem:[#allocation2 + $0x578] sm:$0xff]
        %v484 = vld [vmem:[#allocation2 + $0x580] sm:$0xff]
        %v485 = vld [vmem:[#allocation2 + $0x588] sm:$0xff]
        %v486 = vld [vmem:[#allocation2 + $0x590] sm:$0xff]
        %v487 = vld [vmem:[#allocation2 + $0x598] sm:$0xff]
        %v488 = vld [vmem:[#allocation2 + $0x5a0] sm:$0xff]
        %v489 = vld [vmem:[#allocation2 + $0x5a8] sm:$0xff]
        %v490 = vld [vmem:[#allocation2 + $0x5b0] sm:$0xff]
        %v491 = vld [vmem:[#allocation2 + $0x5b8] sm:$0xff]
        %v492 = vld [vmem:[#allocation2 + $0x5c0] sm:$0xff]
        %v493 = vld [vmem:[#allocation2 + $0x5c8] sm:$0xff]
        %v494 = vld [vmem:[#allocation2 + $0x5d0] sm:$0xff]
        %v495 = vld [vmem:[#allocation2 + $0x5d8] sm:$0xff]
        %v496 = vld [vmem:[#allocation2 + $0x5e0] sm:$0xff]
        %v497 = vld [vmem:[#allocation2 + $0x5e8] sm:$0xff]
        %v498 = vld [vmem:[#allocation2 + $0x5f0] sm:$0xff]
        %v499 = vld [vmem:[#allocation2 + $0x5f8] sm:$0xff]
        %v500 = vld [vmem:[#allocation2 + $0x600] sm:$0xff]
        %v501 = vld [vmem:[#allocation2 + $0x608] sm:$0xff]
        %v502 = vld [vmem:[#allocation2 + $0x610] sm:$0xff]
        %v503 = vld [vmem:[#allocation2 + $0x618] sm:$0xff]
        %v504 = vld [vmem:[#allocation2 + $0x620] sm:$0xff]
        %v505 = vld [vmem:[#allocation2 + $0x628] sm:$0xff]
        %v506 = vld [vmem:[#allocation2 + $0x630] sm:$0xff]
        %v507 = vld [vmem:[#allocation2 + $0x638] sm:$0xff]
        %v508 = vld [vmem:[#allocation2 + $0x640] sm:$0xff]
        %v509 = vld [vmem:[#allocation2 + $0x648] sm:$0xff]
        %v510 = vld [vmem:[#allocation2 + $0x650] sm:$0xff]
        %v511 = vld [vmem:[#allocation2 + $0x658] sm:$0xff]
        %v512 = vld [vmem:[#allocation2 + $0x660] sm:$0xff]
        %v513 = vld [vmem:[#allocation2 + $0x668] sm:$0xff]
        %v514 = vld [vmem:[#allocation2 + $0x670] sm:$0xff]
        %v515 = vld [vmem:[#allocation2 + $0x678] sm:$0xff]
        %v516 = vld [vmem:[#allocation2 + $0x680] sm:$0xff]
        %v517 = vld [vmem:[#allocation2 + $0x688] sm:$0xff]
        %v518 = vld [vmem:[#allocation2 + $0x690] sm:$0xff]
        %v519 = vld [vmem:[#allocation2 + $0x698] sm:$0xff]
        %v520 = vld [vmem:[#allocation2 + $0x6a0] sm:$0xff]
        %v521 = vld [vmem:[#allocation2 + $0x6a8] sm:$0xff]
        %v522 = vld [vmem:[#allocation2 + $0x6b0] sm:$0xff]
        %v523 = vld [vmem:[#allocation2 + $0x6b8] sm:$0xff]
        %v524 = vld [vmem:[#allocation2 + $0x6c0] sm:$0xff]
        %v525 = vld [vmem:[#allocation2 + $0x6c8] sm:$0xff]
        %v526 = vld [vmem:[#allocation2 + $0x6d0] sm:$0xff]
        %v527 = vld [vmem:[#allocation2 + $0x6d8] sm:$0xff]
        %v528 = vld [vmem:[#allocation2 + $0x6e0] sm:$0xff]
        %v529 = vld [vmem:[#allocation2 + $0x6e8] sm:$0xff]
        %v530 = vld [vmem:[#allocation2 + $0x6f0] sm:$0xff]
        %v531 = vld [vmem:[#allocation2 + $0x6f8] sm:$0xff]
        %v532 = vld [vmem:[#allocation2 + $0x700] sm:$0xff]
        %v533 = vld [vmem:[#allocation2 + $0x708] sm:$0xff]
        %v534 = vld [vmem:[#allocation2 + $0x710] sm:$0xff]
        %v535 = vld [vmem:[#allocation2 + $0x718] sm:$0xff]
        %v536 = vld [vmem:[#allocation2 + $0x720] sm:$0xff]
        %v537 = vld [vmem:[#allocation2 + $0x728] sm:$0xff]
        %v538 = vld [vmem:[#allocation2 + $0x730] sm:$0xff]
        %v539 = vld [vmem:[#allocation2 + $0x738] sm:$0xff]
        %v540 = vld [vmem:[#allocation2 + $0x740] sm:$0xff]
        %v541 = vld [vmem:[#allocation2 + $0x748] sm:$0xff]
        %v542 = vld [vmem:[#allocation2 + $0x750] sm:$0xff]
        %v543 = vld [vmem:[#allocation2 + $0x758] sm:$0xff]
        %v544 = vld [vmem:[#allocation2 + $0x760] sm:$0xff]
        %v545 = vld [vmem:[#allocation2 + $0x768] sm:$0xff]
        %v546 = vld [vmem:[#allocation2 + $0x770] sm:$0xff]
        %v547 = vld [vmem:[#allocation2 + $0x778] sm:$0xff]
        %v548 = vld [vmem:[#allocation2 + $0x780] sm:$0xff]
        %v549 = vld [vmem:[#allocation2 + $0x788] sm:$0xff]
        %v550 = vld [vmem:[#allocation2 + $0x790] sm:$0xff]
        %v551 = vld [vmem:[#allocation2 + $0x798] sm:$0xff]
        %v552 = vld [vmem:[#allocation2 + $0x7a0] sm:$0xff]
        %v553 = vld [vmem:[#allocation2 + $0x7a8] sm:$0xff]
        %v554 = vld [vmem:[#allocation2 + $0x7b0] sm:$0xff]
        %v555 = vld [vmem:[#allocation2 + $0x7b8] sm:$0xff]
        %v556 = vld [vmem:[#allocation2 + $0x7c0] sm:$0xff]
        %v557 = vld [vmem:[#allocation2 + $0x7c8] sm:$0xff]
        %v558 = vld [vmem:[#allocation2 + $0x7d0] sm:$0xff]
        %v559 = vld [vmem:[#allocation2 + $0x7d8] sm:$0xff]
        %v560 = vld [vmem:[#allocation2 + $0x7e0] sm:$0xff]
        %v561 = vld [vmem:[#allocation2 + $0x7e8] sm:$0xff]
        %v562 = vld [vmem:[#allocation2 + $0x7f0] sm:$0xff]
        %v563 = vld [vmem:[#allocation2 + $0x7f8] sm:$0xff]
        %v564 = vld [vmem:[#allocation4] sm:$0xff]
        %v566 = vlaneseq
        %v567 = vshrl.u32 %v566, 7
        %v568 = vsub.s32 0, %v567
        %v569 = vrot.slane %v564, %v568
        %v570 = vlaneseq
        %v571 = vshrl.u32 %v570, 7
        %v572 = vsub.s32 1, %v571
        %v573 = vrot.slane %v564, %v572
        %v574 = vlaneseq
        %v575 = vshrl.u32 %v574, 7
        %v576 = vsub.s32 2, %v575
        %v577 = vrot.slane %v564, %v576
        %v578 = vlaneseq
        %v579 = vshrl.u32 %v578, 7
        %v580 = vsub.s32 3, %v579
        %v581 = vrot.slane %v564, %v580
        %v582 = vlaneseq
        %v583 = vshrl.u32 %v582, 7
        %v584 = vsub.s32 4, %v583
        %v585 = vrot.slane %v564, %v584
        %v586 = vlaneseq
        %v587 = vshrl.u32 %v586, 7
        %v588 = vsub.s32 5, %v587
        %v589 = vrot.slane %v564, %v588
        %v590 = vlaneseq
        %v591 = vshrl.u32 %v590, 7
        %v592 = vsub.s32 6, %v591
        %v593 = vrot.slane %v564, %v592
        %v594 = vlaneseq
        %v595 = vshrl.u32 %v594, 7
        %v596 = vsub.s32 7, %v595
        %v597 = vrot.slane %v564, %v596
        %v608 = vunpack.c.l.s4 1966171168
        %v609 = vunpack.c.0.s8 %v608
        %v610 = vlaneseq
        %v611 = vshrl.u32 %v610, 7
        %v612 = vsub.s32 %v609, %v611
        %v613 = vrot.slane %v307, %v612
        %v614 = vcombine.high %v613, %v613
        %v616 = vunpack.c.l.s4 1966171168
        %v617 = vunpack.c.0.s8 %v616
        %v618 = vlaneseq
        %v619 = vshrl.u32 %v618, 7
        %v620 = vsub.s32 %v617, %v619
        %v621 = vrot.slane %v613, %v620
        %v623 = vunpack.c.l.s4 1966171168
        %v624 = vunpack.c.0.s8 %v623
        %v625 = vlaneseq
        %v626 = vshrl.u32 %v625, 7
        %v627 = vsub.s32 %v624, %v626
        %v628 = vrot.slane %v614, %v627
        %v629 = vcombine.high %v621, %v621
        %v630 = vcombine.high %v628, %v628
        %v891 = vunpack.c.l.b16 %v308
        %v892 = vunpack.c.h.b16 %v308
        %v893 = vunpack.c.l.b16 %v309
        %v894 = vunpack.c.h.b16 %v309
        %v895 = vunpack.c.l.b16 %v310
        %v896 = vunpack.c.h.b16 %v310
        %v897 = vunpack.c.l.b16 %v311
        %v898 = vunpack.c.h.b16 %v311
        %v899 = vunpack.c.l.b16 %v312
        %v900 = vunpack.c.h.b16 %v312
        %v901 = vunpack.c.l.b16 %v313
        %v902 = vunpack.c.h.b16 %v313
        %v903 = vunpack.c.l.b16 %v314
        %v904 = vunpack.c.h.b16 %v314
        %v905 = vunpack.c.l.b16 %v315
        %v906 = vunpack.c.h.b16 %v315
        %v907 = vunpack.c.l.b16 %v316
        %v908 = vunpack.c.h.b16 %v316
        %v909 = vunpack.c.l.b16 %v317
        %v910 = vunpack.c.h.b16 %v317
        %v911 = vunpack.c.l.b16 %v318
        %v912 = vunpack.c.h.b16 %v318
        %v913 = vunpack.c.l.b16 %v319
        %v914 = vunpack.c.h.b16 %v319
        %v915 = vunpack.c.l.b16 %v320
        %v916 = vunpack.c.h.b16 %v320
        %v917 = vunpack.c.l.b16 %v321
        %v918 = vunpack.c.h.b16 %v321
        %v919 = vunpack.c.l.b16 %v322
        %v920 = vunpack.c.h.b16 %v322
        %v921 = vunpack.c.l.b16 %v323
        %v922 = vunpack.c.h.b16 %v323
        %v923 = vunpack.c.l.b16 %v324
        %v924 = vunpack.c.h.b16 %v324
        %v925 = vunpack.c.l.b16 %v325
        %v926 = vunpack.c.h.b16 %v325
        %v927 = vunpack.c.l.b16 %v326
        %v928 = vunpack.c.h.b16 %v326
        %v929 = vunpack.c.l.b16 %v327
        %v930 = vunpack.c.h.b16 %v327
        %v931 = vunpack.c.l.b16 %v328
        %v932 = vunpack.c.h.b16 %v328
        %v933 = vunpack.c.l.b16 %v329
        %v934 = vunpack.c.h.b16 %v329
        %v935 = vunpack.c.l.b16 %v330
        %v936 = vunpack.c.h.b16 %v330
        %v937 = vunpack.c.l.b16 %v331
        %v938 = vunpack.c.h.b16 %v331
        %v939 = vunpack.c.l.b16 %v332
        %v940 = vunpack.c.h.b16 %v332
        %v941 = vunpack.c.l.b16 %v333
        %v942 = vunpack.c.h.b16 %v333
        %v943 = vunpack.c.l.b16 %v334
        %v944 = vunpack.c.h.b16 %v334
        %v945 = vunpack.c.l.b16 %v335
        %v946 = vunpack.c.h.b16 %v335
        %v947 = vunpack.c.l.b16 %v336
        %v948 = vunpack.c.h.b16 %v336
        %v949 = vunpack.c.l.b16 %v337
        %v950 = vunpack.c.h.b16 %v337
        %v951 = vunpack.c.l.b16 %v338
        %v952 = vunpack.c.h.b16 %v338
        %v953 = vunpack.c.l.b16 %v339
        %v954 = vunpack.c.h.b16 %v339
        %v955 = vunpack.c.l.b16 %v340
        %v956 = vunpack.c.h.b16 %v340
        %v957 = vunpack.c.l.b16 %v341
        %v958 = vunpack.c.h.b16 %v341
        %v959 = vunpack.c.l.b16 %v342
        %v960 = vunpack.c.h.b16 %v342
        %v961 = vunpack.c.l.b16 %v343
        %v962 = vunpack.c.h.b16 %v343
        %v963 = vunpack.c.l.b16 %v344
        %v964 = vunpack.c.h.b16 %v344
        %v965 = vunpack.c.l.b16 %v345
        %v966 = vunpack.c.h.b16 %v345
        %v967 = vunpack.c.l.b16 %v346
        %v968 = vunpack.c.h.b16 %v346
        %v969 = vunpack.c.l.b16 %v347
        %v970 = vunpack.c.h.b16 %v347
        %v971 = vunpack.c.l.b16 %v348
        %v972 = vunpack.c.h.b16 %v348
        %v973 = vunpack.c.l.b16 %v349
        %v974 = vunpack.c.h.b16 %v349
        %v975 = vunpack.c.l.b16 %v350
        %v976 = vunpack.c.h.b16 %v350
        %v977 = vunpack.c.l.b16 %v351
        %v978 = vunpack.c.h.b16 %v351
        %v979 = vunpack.c.l.b16 %v352
        %v980 = vunpack.c.h.b16 %v352
        %v981 = vunpack.c.l.b16 %v353
        %v982 = vunpack.c.h.b16 %v353
        %v983 = vunpack.c.l.b16 %v354
        %v984 = vunpack.c.h.b16 %v354
        %v985 = vunpack.c.l.b16 %v355
        %v986 = vunpack.c.h.b16 %v355
        %v987 = vunpack.c.l.b16 %v356
        %v988 = vunpack.c.h.b16 %v356
        %v989 = vunpack.c.l.b16 %v357
        %v990 = vunpack.c.h.b16 %v357
        %v991 = vunpack.c.l.b16 %v358
        %v992 = vunpack.c.h.b16 %v358
        %v993 = vunpack.c.l.b16 %v359
        %v994 = vunpack.c.h.b16 %v359
        %v995 = vunpack.c.l.b16 %v360
        %v996 = vunpack.c.h.b16 %v360
        %v997 = vunpack.c.l.b16 %v361
        %v998 = vunpack.c.h.b16 %v361
        %v999 = vunpack.c.l.b16 %v362
        %v1000 = vunpack.c.h.b16 %v362
        %v1001 = vunpack.c.l.b16 %v363
        %v1002 = vunpack.c.h.b16 %v363
        %v1003 = vunpack.c.l.b16 %v364
        %v1004 = vunpack.c.h.b16 %v364
        %v1005 = vunpack.c.l.b16 %v365
        %v1006 = vunpack.c.h.b16 %v365
        %v1007 = vunpack.c.l.b16 %v366
        %v1008 = vunpack.c.h.b16 %v366
        %v1009 = vunpack.c.l.b16 %v367
        %v1010 = vunpack.c.h.b16 %v367
        %v1011 = vunpack.c.l.b16 %v368
        %v1012 = vunpack.c.h.b16 %v368
        %v1013 = vunpack.c.l.b16 %v369
        %v1014 = vunpack.c.h.b16 %v369
        %v1015 = vunpack.c.l.b16 %v370
        %v1016 = vunpack.c.h.b16 %v370
        %v1017 = vunpack.c.l.b16 %v371
        %v1018 = vunpack.c.h.b16 %v371
        %v1019 = vunpack.c.l.b16 %v372
        %v1020 = vunpack.c.h.b16 %v372
        %v1021 = vunpack.c.l.b16 %v373
        %v1022 = vunpack.c.h.b16 %v373
        %v1023 = vunpack.c.l.b16 %v374
        %v1024 = vunpack.c.h.b16 %v374
        %v1025 = vunpack.c.l.b16 %v375
        %v1026 = vunpack.c.h.b16 %v375
        %v1027 = vunpack.c.l.b16 %v376
        %v1028 = vunpack.c.h.b16 %v376
        %v1029 = vunpack.c.l.b16 %v377
        %v1030 = vunpack.c.h.b16 %v377
        %v1031 = vunpack.c.l.b16 %v378
        %v1032 = vunpack.c.h.b16 %v378
        %v1033 = vunpack.c.l.b16 %v379
        %v1034 = vunpack.c.h.b16 %v379
        %v1035 = vunpack.c.l.b16 %v380
        %v1036 = vunpack.c.h.b16 %v380
        %v1037 = vunpack.c.l.b16 %v381
        %v1038 = vunpack.c.h.b16 %v381
        %v1039 = vunpack.c.l.b16 %v382
        %v1040 = vunpack.c.h.b16 %v382
        %v1041 = vunpack.c.l.b16 %v383
        %v1042 = vunpack.c.h.b16 %v383
        %v1043 = vunpack.c.l.b16 %v384
        %v1044 = vunpack.c.h.b16 %v384
        %v1045 = vunpack.c.l.b16 %v385
        %v1046 = vunpack.c.h.b16 %v385
        %v1047 = vunpack.c.l.b16 %v386
        %v1048 = vunpack.c.h.b16 %v386
        %v1049 = vunpack.c.l.b16 %v387
        %v1050 = vunpack.c.h.b16 %v387
        %v1051 = vunpack.c.l.b16 %v388
        %v1052 = vunpack.c.h.b16 %v388
        %v1053 = vunpack.c.l.b16 %v389
        %v1054 = vunpack.c.h.b16 %v389
        %v1055 = vunpack.c.l.b16 %v390
        %v1056 = vunpack.c.h.b16 %v390
        %v1057 = vunpack.c.l.b16 %v391
        %v1058 = vunpack.c.h.b16 %v391
        %v1059 = vunpack.c.l.b16 %v392
        %v1060 = vunpack.c.h.b16 %v392
        %v1061 = vunpack.c.l.b16 %v393
        %v1062 = vunpack.c.h.b16 %v393
        %v1063 = vunpack.c.l.b16 %v394
        %v1064 = vunpack.c.h.b16 %v394
        %v1065 = vunpack.c.l.b16 %v395
        %v1066 = vunpack.c.h.b16 %v395
        %v1067 = vunpack.c.l.b16 %v396
        %v1068 = vunpack.c.h.b16 %v396
        %v1069 = vunpack.c.l.b16 %v397
        %v1070 = vunpack.c.h.b16 %v397
        %v1071 = vunpack.c.l.b16 %v398
        %v1072 = vunpack.c.h.b16 %v398
        %v1073 = vunpack.c.l.b16 %v399
        %v1074 = vunpack.c.h.b16 %v399
        %v1075 = vunpack.c.l.b16 %v400
        %v1076 = vunpack.c.h.b16 %v400
        %v1077 = vunpack.c.l.b16 %v401
        %v1078 = vunpack.c.h.b16 %v401
        %v1079 = vunpack.c.l.b16 %v402
        %v1080 = vunpack.c.h.b16 %v402
        %v1081 = vunpack.c.l.b16 %v403
        %v1082 = vunpack.c.h.b16 %v403
        %v1083 = vunpack.c.l.b16 %v404
        %v1084 = vunpack.c.h.b16 %v404
        %v1085 = vunpack.c.l.b16 %v405
        %v1086 = vunpack.c.h.b16 %v405
        %v1087 = vunpack.c.l.b16 %v406
        %v1088 = vunpack.c.h.b16 %v406
        %v1089 = vunpack.c.l.b16 %v407
        %v1090 = vunpack.c.h.b16 %v407
        %v1091 = vunpack.c.l.b16 %v408
        %v1092 = vunpack.c.h.b16 %v408
        %v1093 = vunpack.c.l.b16 %v409
        %v1094 = vunpack.c.h.b16 %v409
        %v1095 = vunpack.c.l.b16 %v410
        %v1096 = vunpack.c.h.b16 %v410
        %v1097 = vunpack.c.l.b16 %v411
        %v1098 = vunpack.c.h.b16 %v411
        %v1099 = vunpack.c.l.b16 %v412
        %v1100 = vunpack.c.h.b16 %v412
        %v1101 = vunpack.c.l.b16 %v413
        %v1102 = vunpack.c.h.b16 %v413
        %v1103 = vunpack.c.l.b16 %v414
        %v1104 = vunpack.c.h.b16 %v414
        %v1105 = vunpack.c.l.b16 %v415
        %v1106 = vunpack.c.h.b16 %v415
        %v1107 = vunpack.c.l.b16 %v416
        %v1108 = vunpack.c.h.b16 %v416
        %v1109 = vunpack.c.l.b16 %v417
        %v1110 = vunpack.c.h.b16 %v417
        %v1111 = vunpack.c.l.b16 %v418
        %v1112 = vunpack.c.h.b16 %v418
        %v1113 = vunpack.c.l.b16 %v419
        %v1114 = vunpack.c.h.b16 %v419
        %v1115 = vunpack.c.l.b16 %v420
        %v1116 = vunpack.c.h.b16 %v420
        %v1117 = vunpack.c.l.b16 %v421
        %v1118 = vunpack.c.h.b16 %v421
        %v1119 = vunpack.c.l.b16 %v422
        %v1120 = vunpack.c.h.b16 %v422
        %v1121 = vunpack.c.l.b16 %v423
        %v1122 = vunpack.c.h.b16 %v423
        %v1123 = vunpack.c.l.b16 %v424
        %v1124 = vunpack.c.h.b16 %v424
        %v1125 = vunpack.c.l.b16 %v425
        %v1126 = vunpack.c.h.b16 %v425
        %v1127 = vunpack.c.l.b16 %v426
        %v1128 = vunpack.c.h.b16 %v426
        %v1129 = vunpack.c.l.b16 %v427
        %v1130 = vunpack.c.h.b16 %v427
        %v1131 = vunpack.c.l.b16 %v428
        %v1132 = vunpack.c.h.b16 %v428
        %v1133 = vunpack.c.l.b16 %v429
        %v1134 = vunpack.c.h.b16 %v429
        %v1135 = vunpack.c.l.b16 %v430
        %v1136 = vunpack.c.h.b16 %v430
        %v1137 = vunpack.c.l.b16 %v431
        %v1138 = vunpack.c.h.b16 %v431
        %v1139 = vunpack.c.l.b16 %v432
        %v1140 = vunpack.c.h.b16 %v432
        %v1141 = vunpack.c.l.b16 %v433
        %v1142 = vunpack.c.h.b16 %v433
        %v1143 = vunpack.c.l.b16 %v434
        %v1144 = vunpack.c.h.b16 %v434
        %v1145 = vunpack.c.l.b16 %v435
        %v1146 = vunpack.c.h.b16 %v435
        %v1147 = vunpack.c.l.b16 %v436
        %v1148 = vunpack.c.h.b16 %v436
        %v1149 = vunpack.c.l.b16 %v437
        %v1150 = vunpack.c.h.b16 %v437
        %v1151 = vunpack.c.l.b16 %v438
        %v1152 = vunpack.c.h.b16 %v438
        %v1153 = vunpack.c.l.b16 %v439
        %v1154 = vunpack.c.h.b16 %v439
        %v1155 = vunpack.c.l.b16 %v440
        %v1156 = vunpack.c.h.b16 %v440
        %v1157 = vunpack.c.l.b16 %v441
        %v1158 = vunpack.c.h.b16 %v441
        %v1159 = vunpack.c.l.b16 %v442
        %v1160 = vunpack.c.h.b16 %v442
        %v1161 = vunpack.c.l.b16 %v443
        %v1162 = vunpack.c.h.b16 %v443
        %v1163 = vunpack.c.l.b16 %v444
        %v1164 = vunpack.c.h.b16 %v444
        %v1165 = vunpack.c.l.b16 %v445
        %v1166 = vunpack.c.h.b16 %v445
        %v1167 = vunpack.c.l.b16 %v446
        %v1168 = vunpack.c.h.b16 %v446
        %v1169 = vunpack.c.l.b16 %v447
        %v1170 = vunpack.c.h.b16 %v447
        %v1171 = vunpack.c.l.b16 %v448
        %v1172 = vunpack.c.h.b16 %v448
        %v1173 = vunpack.c.l.b16 %v449
        %v1174 = vunpack.c.h.b16 %v449
        %v1175 = vunpack.c.l.b16 %v450
        %v1176 = vunpack.c.h.b16 %v450
        %v1177 = vunpack.c.l.b16 %v451
        %v1178 = vunpack.c.h.b16 %v451
        %v1179 = vunpack.c.l.b16 %v452
        %v1180 = vunpack.c.h.b16 %v452
        %v1181 = vunpack.c.l.b16 %v453
        %v1182 = vunpack.c.h.b16 %v453
        %v1183 = vunpack.c.l.b16 %v454
        %v1184 = vunpack.c.h.b16 %v454
        %v1185 = vunpack.c.l.b16 %v455
        %v1186 = vunpack.c.h.b16 %v455
        %v1187 = vunpack.c.l.b16 %v456
        %v1188 = vunpack.c.h.b16 %v456
        %v1189 = vunpack.c.l.b16 %v457
        %v1190 = vunpack.c.h.b16 %v457
        %v1191 = vunpack.c.l.b16 %v458
        %v1192 = vunpack.c.h.b16 %v458
        %v1193 = vunpack.c.l.b16 %v459
        %v1194 = vunpack.c.h.b16 %v459
        %v1195 = vunpack.c.l.b16 %v460
        %v1196 = vunpack.c.h.b16 %v460
        %v1197 = vunpack.c.l.b16 %v461
        %v1198 = vunpack.c.h.b16 %v461
        %v1199 = vunpack.c.l.b16 %v462
        %v1200 = vunpack.c.h.b16 %v462
        %v1201 = vunpack.c.l.b16 %v463
        %v1202 = vunpack.c.h.b16 %v463
        %v1203 = vunpack.c.l.b16 %v464
        %v1204 = vunpack.c.h.b16 %v464
        %v1205 = vunpack.c.l.b16 %v465
        %v1206 = vunpack.c.h.b16 %v465
        %v1207 = vunpack.c.l.b16 %v466
        %v1208 = vunpack.c.h.b16 %v466
        %v1209 = vunpack.c.l.b16 %v467
        %v1210 = vunpack.c.h.b16 %v467
        %v1211 = vunpack.c.l.b16 %v468
        %v1212 = vunpack.c.h.b16 %v468
        %v1213 = vunpack.c.l.b16 %v469
        %v1214 = vunpack.c.h.b16 %v469
        %v1215 = vunpack.c.l.b16 %v470
        %v1216 = vunpack.c.h.b16 %v470
        %v1217 = vunpack.c.l.b16 %v471
        %v1218 = vunpack.c.h.b16 %v471
        %v1219 = vunpack.c.l.b16 %v472
        %v1220 = vunpack.c.h.b16 %v472
        %v1221 = vunpack.c.l.b16 %v473
        %v1222 = vunpack.c.h.b16 %v473
        %v1223 = vunpack.c.l.b16 %v474
        %v1224 = vunpack.c.h.b16 %v474
        %v1225 = vunpack.c.l.b16 %v475
        %v1226 = vunpack.c.h.b16 %v475
        %v1227 = vunpack.c.l.b16 %v476
        %v1228 = vunpack.c.h.b16 %v476
        %v1229 = vunpack.c.l.b16 %v477
        %v1230 = vunpack.c.h.b16 %v477
        %v1231 = vunpack.c.l.b16 %v478
        %v1232 = vunpack.c.h.b16 %v478
        %v1233 = vunpack.c.l.b16 %v479
        %v1234 = vunpack.c.h.b16 %v479
        %v1235 = vunpack.c.l.b16 %v480
        %v1236 = vunpack.c.h.b16 %v480
        %v1237 = vunpack.c.l.b16 %v481
        %v1238 = vunpack.c.h.b16 %v481
        %v1239 = vunpack.c.l.b16 %v482
        %v1240 = vunpack.c.h.b16 %v482
        %v1241 = vunpack.c.l.b16 %v483
        %v1242 = vunpack.c.h.b16 %v483
        %v1243 = vunpack.c.l.b16 %v484
        %v1244 = vunpack.c.h.b16 %v484
        %v1245 = vunpack.c.l.b16 %v485
        %v1246 = vunpack.c.h.b16 %v485
        %v1247 = vunpack.c.l.b16 %v486
        %v1248 = vunpack.c.h.b16 %v486
        %v1249 = vunpack.c.l.b16 %v487
        %v1250 = vunpack.c.h.b16 %v487
        %v1251 = vunpack.c.l.b16 %v488
        %v1252 = vunpack.c.h.b16 %v488
        %v1253 = vunpack.c.l.b16 %v489
        %v1254 = vunpack.c.h.b16 %v489
        %v1255 = vunpack.c.l.b16 %v490
        %v1256 = vunpack.c.h.b16 %v490
        %v1257 = vunpack.c.l.b16 %v491
        %v1258 = vunpack.c.h.b16 %v491
        %v1259 = vunpack.c.l.b16 %v492
        %v1260 = vunpack.c.h.b16 %v492
        %v1261 = vunpack.c.l.b16 %v493
        %v1262 = vunpack.c.h.b16 %v493
        %v1263 = vunpack.c.l.b16 %v494
        %v1264 = vunpack.c.h.b16 %v494
        %v1265 = vunpack.c.l.b16 %v495
        %v1266 = vunpack.c.h.b16 %v495
        %v1267 = vunpack.c.l.b16 %v496
        %v1268 = vunpack.c.h.b16 %v496
        %v1269 = vunpack.c.l.b16 %v497
        %v1270 = vunpack.c.h.b16 %v497
        %v1271 = vunpack.c.l.b16 %v498
        %v1272 = vunpack.c.h.b16 %v498
        %v1273 = vunpack.c.l.b16 %v499
        %v1274 = vunpack.c.h.b16 %v499
        %v1275 = vunpack.c.l.b16 %v500
        %v1276 = vunpack.c.h.b16 %v500
        %v1277 = vunpack.c.l.b16 %v501
        %v1278 = vunpack.c.h.b16 %v501
        %v1279 = vunpack.c.l.b16 %v502
        %v1280 = vunpack.c.h.b16 %v502
        %v1281 = vunpack.c.l.b16 %v503
        %v1282 = vunpack.c.h.b16 %v503
        %v1283 = vunpack.c.l.b16 %v504
        %v1284 = vunpack.c.h.b16 %v504
        %v1285 = vunpack.c.l.b16 %v505
        %v1286 = vunpack.c.h.b16 %v505
        %v1287 = vunpack.c.l.b16 %v506
        %v1288 = vunpack.c.h.b16 %v506
        %v1289 = vunpack.c.l.b16 %v507
        %v1290 = vunpack.c.h.b16 %v507
        %v1291 = vunpack.c.l.b16 %v508
        %v1292 = vunpack.c.h.b16 %v508
        %v1293 = vunpack.c.l.b16 %v509
        %v1294 = vunpack.c.h.b16 %v509
        %v1295 = vunpack.c.l.b16 %v510
        %v1296 = vunpack.c.h.b16 %v510
        %v1297 = vunpack.c.l.b16 %v511
        %v1298 = vunpack.c.h.b16 %v511
        %v1299 = vunpack.c.l.b16 %v512
        %v1300 = vunpack.c.h.b16 %v512
        %v1301 = vunpack.c.l.b16 %v513
        %v1302 = vunpack.c.h.b16 %v513
        %v1303 = vunpack.c.l.b16 %v514
        %v1304 = vunpack.c.h.b16 %v514
        %v1305 = vunpack.c.l.b16 %v515
        %v1306 = vunpack.c.h.b16 %v515
        %v1307 = vunpack.c.l.b16 %v516
        %v1308 = vunpack.c.h.b16 %v516
        %v1309 = vunpack.c.l.b16 %v517
        %v1310 = vunpack.c.h.b16 %v517
        %v1311 = vunpack.c.l.b16 %v518
        %v1312 = vunpack.c.h.b16 %v518
        %v1313 = vunpack.c.l.b16 %v519
        %v1314 = vunpack.c.h.b16 %v519
        %v1315 = vunpack.c.l.b16 %v520
        %v1316 = vunpack.c.h.b16 %v520
        %v1317 = vunpack.c.l.b16 %v521
        %v1318 = vunpack.c.h.b16 %v521
        %v1319 = vunpack.c.l.b16 %v522
        %v1320 = vunpack.c.h.b16 %v522
        %v1321 = vunpack.c.l.b16 %v523
        %v1322 = vunpack.c.h.b16 %v523
        %v1323 = vunpack.c.l.b16 %v524
        %v1324 = vunpack.c.h.b16 %v524
        %v1325 = vunpack.c.l.b16 %v525
        %v1326 = vunpack.c.h.b16 %v525
        %v1327 = vunpack.c.l.b16 %v526
        %v1328 = vunpack.c.h.b16 %v526
        %v1329 = vunpack.c.l.b16 %v527
        %v1330 = vunpack.c.h.b16 %v527
        %v1331 = vunpack.c.l.b16 %v528
        %v1332 = vunpack.c.h.b16 %v528
        %v1333 = vunpack.c.l.b16 %v529
        %v1334 = vunpack.c.h.b16 %v529
        %v1335 = vunpack.c.l.b16 %v530
        %v1336 = vunpack.c.h.b16 %v530
        %v1337 = vunpack.c.l.b16 %v531
        %v1338 = vunpack.c.h.b16 %v531
        %v1339 = vunpack.c.l.b16 %v532
        %v1340 = vunpack.c.h.b16 %v532
        %v1341 = vunpack.c.l.b16 %v533
        %v1342 = vunpack.c.h.b16 %v533
        %v1343 = vunpack.c.l.b16 %v534
        %v1344 = vunpack.c.h.b16 %v534
        %v1345 = vunpack.c.l.b16 %v535
        %v1346 = vunpack.c.h.b16 %v535
        %v1347 = vunpack.c.l.b16 %v536
        %v1348 = vunpack.c.h.b16 %v536
        %v1349 = vunpack.c.l.b16 %v537
        %v1350 = vunpack.c.h.b16 %v537
        %v1351 = vunpack.c.l.b16 %v538
        %v1352 = vunpack.c.h.b16 %v538
        %v1353 = vunpack.c.l.b16 %v539
        %v1354 = vunpack.c.h.b16 %v539
        %v1355 = vunpack.c.l.b16 %v540
        %v1356 = vunpack.c.h.b16 %v540
        %v1357 = vunpack.c.l.b16 %v541
        %v1358 = vunpack.c.h.b16 %v541
        %v1359 = vunpack.c.l.b16 %v542
        %v1360 = vunpack.c.h.b16 %v542
        %v1361 = vunpack.c.l.b16 %v543
        %v1362 = vunpack.c.h.b16 %v543
        %v1363 = vunpack.c.l.b16 %v544
        %v1364 = vunpack.c.h.b16 %v544
        %v1365 = vunpack.c.l.b16 %v545
        %v1366 = vunpack.c.h.b16 %v545
        %v1367 = vunpack.c.l.b16 %v546
        %v1368 = vunpack.c.h.b16 %v546
        %v1369 = vunpack.c.l.b16 %v547
        %v1370 = vunpack.c.h.b16 %v547
        %v1371 = vunpack.c.l.b16 %v548
        %v1372 = vunpack.c.h.b16 %v548
        %v1373 = vunpack.c.l.b16 %v549
        %v1374 = vunpack.c.h.b16 %v549
        %v1375 = vunpack.c.l.b16 %v550
        %v1376 = vunpack.c.h.b16 %v550
        %v1377 = vunpack.c.l.b16 %v551
        %v1378 = vunpack.c.h.b16 %v551
        %v1379 = vunpack.c.l.b16 %v552
        %v1380 = vunpack.c.h.b16 %v552
        %v1381 = vunpack.c.l.b16 %v553
        %v1382 = vunpack.c.h.b16 %v553
        %v1383 = vunpack.c.l.b16 %v554
        %v1384 = vunpack.c.h.b16 %v554
        %v1385 = vunpack.c.l.b16 %v555
        %v1386 = vunpack.c.h.b16 %v555
        %v1387 = vunpack.c.l.b16 %v556
        %v1388 = vunpack.c.h.b16 %v556
        %v1389 = vunpack.c.l.b16 %v557
        %v1390 = vunpack.c.h.b16 %v557
        %v1391 = vunpack.c.l.b16 %v558
        %v1392 = vunpack.c.h.b16 %v558
        %v1393 = vunpack.c.l.b16 %v559
        %v1394 = vunpack.c.h.b16 %v559
        %v1395 = vunpack.c.l.b16 %v560
        %v1396 = vunpack.c.h.b16 %v560
        %v1397 = vunpack.c.l.b16 %v561
        %v1398 = vunpack.c.h.b16 %v561
        %v1399 = vunpack.c.l.b16 %v562
        %v1400 = vunpack.c.h.b16 %v562
        %v1401 = vunpack.c.l.b16 %v563
        %v1402 = vunpack.c.h.b16 %v563
        %v1403 = vpack.c.b16 %v899, %v891
        %v1404 = vpack.c.b16 %v900, %v892
        %v1405 = vpack.c.b16 %v901, %v893
        %v1406 = vpack.c.b16 %v902, %v894
        %v1407 = vpack.c.b16 %v903, %v895
        %v1408 = vpack.c.b16 %v904, %v896
        %v1409 = vpack.c.b16 %v905, %v897
        %v1410 = vpack.c.b16 %v906, %v898
        %v1411 = vpack.c.b16 %v915, %v907
        %v1412 = vpack.c.b16 %v916, %v908
        %v1413 = vpack.c.b16 %v917, %v909
        %v1414 = vpack.c.b16 %v918, %v910
        %v1415 = vpack.c.b16 %v919, %v911
        %v1416 = vpack.c.b16 %v920, %v912
        %v1417 = vpack.c.b16 %v921, %v913
        %v1418 = vpack.c.b16 %v922, %v914
        %v1419 = vpack.c.b16 %v931, %v923
        %v1420 = vpack.c.b16 %v932, %v924
        %v1421 = vpack.c.b16 %v933, %v925
        %v1422 = vpack.c.b16 %v934, %v926
        %v1423 = vpack.c.b16 %v935, %v927
        %v1424 = vpack.c.b16 %v936, %v928
        %v1425 = vpack.c.b16 %v937, %v929
        %v1426 = vpack.c.b16 %v938, %v930
        %v1427 = vpack.c.b16 %v947, %v939
        %v1428 = vpack.c.b16 %v948, %v940
        %v1429 = vpack.c.b16 %v949, %v941
        %v1430 = vpack.c.b16 %v950, %v942
        %v1431 = vpack.c.b16 %v951, %v943
        %v1432 = vpack.c.b16 %v952, %v944
        %v1433 = vpack.c.b16 %v953, %v945
        %v1434 = vpack.c.b16 %v954, %v946
        %v1435 = vpack.c.b16 %v963, %v955
        %v1436 = vpack.c.b16 %v964, %v956
        %v1437 = vpack.c.b16 %v965, %v957
        %v1438 = vpack.c.b16 %v966, %v958
        %v1439 = vpack.c.b16 %v967, %v959
        %v1440 = vpack.c.b16 %v968, %v960
        %v1441 = vpack.c.b16 %v969, %v961
        %v1442 = vpack.c.b16 %v970, %v962
        %v1443 = vpack.c.b16 %v979, %v971
        %v1444 = vpack.c.b16 %v980, %v972
        %v1445 = vpack.c.b16 %v981, %v973
        %v1446 = vpack.c.b16 %v982, %v974
        %v1447 = vpack.c.b16 %v983, %v975
        %v1448 = vpack.c.b16 %v984, %v976
        %v1449 = vpack.c.b16 %v985, %v977
        %v1450 = vpack.c.b16 %v986, %v978
        %v1451 = vpack.c.b16 %v995, %v987
        %v1452 = vpack.c.b16 %v996, %v988
        %v1453 = vpack.c.b16 %v997, %v989
        %v1454 = vpack.c.b16 %v998, %v990
        %v1455 = vpack.c.b16 %v999, %v991
        %v1456 = vpack.c.b16 %v1000, %v992
        %v1457 = vpack.c.b16 %v1001, %v993
        %v1458 = vpack.c.b16 %v1002, %v994
        %v1459 = vpack.c.b16 %v1011, %v1003
        %v1460 = vpack.c.b16 %v1012, %v1004
        %v1461 = vpack.c.b16 %v1013, %v1005
        %v1462 = vpack.c.b16 %v1014, %v1006
        %v1463 = vpack.c.b16 %v1015, %v1007
        %v1464 = vpack.c.b16 %v1016, %v1008
        %v1465 = vpack.c.b16 %v1017, %v1009
        %v1466 = vpack.c.b16 %v1018, %v1010
        %v1467 = vpack.c.b16 %v1027, %v1019
        %v1468 = vpack.c.b16 %v1028, %v1020
        %v1469 = vpack.c.b16 %v1029, %v1021
        %v1470 = vpack.c.b16 %v1030, %v1022
        %v1471 = vpack.c.b16 %v1031, %v1023
        %v1472 = vpack.c.b16 %v1032, %v1024
        %v1473 = vpack.c.b16 %v1033, %v1025
        %v1474 = vpack.c.b16 %v1034, %v1026
        %v1475 = vpack.c.b16 %v1043, %v1035
        %v1476 = vpack.c.b16 %v1044, %v1036
        %v1477 = vpack.c.b16 %v1045, %v1037
        %v1478 = vpack.c.b16 %v1046, %v1038
        %v1479 = vpack.c.b16 %v1047, %v1039
        %v1480 = vpack.c.b16 %v1048, %v1040
        %v1481 = vpack.c.b16 %v1049, %v1041
        %v1482 = vpack.c.b16 %v1050, %v1042
        %v1483 = vpack.c.b16 %v1059, %v1051
        %v1484 = vpack.c.b16 %v1060, %v1052
        %v1485 = vpack.c.b16 %v1061, %v1053
        %v1486 = vpack.c.b16 %v1062, %v1054
        %v1487 = vpack.c.b16 %v1063, %v1055
        %v1488 = vpack.c.b16 %v1064, %v1056
        %v1489 = vpack.c.b16 %v1065, %v1057
        %v1490 = vpack.c.b16 %v1066, %v1058
        %v1491 = vpack.c.b16 %v1075, %v1067
        %v1492 = vpack.c.b16 %v1076, %v1068
        %v1493 = vpack.c.b16 %v1077, %v1069
        %v1494 = vpack.c.b16 %v1078, %v1070
        %v1495 = vpack.c.b16 %v1079, %v1071
        %v1496 = vpack.c.b16 %v1080, %v1072
        %v1497 = vpack.c.b16 %v1081, %v1073
        %v1498 = vpack.c.b16 %v1082, %v1074
        %v1499 = vpack.c.b16 %v1091, %v1083
        %v1500 = vpack.c.b16 %v1092, %v1084
        %v1501 = vpack.c.b16 %v1093, %v1085
        %v1502 = vpack.c.b16 %v1094, %v1086
        %v1503 = vpack.c.b16 %v1095, %v1087
        %v1504 = vpack.c.b16 %v1096, %v1088
        %v1505 = vpack.c.b16 %v1097, %v1089
        %v1506 = vpack.c.b16 %v1098, %v1090
        %v1507 = vpack.c.b16 %v1107, %v1099
        %v1508 = vpack.c.b16 %v1108, %v1100
        %v1509 = vpack.c.b16 %v1109, %v1101
        %v1510 = vpack.c.b16 %v1110, %v1102
        %v1511 = vpack.c.b16 %v1111, %v1103
        %v1512 = vpack.c.b16 %v1112, %v1104
        %v1513 = vpack.c.b16 %v1113, %v1105
        %v1514 = vpack.c.b16 %v1114, %v1106
        %v1515 = vpack.c.b16 %v1123, %v1115
        %v1516 = vpack.c.b16 %v1124, %v1116
        %v1517 = vpack.c.b16 %v1125, %v1117
        %v1518 = vpack.c.b16 %v1126, %v1118
        %v1519 = vpack.c.b16 %v1127, %v1119
        %v1520 = vpack.c.b16 %v1128, %v1120
        %v1521 = vpack.c.b16 %v1129, %v1121
        %v1522 = vpack.c.b16 %v1130, %v1122
        %v1523 = vpack.c.b16 %v1139, %v1131
        %v1524 = vpack.c.b16 %v1140, %v1132
        %v1525 = vpack.c.b16 %v1141, %v1133
        %v1526 = vpack.c.b16 %v1142, %v1134
        %v1527 = vpack.c.b16 %v1143, %v1135
        %v1528 = vpack.c.b16 %v1144, %v1136
        %v1529 = vpack.c.b16 %v1145, %v1137
        %v1530 = vpack.c.b16 %v1146, %v1138
        %v1531 = vpack.c.b16 %v1155, %v1147
        %v1532 = vpack.c.b16 %v1156, %v1148
        %v1533 = vpack.c.b16 %v1157, %v1149
        %v1534 = vpack.c.b16 %v1158, %v1150
        %v1535 = vpack.c.b16 %v1159, %v1151
        %v1536 = vpack.c.b16 %v1160, %v1152
        %v1537 = vpack.c.b16 %v1161, %v1153
        %v1538 = vpack.c.b16 %v1162, %v1154
        %v1539 = vpack.c.b16 %v1171, %v1163
        %v1540 = vpack.c.b16 %v1172, %v1164
        %v1541 = vpack.c.b16 %v1173, %v1165
        %v1542 = vpack.c.b16 %v1174, %v1166
        %v1543 = vpack.c.b16 %v1175, %v1167
        %v1544 = vpack.c.b16 %v1176, %v1168
        %v1545 = vpack.c.b16 %v1177, %v1169
        %v1546 = vpack.c.b16 %v1178, %v1170
        %v1547 = vpack.c.b16 %v1187, %v1179
        %v1548 = vpack.c.b16 %v1188, %v1180
        %v1549 = vpack.c.b16 %v1189, %v1181
        %v1550 = vpack.c.b16 %v1190, %v1182
        %v1551 = vpack.c.b16 %v1191, %v1183
        %v1552 = vpack.c.b16 %v1192, %v1184
        %v1553 = vpack.c.b16 %v1193, %v1185
        %v1554 = vpack.c.b16 %v1194, %v1186
        %v1555 = vpack.c.b16 %v1203, %v1195
        %v1556 = vpack.c.b16 %v1204, %v1196
        %v1557 = vpack.c.b16 %v1205, %v1197
        %v1558 = vpack.c.b16 %v1206, %v1198
        %v1559 = vpack.c.b16 %v1207, %v1199
        %v1560 = vpack.c.b16 %v1208, %v1200
        %v1561 = vpack.c.b16 %v1209, %v1201
        %v1562 = vpack.c.b16 %v1210, %v1202
        %v1563 = vpack.c.b16 %v1219, %v1211
        %v1564 = vpack.c.b16 %v1220, %v1212
        %v1565 = vpack.c.b16 %v1221, %v1213
        %v1566 = vpack.c.b16 %v1222, %v1214
        %v1567 = vpack.c.b16 %v1223, %v1215
        %v1568 = vpack.c.b16 %v1224, %v1216
        %v1569 = vpack.c.b16 %v1225, %v1217
        %v1570 = vpack.c.b16 %v1226, %v1218
        %v1571 = vpack.c.b16 %v1235, %v1227
        %v1572 = vpack.c.b16 %v1236, %v1228
        %v1573 = vpack.c.b16 %v1237, %v1229
        %v1574 = vpack.c.b16 %v1238, %v1230
        %v1575 = vpack.c.b16 %v1239, %v1231
        %v1576 = vpack.c.b16 %v1240, %v1232
        %v1577 = vpack.c.b16 %v1241, %v1233
        %v1578 = vpack.c.b16 %v1242, %v1234
        %v1579 = vpack.c.b16 %v1251, %v1243
        %v1580 = vpack.c.b16 %v1252, %v1244
        %v1581 = vpack.c.b16 %v1253, %v1245
        %v1582 = vpack.c.b16 %v1254, %v1246
        %v1583 = vpack.c.b16 %v1255, %v1247
        %v1584 = vpack.c.b16 %v1256, %v1248
        %v1585 = vpack.c.b16 %v1257, %v1249
        %v1586 = vpack.c.b16 %v1258, %v1250
        %v1587 = vpack.c.b16 %v1267, %v1259
        %v1588 = vpack.c.b16 %v1268, %v1260
        %v1589 = vpack.c.b16 %v1269, %v1261
        %v1590 = vpack.c.b16 %v1270, %v1262
        %v1591 = vpack.c.b16 %v1271, %v1263
        %v1592 = vpack.c.b16 %v1272, %v1264
        %v1593 = vpack.c.b16 %v1273, %v1265
        %v1594 = vpack.c.b16 %v1274, %v1266
        %v1595 = vpack.c.b16 %v1283, %v1275
        %v1596 = vpack.c.b16 %v1284, %v1276
        %v1597 = vpack.c.b16 %v1285, %v1277
        %v1598 = vpack.c.b16 %v1286, %v1278
        %v1599 = vpack.c.b16 %v1287, %v1279
        %v1600 = vpack.c.b16 %v1288, %v1280
        %v1601 = vpack.c.b16 %v1289, %v1281
        %v1602 = vpack.c.b16 %v1290, %v1282
        %v1603 = vpack.c.b16 %v1299, %v1291
        %v1604 = vpack.c.b16 %v1300, %v1292
        %v1605 = vpack.c.b16 %v1301, %v1293
        %v1606 = vpack.c.b16 %v1302, %v1294
        %v1607 = vpack.c.b16 %v1303, %v1295
        %v1608 = vpack.c.b16 %v1304, %v1296
        %v1609 = vpack.c.b16 %v1305, %v1297
        %v1610 = vpack.c.b16 %v1306, %v1298
        %v1611 = vpack.c.b16 %v1315, %v1307
        %v1612 = vpack.c.b16 %v1316, %v1308
        %v1613 = vpack.c.b16 %v1317, %v1309
        %v1614 = vpack.c.b16 %v1318, %v1310
        %v1615 = vpack.c.b16 %v1319, %v1311
        %v1616 = vpack.c.b16 %v1320, %v1312
        %v1617 = vpack.c.b16 %v1321, %v1313
        %v1618 = vpack.c.b16 %v1322, %v1314
        %v1619 = vpack.c.b16 %v1331, %v1323
        %v1620 = vpack.c.b16 %v1332, %v1324
        %v1621 = vpack.c.b16 %v1333, %v1325
        %v1622 = vpack.c.b16 %v1334, %v1326
        %v1623 = vpack.c.b16 %v1335, %v1327
        %v1624 = vpack.c.b16 %v1336, %v1328
        %v1625 = vpack.c.b16 %v1337, %v1329
        %v1626 = vpack.c.b16 %v1338, %v1330
        %v1627 = vpack.c.b16 %v1347, %v1339
        %v1628 = vpack.c.b16 %v1348, %v1340
        %v1629 = vpack.c.b16 %v1349, %v1341
        %v1630 = vpack.c.b16 %v1350, %v1342
        %v1631 = vpack.c.b16 %v1351, %v1343
        %v1632 = vpack.c.b16 %v1352, %v1344
        %v1633 = vpack.c.b16 %v1353, %v1345
        %v1634 = vpack.c.b16 %v1354, %v1346
        %v1635 = vpack.c.b16 %v1363, %v1355
        %v1636 = vpack.c.b16 %v1364, %v1356
        %v1637 = vpack.c.b16 %v1365, %v1357
        %v1638 = vpack.c.b16 %v1366, %v1358
        %v1639 = vpack.c.b16 %v1367, %v1359
        %v1640 = vpack.c.b16 %v1368, %v1360
        %v1641 = vpack.c.b16 %v1369, %v1361
        %v1642 = vpack.c.b16 %v1370, %v1362
        %v1643 = vpack.c.b16 %v1379, %v1371
        %v1644 = vpack.c.b16 %v1380, %v1372
        %v1645 = vpack.c.b16 %v1381, %v1373
        %v1646 = vpack.c.b16 %v1382, %v1374
        %v1647 = vpack.c.b16 %v1383, %v1375
        %v1648 = vpack.c.b16 %v1384, %v1376
        %v1649 = vpack.c.b16 %v1385, %v1377
        %v1650 = vpack.c.b16 %v1386, %v1378
        %v1651 = vpack.c.b16 %v1395, %v1387
        %v1652 = vpack.c.b16 %v1396, %v1388
        %v1653 = vpack.c.b16 %v1397, %v1389
        %v1654 = vpack.c.b16 %v1398, %v1390
        %v1655 = vpack.c.b16 %v1399, %v1391
        %v1656 = vpack.c.b16 %v1400, %v1392
        %v1657 = vpack.c.b16 %v1401, %v1393
        %v1658 = vpack.c.b16 %v1402, %v1394
        %1915 = vmatprep.subr.bf16.mxu0 %v1404
        %1916 = vmatpush1.bf16.msra.mxu0 %v1403
        %1917 = vmatprep.subr.bf16.mxu0 %v1412
        %1918 = vmatpush1.bf16.msra.mxu0 %v1411
        %1919 = vmatprep.subr.bf16.mxu0 %v1420
        %1920 = vmatpush1.bf16.msra.mxu0 %v1419
        %1921 = vmatprep.subr.bf16.mxu0 %v1428
        %1922 = vmatpush1.bf16.msra.mxu0 %v1427
        %1923 = vmatprep.subr.bf16.mxu0 %v1436
        %1924 = vmatpush1.bf16.msra.mxu0 %v1435
        %1925 = vmatprep.subr.bf16.mxu0 %v1444
        %1926 = vmatpush1.bf16.msra.mxu0 %v1443
        %1927 = vmatprep.subr.bf16.mxu0 %v1452
        %1928 = vmatpush1.bf16.msra.mxu0 %v1451
        %1929 = vmatprep.subr.bf16.mxu0 %v1460
        %1930 = vmatpush1.bf16.msra.mxu0 %v1459
        %1931 = vmatprep.subr.bf16.mxu0 %v1468
        %1932 = vmatpush1.bf16.msra.mxu0 %v1467
        %1933 = vmatprep.subr.bf16.mxu0 %v1476
        %1934 = vmatpush1.bf16.msra.mxu0 %v1475
        %1935 = vmatprep.subr.bf16.mxu0 %v1484
        %1936 = vmatpush1.bf16.msra.mxu0 %v1483
        %1937 = vmatprep.subr.bf16.mxu0 %v1492
        %1938 = vmatpush1.bf16.msra.mxu0 %v1491
        %1939 = vmatprep.subr.bf16.mxu0 %v1500
        %1940 = vmatpush1.bf16.msra.mxu0 %v1499
        %1941 = vmatprep.subr.bf16.mxu0 %v1508
        %1942 = vmatpush1.bf16.msra.mxu0 %v1507
        %1943 = vmatprep.subr.bf16.mxu0 %v1516
        %1944 = vmatpush1.bf16.msra.mxu0 %v1515
        %1945 = vmatprep.subr.bf16.mxu0 %v1524
        %1946 = vmatpush1.bf16.msra.mxu0 %v1523
        %1947 = vmatprep.mubr.bf16.mxu0 %v628
        %1948 = vmatmul.mubr.bf16.gmra.mrb[0].mxu0 %v621
        %v1949 = vpop.f32.mrb[0].mxu0
        %v1950 = vadd.f32 %v569, %v1949
        %v1951 = vpop.f32.mrb[0].mxu0
        %v1952 = vadd.f32 %v573, %v1951
        %v1953 = vpop.f32.mrb[0].mxu0
        %v1954 = vpop.f32.mrb[0].mxu0
        %1955 = vdwg.mxu0
        %1956 = vmatprep.subr.bf16.mxu0 %v1532
        %1957 = vmatpush1.bf16.msra.mxu0 %v1531
        %1958 = vmatprep.subr.bf16.mxu0 %v1540
        %1959 = vmatpush1.bf16.msra.mxu0 %v1539
        %1960 = vmatprep.subr.bf16.mxu0 %v1548
        %1961 = vmatpush1.bf16.msra.mxu0 %v1547
        %1962 = vmatprep.subr.bf16.mxu0 %v1556
        %1963 = vmatpush1.bf16.msra.mxu0 %v1555
        %1964 = vmatprep.subr.bf16.mxu0 %v1564
        %1965 = vmatpush1.bf16.msra.mxu0 %v1563
        %1966 = vmatprep.subr.bf16.mxu0 %v1572
        %1967 = vmatpush1.bf16.msra.mxu0 %v1571
        %1968 = vmatprep.subr.bf16.mxu0 %v1580
        %1969 = vmatpush1.bf16.msra.mxu0 %v1579
        %1970 = vmatprep.subr.bf16.mxu0 %v1588
        %1971 = vmatpush1.bf16.msra.mxu0 %v1587
        %1972 = vmatprep.subr.bf16.mxu0 %v1596
        %1973 = vmatpush1.bf16.msra.mxu0 %v1595
        %1974 = vmatprep.subr.bf16.mxu0 %v1604
        %1975 = vmatpush1.bf16.msra.mxu0 %v1603
        %1976 = vmatprep.subr.bf16.mxu0 %v1612
        %1977 = vmatpush1.bf16.msra.mxu0 %v1611
        %1978 = vmatprep.subr.bf16.mxu0 %v1620
        %1979 = vmatpush1.bf16.msra.mxu0 %v1619
        %1980 = vmatprep.subr.bf16.mxu0 %v1628
        %1981 = vmatpush1.bf16.msra.mxu0 %v1627
        %1982 = vmatprep.subr.bf16.mxu0 %v1636
        %1983 = vmatpush1.bf16.msra.mxu0 %v1635
        %1984 = vmatprep.subr.bf16.mxu0 %v1644
        %1985 = vmatpush1.bf16.msra.mxu0 %v1643
        %1986 = vmatprep.subr.bf16.mxu0 %v1652
        %1987 = vmatpush1.bf16.msra.mxu0 %v1651
        %1988 = vmatprep.mubr.bf16.mxu0 %v630
        %1989 = vmatmul.mubr.bf16.gmra.mrb[0].mxu0 %v629
        %v1990 = vpop.f32.mrb[0].mxu0
        %v1991 = vadd.f32 %v1950, %v1990
        %v1992 = vpop.f32.mrb[0].mxu0
        %v1993 = vadd.f32 %v1952, %v1992
        %v1994 = vpop.f32.mrb[0].mxu0
        %v1995 = vpop.f32.mrb[0].mxu0
        %1996 = vdwg.mxu0
        %1997 = vmatprep.subr.bf16.mxu0 %v1406
        %1998 = vmatpush1.bf16.msra.mxu0 %v1405
        %1999 = vmatprep.subr.bf16.mxu0 %v1414
        %2000 = vmatpush1.bf16.msra.mxu0 %v1413
        %2001 = vmatprep.subr.bf16.mxu0 %v1422
        %2002 = vmatpush1.bf16.msra.mxu0 %v1421
        %2003 = vmatprep.subr.bf16.mxu0 %v1430
        %2004 = vmatpush1.bf16.msra.mxu0 %v1429
        %2005 = vmatprep.subr.bf16.mxu0 %v1438
        %2006 = vmatpush1.bf16.msra.mxu0 %v1437
        %2007 = vmatprep.subr.bf16.mxu0 %v1446
        %2008 = vmatpush1.bf16.msra.mxu0 %v1445
        %2009 = vmatprep.subr.bf16.mxu0 %v1454
        %2010 = vmatpush1.bf16.msra.mxu0 %v1453
        %2011 = vmatprep.subr.bf16.mxu0 %v1462
        %2012 = vmatpush1.bf16.msra.mxu0 %v1461
        %2013 = vmatprep.subr.bf16.mxu0 %v1470
        %2014 = vmatpush1.bf16.msra.mxu0 %v1469
        %2015 = vmatprep.subr.bf16.mxu0 %v1478
        %2016 = vmatpush1.bf16.msra.mxu0 %v1477
        %2017 = vmatprep.subr.bf16.mxu0 %v1486
        %2018 = vmatpush1.bf16.msra.mxu0 %v1485
        %2019 = vmatprep.subr.bf16.mxu0 %v1494
        %2020 = vmatpush1.bf16.msra.mxu0 %v1493
        %2021 = vmatprep.subr.bf16.mxu0 %v1502
        %2022 = vmatpush1.bf16.msra.mxu0 %v1501
        %2023 = vmatprep.subr.bf16.mxu0 %v1510
        %2024 = vmatpush1.bf16.msra.mxu0 %v1509
        %2025 = vmatprep.subr.bf16.mxu0 %v1518
        %2026 = vmatpush1.bf16.msra.mxu0 %v1517
        %2027 = vmatprep.subr.bf16.mxu0 %v1526
        %2028 = vmatpush1.bf16.msra.mxu0 %v1525
        %2029 = vmatprep.mubr.bf16.mxu0 %v628
        %2030 = vmatmul.mubr.bf16.gmra.mrb[0].mxu0 %v621
        %v2031 = vpop.f32.mrb[0].mxu0
        %v2032 = vadd.f32 %v577, %v2031
        %v2033 = vpop.f32.mrb[0].mxu0
        %v2034 = vadd.f32 %v581, %v2033
        %v2035 = vpop.f32.mrb[0].mxu0
        %v2036 = vpop.f32.mrb[0].mxu0
        %2037 = vdwg.mxu0
        %2038 = vmatprep.subr.bf16.mxu0 %v1534
        %2039 = vmatpush1.bf16.msra.mxu0 %v1533
        %2040 = vmatprep.subr.bf16.mxu0 %v1542
        %2041 = vmatpush1.bf16.msra.mxu0 %v1541
        %2042 = vmatprep.subr.bf16.mxu0 %v1550
        %2043 = vmatpush1.bf16.msra.mxu0 %v1549
        %2044 = vmatprep.subr.bf16.mxu0 %v1558
        %2045 = vmatpush1.bf16.msra.mxu0 %v1557
        %2046 = vmatprep.subr.bf16.mxu0 %v1566
        %2047 = vmatpush1.bf16.msra.mxu0 %v1565
        %2048 = vmatprep.subr.bf16.mxu0 %v1574
        %2049 = vmatpush1.bf16.msra.mxu0 %v1573
        %2050 = vmatprep.subr.bf16.mxu0 %v1582
        %2051 = vmatpush1.bf16.msra.mxu0 %v1581
        %2052 = vmatprep.subr.bf16.mxu0 %v1590
        %2053 = vmatpush1.bf16.msra.mxu0 %v1589
        %2054 = vmatprep.subr.bf16.mxu0 %v1598
        %2055 = vmatpush1.bf16.msra.mxu0 %v1597
        %2056 = vmatprep.subr.bf16.mxu0 %v1606
        %2057 = vmatpush1.bf16.msra.mxu0 %v1605
        %2058 = vmatprep.subr.bf16.mxu0 %v1614
        %2059 = vmatpush1.bf16.msra.mxu0 %v1613
        %2060 = vmatprep.subr.bf16.mxu0 %v1622
        %2061 = vmatpush1.bf16.msra.mxu0 %v1621
        %2062 = vmatprep.subr.bf16.mxu0 %v1630
        %2063 = vmatpush1.bf16.msra.mxu0 %v1629
        %2064 = vmatprep.subr.bf16.mxu0 %v1638
        %2065 = vmatpush1.bf16.msra.mxu0 %v1637
        %2066 = vmatprep.subr.bf16.mxu0 %v1646
        %2067 = vmatpush1.bf16.msra.mxu0 %v1645
        %2068 = vmatprep.subr.bf16.mxu0 %v1654
        %2069 = vmatpush1.bf16.msra.mxu0 %v1653
        %2070 = vmatprep.mubr.bf16.mxu0 %v630
        %2071 = vmatmul.mubr.bf16.gmra.mrb[0].mxu0 %v629
        %v2072 = vpop.f32.mrb[0].mxu0
        %v2073 = vadd.f32 %v2032, %v2072
        %v2074 = vpop.f32.mrb[0].mxu0
        %v2075 = vadd.f32 %v2034, %v2074
        %v2076 = vpop.f32.mrb[0].mxu0
        %v2077 = vpop.f32.mrb[0].mxu0
        %2078 = vdwg.mxu0
        %2079 = vmatprep.subr.bf16.mxu0 %v1408
        %2080 = vmatpush1.bf16.msra.mxu0 %v1407
        %2081 = vmatprep.subr.bf16.mxu0 %v1416
        %2082 = vmatpush1.bf16.msra.mxu0 %v1415
        %2083 = vmatprep.subr.bf16.mxu0 %v1424
        %2084 = vmatpush1.bf16.msra.mxu0 %v1423
        %2085 = vmatprep.subr.bf16.mxu0 %v1432
        %2086 = vmatpush1.bf16.msra.mxu0 %v1431
        %2087 = vmatprep.subr.bf16.mxu0 %v1440
        %2088 = vmatpush1.bf16.msra.mxu0 %v1439
        %2089 = vmatprep.subr.bf16.mxu0 %v1448
        %2090 = vmatpush1.bf16.msra.mxu0 %v1447
        %2091 = vmatprep.subr.bf16.mxu0 %v1456
        %2092 = vmatpush1.bf16.msra.mxu0 %v1455
        %2093 = vmatprep.subr.bf16.mxu0 %v1464
        %2094 = vmatpush1.bf16.msra.mxu0 %v1463
        %2095 = vmatprep.subr.bf16.mxu0 %v1472
        %2096 = vmatpush1.bf16.msra.mxu0 %v1471
        %2097 = vmatprep.subr.bf16.mxu0 %v1480
        %2098 = vmatpush1.bf16.msra.mxu0 %v1479
        %2099 = vmatprep.subr.bf16.mxu0 %v1488
        %2100 = vmatpush1.bf16.msra.mxu0 %v1487
        %2101 = vmatprep.subr.bf16.mxu0 %v1496
        %2102 = vmatpush1.bf16.msra.mxu0 %v1495
        %2103 = vmatprep.subr.bf16.mxu0 %v1504
        %2104 = vmatpush1.bf16.msra.mxu0 %v1503
        %2105 = vmatprep.subr.bf16.mxu0 %v1512
        %2106 = vmatpush1.bf16.msra.mxu0 %v1511
        %2107 = vmatprep.subr.bf16.mxu0 %v1520
        %2108 = vmatpush1.bf16.msra.mxu0 %v1519
        %2109 = vmatprep.subr.bf16.mxu0 %v1528
        %2110 = vmatpush1.bf16.msra.mxu0 %v1527
        %2111 = vmatprep.mubr.bf16.mxu0 %v628
        %2112 = vmatmul.mubr.bf16.gmra.mrb[0].mxu0 %v621
        %v2113 = vpop.f32.mrb[0].mxu0
        %v2114 = vadd.f32 %v585, %v2113
        %v2115 = vpop.f32.mrb[0].mxu0
        %v2116 = vadd.f32 %v589, %v2115
        %v2117 = vpop.f32.mrb[0].mxu0
        %v2118 = vpop.f32.mrb[0].mxu0
        %2119 = vdwg.mxu0
        %2120 = vmatprep.subr.bf16.mxu0 %v1536
        %2121 = vmatpush1.bf16.msra.mxu0 %v1535
        %2122 = vmatprep.subr.bf16.mxu0 %v1544
        %2123 = vmatpush1.bf16.msra.mxu0 %v1543
        %2124 = vmatprep.subr.bf16.mxu0 %v1552
        %2125 = vmatpush1.bf16.msra.mxu0 %v1551
        %2126 = vmatprep.subr.bf16.mxu0 %v1560
        %2127 = vmatpush1.bf16.msra.mxu0 %v1559
        %2128 = vmatprep.subr.bf16.mxu0 %v1568
        %2129 = vmatpush1.bf16.msra.mxu0 %v1567
        %2130 = vmatprep.subr.bf16.mxu0 %v1576
        %2131 = vmatpush1.bf16.msra.mxu0 %v1575
        %2132 = vmatprep.subr.bf16.mxu0 %v1584
        %2133 = vmatpush1.bf16.msra.mxu0 %v1583
        %2134 = vmatprep.subr.bf16.mxu0 %v1592
        %2135 = vmatpush1.bf16.msra.mxu0 %v1591
        %2136 = vmatprep.subr.bf16.mxu0 %v1600
        %2137 = vmatpush1.bf16.msra.mxu0 %v1599
        %2138 = vmatprep.subr.bf16.mxu0 %v1608
        %2139 = vmatpush1.bf16.msra.mxu0 %v1607
        %2140 = vmatprep.subr.bf16.mxu0 %v1616
        %2141 = vmatpush1.bf16.msra.mxu0 %v1615
        %2142 = vmatprep.subr.bf16.mxu0 %v1624
        %2143 = vmatpush1.bf16.msra.mxu0 %v1623
        %2144 = vmatprep.subr.bf16.mxu0 %v1632
        %2145 = vmatpush1.bf16.msra.mxu0 %v1631
        %2146 = vmatprep.subr.bf16.mxu0 %v1640
        %2147 = vmatpush1.bf16.msra.mxu0 %v1639
        %2148 = vmatprep.subr.bf16.mxu0 %v1648
        %2149 = vmatpush1.bf16.msra.mxu0 %v1647
        %2150 = vmatprep.subr.bf16.mxu0 %v1656
        %2151 = vmatpush1.bf16.msra.mxu0 %v1655
        %2152 = vmatprep.mubr.bf16.mxu0 %v630
        %2153 = vmatmul.mubr.bf16.gmra.mrb[0].mxu0 %v629
        %v2154 = vpop.f32.mrb[0].mxu0
        %v2155 = vadd.f32 %v2114, %v2154
        %v2156 = vpop.f32.mrb[0].mxu0
        %v2157 = vadd.f32 %v2116, %v2156
        %v2158 = vpop.f32.mrb[0].mxu0
        %v2159 = vpop.f32.mrb[0].mxu0
        %2160 = vdwg.mxu0
        %2161 = vmatprep.subr.bf16.mxu0 %v1410
        %2162 = vmatpush1.bf16.msra.mxu0 %v1409
        %2163 = vmatprep.subr.bf16.mxu0 %v1418
        %2164 = vmatpush1.bf16.msra.mxu0 %v1417
        %2165 = vmatprep.subr.bf16.mxu0 %v1426
        %2166 = vmatpush1.bf16.msra.mxu0 %v1425
        %2167 = vmatprep.subr.bf16.mxu0 %v1434
        %2168 = vmatpush1.bf16.msra.mxu0 %v1433
        %2169 = vmatprep.subr.bf16.mxu0 %v1442
        %2170 = vmatpush1.bf16.msra.mxu0 %v1441
        %2171 = vmatprep.subr.bf16.mxu0 %v1450
        %2172 = vmatpush1.bf16.msra.mxu0 %v1449
        %2173 = vmatprep.subr.bf16.mxu0 %v1458
        %2174 = vmatpush1.bf16.msra.mxu0 %v1457
        %2175 = vmatprep.subr.bf16.mxu0 %v1466
        %2176 = vmatpush1.bf16.msra.mxu0 %v1465
        %2177 = vmatprep.subr.bf16.mxu0 %v1474
        %2178 = vmatpush1.bf16.msra.mxu0 %v1473
        %2179 = vmatprep.subr.bf16.mxu0 %v1482
        %2180 = vmatpush1.bf16.msra.mxu0 %v1481
        %2181 = vmatprep.subr.bf16.mxu0 %v1490
        %2182 = vmatpush1.bf16.msra.mxu0 %v1489
        %2183 = vmatprep.subr.bf16.mxu0 %v1498
        %2184 = vmatpush1.bf16.msra.mxu0 %v1497
        %2185 = vmatprep.subr.bf16.mxu0 %v1506
        %2186 = vmatpush1.bf16.msra.mxu0 %v1505
        %2187 = vmatprep.subr.bf16.mxu0 %v1514
        %2188 = vmatpush1.bf16.msra.mxu0 %v1513
        %2189 = vmatprep.subr.bf16.mxu0 %v1522
        %2190 = vmatpush1.bf16.msra.mxu0 %v1521
        %2191 = vmatprep.subr.bf16.mxu0 %v1530
        %2192 = vmatpush1.bf16.msra.mxu0 %v1529
        %2193 = vmatprep.mubr.bf16.mxu0 %v628
        %2194 = vmatmul.mubr.bf16.gmra.mrb[0].mxu0 %v621
        %v2195 = vpop.f32.mrb[0].mxu0
        %v2196 = vadd.f32 %v593, %v2195
        %v2197 = vpop.f32.mrb[0].mxu0
        %v2198 = vadd.f32 %v597, %v2197
        %v2199 = vpop.f32.mrb[0].mxu0
        %v2200 = vpop.f32.mrb[0].mxu0
        %2201 = vdwg.mxu0
        %2202 = vmatprep.subr.bf16.mxu0 %v1538
        %2203 = vmatpush1.bf16.msra.mxu0 %v1537
        %2204 = vmatprep.subr.bf16.mxu0 %v1546
        %2205 = vmatpush1.bf16.msra.mxu0 %v1545
        %2206 = vmatprep.subr.bf16.mxu0 %v1554
        %2207 = vmatpush1.bf16.msra.mxu0 %v1553
        %2208 = vmatprep.subr.bf16.mxu0 %v1562
        %2209 = vmatpush1.bf16.msra.mxu0 %v1561
        %2210 = vmatprep.subr.bf16.mxu0 %v1570
        %2211 = vmatpush1.bf16.msra.mxu0 %v1569
        %2212 = vmatprep.subr.bf16.mxu0 %v1578
        %2213 = vmatpush1.bf16.msra.mxu0 %v1577
        %2214 = vmatprep.subr.bf16.mxu0 %v1586
        %2215 = vmatpush1.bf16.msra.mxu0 %v1585
        %2216 = vmatprep.subr.bf16.mxu0 %v1594
        %2217 = vmatpush1.bf16.msra.mxu0 %v1593
        %2218 = vmatprep.subr.bf16.mxu0 %v1602
        %2219 = vmatpush1.bf16.msra.mxu0 %v1601
        %2220 = vmatprep.subr.bf16.mxu0 %v1610
        %2221 = vmatpush1.bf16.msra.mxu0 %v1609
        %2222 = vmatprep.subr.bf16.mxu0 %v1618
        %2223 = vmatpush1.bf16.msra.mxu0 %v1617
        %2224 = vmatprep.subr.bf16.mxu0 %v1626
        %2225 = vmatpush1.bf16.msra.mxu0 %v1625
        %2226 = vmatprep.subr.bf16.mxu0 %v1634
        %2227 = vmatpush1.bf16.msra.mxu0 %v1633
        %2228 = vmatprep.subr.bf16.mxu0 %v1642
        %2229 = vmatpush1.bf16.msra.mxu0 %v1641
        %2230 = vmatprep.subr.bf16.mxu0 %v1650
        %2231 = vmatpush1.bf16.msra.mxu0 %v1649
        %2232 = vmatprep.subr.bf16.mxu0 %v1658
        %2233 = vmatpush1.bf16.msra.mxu0 %v1657
        %2234 = vmatprep.mubr.bf16.mxu0 %v630
        %2235 = vmatmul.mubr.bf16.gmra.mrb[0].mxu0 %v629
        %v2236 = vpop.f32.mrb[0].mxu0
        %v2237 = vadd.f32 %v2196, %v2236
        %v2238 = vpop.f32.mrb[0].mxu0
        %v2239 = vadd.f32 %v2198, %v2238
        %v2240 = vpop.f32.mrb[0].mxu0
        %v2241 = vpop.f32.mrb[0].mxu0
        %2242 = vdwg.mxu0
        %vm2243 = vcmp.ge.f32.partialorder %v1991, 0.0
        %vm2244 = vcmp.ge.f32.partialorder %v1993, 0.0
        %vm2245 = vcmp.ge.f32.partialorder %v2073, 0.0
        %vm2246 = vcmp.ge.f32.partialorder %v2075, 0.0
        %vm2247 = vcmp.ge.f32.partialorder %v2155, 0.0
        %vm2248 = vcmp.ge.f32.partialorder %v2157, 0.0
        %vm2249 = vcmp.ge.f32.partialorder %v2237, 0.0
        %vm2250 = vcmp.ge.f32.partialorder %v2239, 0.0
        %v2251 = vmul.f32 %v1991, 0.01
        %v2252 = vmul.f32 %v1993, 0.01
        %v2253 = vmul.f32 %v2073, 0.01
        %v2254 = vmul.f32 %v2075, 0.01
        %v2255 = vmul.f32 %v2155, 0.01
        %v2256 = vmul.f32 %v2157, 0.01
        %v2257 = vmul.f32 %v2237, 0.01
        %v2258 = vmul.f32 %v2239, 0.01
        %v2259 = vsel %vm2243, %v1991, %v2251
        %v2260 = vsel %vm2244, %v1993, %v2252
        %v2261 = vsel %vm2245, %v2073, %v2253
        %v2262 = vsel %vm2246, %v2075, %v2254
        %v2263 = vsel %vm2247, %v2155, %v2255
        %v2264 = vsel %vm2248, %v2157, %v2256
        %v2265 = vsel %vm2249, %v2237, %v2257
        %v2266 = vsel %vm2250, %v2239, %v2258
        %v2267 = vpack.c.bf16 %v2259, %v2259
        %v2268 = vpack.c.bf16 %v2260, %v2260
        %v2269 = vpack.c.bf16 %v2261, %v2261
        %v2270 = vpack.c.bf16 %v2262, %v2262
        %v2271 = vpack.c.bf16 %v2263, %v2263
        %v2272 = vpack.c.bf16 %v2264, %v2264
        %v2273 = vpack.c.bf16 %v2265, %v2265
        %v2274 = vpack.c.bf16 %v2266, %v2266
        %v2275 = vld [vmem:[%s259] sm:$0xff]
        %v2276 = vld [vmem:[%s259 + $0x8] sm:$0xff]
        %v2277 = vld [vmem:[%s259 + $0x10] sm:$0xff]
        %v2278 = vld [vmem:[%s259 + $0x18] sm:$0xff]
        %v2279 = vld [vmem:[%s259 + $0x20] sm:$0xff]
        %v2280 = vld [vmem:[%s259 + $0x28] sm:$0xff]
        %v2281 = vld [vmem:[%s259 + $0x30] sm:$0xff]
        %v2282 = vld [vmem:[%s259 + $0x38] sm:$0xff]
        %v2283 = vld [vmem:[%s259 + $0x40] sm:$0xff]
        %v2284 = vld [vmem:[%s259 + $0x48] sm:$0xff]
        %v2285 = vld [vmem:[%s259 + $0x50] sm:$0xff]
        %v2286 = vld [vmem:[%s259 + $0x58] sm:$0xff]
        %v2287 = vld [vmem:[%s259 + $0x60] sm:$0xff]
        %v2288 = vld [vmem:[%s259 + $0x68] sm:$0xff]
        %v2289 = vld [vmem:[%s259 + $0x70] sm:$0xff]
        %v2290 = vld [vmem:[%s259 + $0x78] sm:$0xff]
        %v2291 = vld [vmem:[%s259 + $0x80] sm:$0xff]
        %v2292 = vld [vmem:[%s259 + $0x88] sm:$0xff]
        %v2293 = vld [vmem:[%s259 + $0x90] sm:$0xff]
        %v2294 = vld [vmem:[%s259 + $0x98] sm:$0xff]
        %v2295 = vld [vmem:[%s259 + $0xa0] sm:$0xff]
        %v2296 = vld [vmem:[%s259 + $0xa8] sm:$0xff]
        %v2297 = vld [vmem:[%s259 + $0xb0] sm:$0xff]
        %v2298 = vld [vmem:[%s259 + $0xb8] sm:$0xff]
        %v2299 = vld [vmem:[%s259 + $0xc0] sm:$0xff]
        %v2300 = vld [vmem:[%s259 + $0xc8] sm:$0xff]
        %v2301 = vld [vmem:[%s259 + $0xd0] sm:$0xff]
        %v2302 = vld [vmem:[%s259 + $0xd8] sm:$0xff]
        %v2303 = vld [vmem:[%s259 + $0xe0] sm:$0xff]
        %v2304 = vld [vmem:[%s259 + $0xe8] sm:$0xff]
        %v2305 = vld [vmem:[%s259 + $0xf0] sm:$0xff]
        %v2306 = vld [vmem:[%s259 + $0xf8] sm:$0xff]
        %v2307 = vld [vmem:[%s259 + $0x100] sm:$0xff]
        %v2308 = vld [vmem:[%s259 + $0x108] sm:$0xff]
        %v2309 = vld [vmem:[%s259 + $0x110] sm:$0xff]
        %v2310 = vld [vmem:[%s259 + $0x118] sm:$0xff]
        %v2311 = vld [vmem:[%s259 + $0x120] sm:$0xff]
        %v2312 = vld [vmem:[%s259 + $0x128] sm:$0xff]
        %v2313 = vld [vmem:[%s259 + $0x130] sm:$0xff]
        %v2314 = vld [vmem:[%s259 + $0x138] sm:$0xff]
        %v2315 = vld [vmem:[%s259 + $0x140] sm:$0xff]
        %v2316 = vld [vmem:[%s259 + $0x148] sm:$0xff]
        %v2317 = vld [vmem:[%s259 + $0x150] sm:$0xff]
        %v2318 = vld [vmem:[%s259 + $0x158] sm:$0xff]
        %v2319 = vld [vmem:[%s259 + $0x160] sm:$0xff]
        %v2320 = vld [vmem:[%s259 + $0x168] sm:$0xff]
        %v2321 = vld [vmem:[%s259 + $0x170] sm:$0xff]
        %v2322 = vld [vmem:[%s259 + $0x178] sm:$0xff]
        %v2323 = vld [vmem:[%s259 + $0x180] sm:$0xff]
        %v2324 = vld [vmem:[%s259 + $0x188] sm:$0xff]
        %v2325 = vld [vmem:[%s259 + $0x190] sm:$0xff]
        %v2326 = vld [vmem:[%s259 + $0x198] sm:$0xff]
        %v2327 = vld [vmem:[%s259 + $0x1a0] sm:$0xff]
        %v2328 = vld [vmem:[%s259 + $0x1a8] sm:$0xff]
        %v2329 = vld [vmem:[%s259 + $0x1b0] sm:$0xff]
        %v2330 = vld [vmem:[%s259 + $0x1b8] sm:$0xff]
        %v2331 = vld [vmem:[%s259 + $0x1c0] sm:$0xff]
        %v2332 = vld [vmem:[%s259 + $0x1c8] sm:$0xff]
        %v2333 = vld [vmem:[%s259 + $0x1d0] sm:$0xff]
        %v2334 = vld [vmem:[%s259 + $0x1d8] sm:$0xff]
        %v2335 = vld [vmem:[%s259 + $0x1e0] sm:$0xff]
        %v2336 = vld [vmem:[%s259 + $0x1e8] sm:$0xff]
        %v2337 = vld [vmem:[%s259 + $0x1f0] sm:$0xff]
        %v2338 = vld [vmem:[%s259 + $0x1f8] sm:$0xff]
        %v2339 = vld [vmem:[%s259 + $0x200] sm:$0xff]
        %v2340 = vld [vmem:[%s259 + $0x208] sm:$0xff]
        %v2341 = vld [vmem:[%s259 + $0x210] sm:$0xff]
        %v2342 = vld [vmem:[%s259 + $0x218] sm:$0xff]
        %v2343 = vld [vmem:[%s259 + $0x220] sm:$0xff]
        %v2344 = vld [vmem:[%s259 + $0x228] sm:$0xff]
        %v2345 = vld [vmem:[%s259 + $0x230] sm:$0xff]
        %v2346 = vld [vmem:[%s259 + $0x238] sm:$0xff]
        %v2347 = vld [vmem:[%s259 + $0x240] sm:$0xff]
        %v2348 = vld [vmem:[%s259 + $0x248] sm:$0xff]
        %v2349 = vld [vmem:[%s259 + $0x250] sm:$0xff]
        %v2350 = vld [vmem:[%s259 + $0x258] sm:$0xff]
        %v2351 = vld [vmem:[%s259 + $0x260] sm:$0xff]
        %v2352 = vld [vmem:[%s259 + $0x268] sm:$0xff]
        %v2353 = vld [vmem:[%s259 + $0x270] sm:$0xff]
        %v2354 = vld [vmem:[%s259 + $0x278] sm:$0xff]
        %v2355 = vld [vmem:[%s259 + $0x280] sm:$0xff]
        %v2356 = vld [vmem:[%s259 + $0x288] sm:$0xff]
        %v2357 = vld [vmem:[%s259 + $0x290] sm:$0xff]
        %v2358 = vld [vmem:[%s259 + $0x298] sm:$0xff]
        %v2359 = vld [vmem:[%s259 + $0x2a0] sm:$0xff]
        %v2360 = vld [vmem:[%s259 + $0x2a8] sm:$0xff]
        %v2361 = vld [vmem:[%s259 + $0x2b0] sm:$0xff]
        %v2362 = vld [vmem:[%s259 + $0x2b8] sm:$0xff]
        %v2363 = vld [vmem:[%s259 + $0x2c0] sm:$0xff]
        %v2364 = vld [vmem:[%s259 + $0x2c8] sm:$0xff]
        %v2365 = vld [vmem:[%s259 + $0x2d0] sm:$0xff]
        %v2366 = vld [vmem:[%s259 + $0x2d8] sm:$0xff]
        %v2367 = vld [vmem:[%s259 + $0x2e0] sm:$0xff]
        %v2368 = vld [vmem:[%s259 + $0x2e8] sm:$0xff]
        %v2369 = vld [vmem:[%s259 + $0x2f0] sm:$0xff]
        %v2370 = vld [vmem:[%s259 + $0x2f8] sm:$0xff]
        %v2371 = vld [vmem:[%s259 + $0x300] sm:$0xff]
        %v2372 = vld [vmem:[%s259 + $0x308] sm:$0xff]
        %v2373 = vld [vmem:[%s259 + $0x310] sm:$0xff]
        %v2374 = vld [vmem:[%s259 + $0x318] sm:$0xff]
        %v2375 = vld [vmem:[%s259 + $0x320] sm:$0xff]
        %v2376 = vld [vmem:[%s259 + $0x328] sm:$0xff]
        %v2377 = vld [vmem:[%s259 + $0x330] sm:$0xff]
        %v2378 = vld [vmem:[%s259 + $0x338] sm:$0xff]
        %v2379 = vld [vmem:[%s259 + $0x340] sm:$0xff]
        %v2380 = vld [vmem:[%s259 + $0x348] sm:$0xff]
        %v2381 = vld [vmem:[%s259 + $0x350] sm:$0xff]
        %v2382 = vld [vmem:[%s259 + $0x358] sm:$0xff]
        %v2383 = vld [vmem:[%s259 + $0x360] sm:$0xff]
        %v2384 = vld [vmem:[%s259 + $0x368] sm:$0xff]
        %v2385 = vld [vmem:[%s259 + $0x370] sm:$0xff]
        %v2386 = vld [vmem:[%s259 + $0x378] sm:$0xff]
        %v2387 = vld [vmem:[%s259 + $0x380] sm:$0xff]
        %v2388 = vld [vmem:[%s259 + $0x388] sm:$0xff]
        %v2389 = vld [vmem:[%s259 + $0x390] sm:$0xff]
        %v2390 = vld [vmem:[%s259 + $0x398] sm:$0xff]
        %v2391 = vld [vmem:[%s259 + $0x3a0] sm:$0xff]
        %v2392 = vld [vmem:[%s259 + $0x3a8] sm:$0xff]
        %v2393 = vld [vmem:[%s259 + $0x3b0] sm:$0xff]
        %v2394 = vld [vmem:[%s259 + $0x3b8] sm:$0xff]
        %v2395 = vld [vmem:[%s259 + $0x3c0] sm:$0xff]
        %v2396 = vld [vmem:[%s259 + $0x3c8] sm:$0xff]
        %v2397 = vld [vmem:[%s259 + $0x3d0] sm:$0xff]
        %v2398 = vld [vmem:[%s259 + $0x3d8] sm:$0xff]
        %v2399 = vld [vmem:[%s259 + $0x3e0] sm:$0xff]
        %v2400 = vld [vmem:[%s259 + $0x3e8] sm:$0xff]
        %v2401 = vld [vmem:[%s259 + $0x3f0] sm:$0xff]
        %v2402 = vld [vmem:[%s259 + $0x3f8] sm:$0xff]
        %v2403 = vld [vmem:[%s259 + $0x400] sm:$0xff]
        %v2404 = vld [vmem:[%s259 + $0x408] sm:$0xff]
        %v2405 = vld [vmem:[%s259 + $0x410] sm:$0xff]
        %v2406 = vld [vmem:[%s259 + $0x418] sm:$0xff]
        %v2407 = vld [vmem:[%s259 + $0x420] sm:$0xff]
        %v2408 = vld [vmem:[%s259 + $0x428] sm:$0xff]
        %v2409 = vld [vmem:[%s259 + $0x430] sm:$0xff]
        %v2410 = vld [vmem:[%s259 + $0x438] sm:$0xff]
        %v2411 = vld [vmem:[%s259 + $0x440] sm:$0xff]
        %v2412 = vld [vmem:[%s259 + $0x448] sm:$0xff]
        %v2413 = vld [vmem:[%s259 + $0x450] sm:$0xff]
        %v2414 = vld [vmem:[%s259 + $0x458] sm:$0xff]
        %v2415 = vld [vmem:[%s259 + $0x460] sm:$0xff]
        %v2416 = vld [vmem:[%s259 + $0x468] sm:$0xff]
        %v2417 = vld [vmem:[%s259 + $0x470] sm:$0xff]
        %v2418 = vld [vmem:[%s259 + $0x478] sm:$0xff]
        %v2419 = vld [vmem:[%s259 + $0x480] sm:$0xff]
        %v2420 = vld [vmem:[%s259 + $0x488] sm:$0xff]
        %v2421 = vld [vmem:[%s259 + $0x490] sm:$0xff]
        %v2422 = vld [vmem:[%s259 + $0x498] sm:$0xff]
        %v2423 = vld [vmem:[%s259 + $0x4a0] sm:$0xff]
        %v2424 = vld [vmem:[%s259 + $0x4a8] sm:$0xff]
        %v2425 = vld [vmem:[%s259 + $0x4b0] sm:$0xff]
        %v2426 = vld [vmem:[%s259 + $0x4b8] sm:$0xff]
        %v2427 = vld [vmem:[%s259 + $0x4c0] sm:$0xff]
        %v2428 = vld [vmem:[%s259 + $0x4c8] sm:$0xff]
        %v2429 = vld [vmem:[%s259 + $0x4d0] sm:$0xff]
        %v2430 = vld [vmem:[%s259 + $0x4d8] sm:$0xff]
        %v2431 = vld [vmem:[%s259 + $0x4e0] sm:$0xff]
        %v2432 = vld [vmem:[%s259 + $0x4e8] sm:$0xff]
        %v2433 = vld [vmem:[%s259 + $0x4f0] sm:$0xff]
        %v2434 = vld [vmem:[%s259 + $0x4f8] sm:$0xff]
        %v2435 = vld [vmem:[%s259 + $0x500] sm:$0xff]
        %v2436 = vld [vmem:[%s259 + $0x508] sm:$0xff]
        %v2437 = vld [vmem:[%s259 + $0x510] sm:$0xff]
        %v2438 = vld [vmem:[%s259 + $0x518] sm:$0xff]
        %v2439 = vld [vmem:[%s259 + $0x520] sm:$0xff]
        %v2440 = vld [vmem:[%s259 + $0x528] sm:$0xff]
        %v2441 = vld [vmem:[%s259 + $0x530] sm:$0xff]
        %v2442 = vld [vmem:[%s259 + $0x538] sm:$0xff]
        %v2443 = vld [vmem:[%s259 + $0x540] sm:$0xff]
        %v2444 = vld [vmem:[%s259 + $0x548] sm:$0xff]
        %v2445 = vld [vmem:[%s259 + $0x550] sm:$0xff]
        %v2446 = vld [vmem:[%s259 + $0x558] sm:$0xff]
        %v2447 = vld [vmem:[%s259 + $0x560] sm:$0xff]
        %v2448 = vld [vmem:[%s259 + $0x568] sm:$0xff]
        %v2449 = vld [vmem:[%s259 + $0x570] sm:$0xff]
        %v2450 = vld [vmem:[%s259 + $0x578] sm:$0xff]
        %v2451 = vld [vmem:[%s259 + $0x580] sm:$0xff]
        %v2452 = vld [vmem:[%s259 + $0x588] sm:$0xff]
        %v2453 = vld [vmem:[%s259 + $0x590] sm:$0xff]
        %v2454 = vld [vmem:[%s259 + $0x598] sm:$0xff]
        %v2455 = vld [vmem:[%s259 + $0x5a0] sm:$0xff]
        %v2456 = vld [vmem:[%s259 + $0x5a8] sm:$0xff]
        %v2457 = vld [vmem:[%s259 + $0x5b0] sm:$0xff]
        %v2458 = vld [vmem:[%s259 + $0x5b8] sm:$0xff]
        %v2459 = vld [vmem:[%s259 + $0x5c0] sm:$0xff]
        %v2460 = vld [vmem:[%s259 + $0x5c8] sm:$0xff]
        %v2461 = vld [vmem:[%s259 + $0x5d0] sm:$0xff]
        %v2462 = vld [vmem:[%s259 + $0x5d8] sm:$0xff]
        %v2463 = vld [vmem:[%s259 + $0x5e0] sm:$0xff]
        %v2464 = vld [vmem:[%s259 + $0x5e8] sm:$0xff]
        %v2465 = vld [vmem:[%s259 + $0x5f0] sm:$0xff]
        %v2466 = vld [vmem:[%s259 + $0x5f8] sm:$0xff]
        %v2467 = vld [vmem:[%s259 + $0x600] sm:$0xff]
        %v2468 = vld [vmem:[%s259 + $0x608] sm:$0xff]
        %v2469 = vld [vmem:[%s259 + $0x610] sm:$0xff]
        %v2470 = vld [vmem:[%s259 + $0x618] sm:$0xff]
        %v2471 = vld [vmem:[%s259 + $0x620] sm:$0xff]
        %v2472 = vld [vmem:[%s259 + $0x628] sm:$0xff]
        %v2473 = vld [vmem:[%s259 + $0x630] sm:$0xff]
        %v2474 = vld [vmem:[%s259 + $0x638] sm:$0xff]
        %v2475 = vld [vmem:[%s259 + $0x640] sm:$0xff]
        %v2476 = vld [vmem:[%s259 + $0x648] sm:$0xff]
        %v2477 = vld [vmem:[%s259 + $0x650] sm:$0xff]
        %v2478 = vld [vmem:[%s259 + $0x658] sm:$0xff]
        %v2479 = vld [vmem:[%s259 + $0x660] sm:$0xff]
        %v2480 = vld [vmem:[%s259 + $0x668] sm:$0xff]
        %v2481 = vld [vmem:[%s259 + $0x670] sm:$0xff]
        %v2482 = vld [vmem:[%s259 + $0x678] sm:$0xff]
        %v2483 = vld [vmem:[%s259 + $0x680] sm:$0xff]
        %v2484 = vld [vmem:[%s259 + $0x688] sm:$0xff]
        %v2485 = vld [vmem:[%s259 + $0x690] sm:$0xff]
        %v2486 = vld [vmem:[%s259 + $0x698] sm:$0xff]
        %v2487 = vld [vmem:[%s259 + $0x6a0] sm:$0xff]
        %v2488 = vld [vmem:[%s259 + $0x6a8] sm:$0xff]
        %v2489 = vld [vmem:[%s259 + $0x6b0] sm:$0xff]
        %v2490 = vld [vmem:[%s259 + $0x6b8] sm:$0xff]
        %v2491 = vld [vmem:[%s259 + $0x6c0] sm:$0xff]
        %v2492 = vld [vmem:[%s259 + $0x6c8] sm:$0xff]
        %v2493 = vld [vmem:[%s259 + $0x6d0] sm:$0xff]
        %v2494 = vld [vmem:[%s259 + $0x6d8] sm:$0xff]
        %v2495 = vld [vmem:[%s259 + $0x6e0] sm:$0xff]
        %v2496 = vld [vmem:[%s259 + $0x6e8] sm:$0xff]
        %v2497 = vld [vmem:[%s259 + $0x6f0] sm:$0xff]
        %v2498 = vld [vmem:[%s259 + $0x6f8] sm:$0xff]
        %v2499 = vld [vmem:[%s259 + $0x700] sm:$0xff]
        %v2500 = vld [vmem:[%s259 + $0x708] sm:$0xff]
        %v2501 = vld [vmem:[%s259 + $0x710] sm:$0xff]
        %v2502 = vld [vmem:[%s259 + $0x718] sm:$0xff]
        %v2503 = vld [vmem:[%s259 + $0x720] sm:$0xff]
        %v2504 = vld [vmem:[%s259 + $0x728] sm:$0xff]
        %v2505 = vld [vmem:[%s259 + $0x730] sm:$0xff]
        %v2506 = vld [vmem:[%s259 + $0x738] sm:$0xff]
        %v2507 = vld [vmem:[%s259 + $0x740] sm:$0xff]
        %v2508 = vld [vmem:[%s259 + $0x748] sm:$0xff]
        %v2509 = vld [vmem:[%s259 + $0x750] sm:$0xff]
        %v2510 = vld [vmem:[%s259 + $0x758] sm:$0xff]
        %v2511 = vld [vmem:[%s259 + $0x760] sm:$0xff]
        %v2512 = vld [vmem:[%s259 + $0x768] sm:$0xff]
        %v2513 = vld [vmem:[%s259 + $0x770] sm:$0xff]
        %v2514 = vld [vmem:[%s259 + $0x778] sm:$0xff]
        %v2515 = vld [vmem:[%s259 + $0x780] sm:$0xff]
        %v2516 = vld [vmem:[%s259 + $0x788] sm:$0xff]
        %v2517 = vld [vmem:[%s259 + $0x790] sm:$0xff]
        %v2518 = vld [vmem:[%s259 + $0x798] sm:$0xff]
        %v2519 = vld [vmem:[%s259 + $0x7a0] sm:$0xff]
        %v2520 = vld [vmem:[%s259 + $0x7a8] sm:$0xff]
        %v2521 = vld [vmem:[%s259 + $0x7b0] sm:$0xff]
        %v2522 = vld [vmem:[%s259 + $0x7b8] sm:$0xff]
        %v2523 = vld [vmem:[%s259 + $0x7c0] sm:$0xff]
        %v2524 = vld [vmem:[%s259 + $0x7c8] sm:$0xff]
        %v2525 = vld [vmem:[%s259 + $0x7d0] sm:$0xff]
        %v2526 = vld [vmem:[%s259 + $0x7d8] sm:$0xff]
        %v2527 = vld [vmem:[%s259 + $0x7e0] sm:$0xff]
        %v2528 = vld [vmem:[%s259 + $0x7e8] sm:$0xff]
        %v2529 = vld [vmem:[%s259 + $0x7f0] sm:$0xff]
        %v2530 = vld [vmem:[%s259 + $0x7f8] sm:$0xff]
        %v2531 = vld [vmem:[%s259 + $0x800] sm:$0xff]
        %v2532 = vld [vmem:[%s259 + $0x808] sm:$0xff]
        %v2533 = vld [vmem:[%s259 + $0x810] sm:$0xff]
        %v2534 = vld [vmem:[%s259 + $0x818] sm:$0xff]
        %v2535 = vld [vmem:[%s259 + $0x820] sm:$0xff]
        %v2536 = vld [vmem:[%s259 + $0x828] sm:$0xff]
        %v2537 = vld [vmem:[%s259 + $0x830] sm:$0xff]
        %v2538 = vld [vmem:[%s259 + $0x838] sm:$0xff]
        %v2539 = vld [vmem:[%s259 + $0x840] sm:$0xff]
        %v2540 = vld [vmem:[%s259 + $0x848] sm:$0xff]
        %v2541 = vld [vmem:[%s259 + $0x850] sm:$0xff]
        %v2542 = vld [vmem:[%s259 + $0x858] sm:$0xff]
        %v2543 = vld [vmem:[%s259 + $0x860] sm:$0xff]
        %v2544 = vld [vmem:[%s259 + $0x868] sm:$0xff]
        %v2545 = vld [vmem:[%s259 + $0x870] sm:$0xff]
        %v2546 = vld [vmem:[%s259 + $0x878] sm:$0xff]
        %v2547 = vld [vmem:[%s259 + $0x880] sm:$0xff]
        %v2548 = vld [vmem:[%s259 + $0x888] sm:$0xff]
        %v2549 = vld [vmem:[%s259 + $0x890] sm:$0xff]
        %v2550 = vld [vmem:[%s259 + $0x898] sm:$0xff]
        %v2551 = vld [vmem:[%s259 + $0x8a0] sm:$0xff]
        %v2552 = vld [vmem:[%s259 + $0x8a8] sm:$0xff]
        %v2553 = vld [vmem:[%s259 + $0x8b0] sm:$0xff]
        %v2554 = vld [vmem:[%s259 + $0x8b8] sm:$0xff]
        %v2555 = vld [vmem:[%s259 + $0x8c0] sm:$0xff]
        %v2556 = vld [vmem:[%s259 + $0x8c8] sm:$0xff]
        %v2557 = vld [vmem:[%s259 + $0x8d0] sm:$0xff]
        %v2558 = vld [vmem:[%s259 + $0x8d8] sm:$0xff]
        %v2559 = vld [vmem:[%s259 + $0x8e0] sm:$0xff]
        %v2560 = vld [vmem:[%s259 + $0x8e8] sm:$0xff]
        %v2561 = vld [vmem:[%s259 + $0x8f0] sm:$0xff]
        %v2562 = vld [vmem:[%s259 + $0x8f8] sm:$0xff]
        %v2563 = vld [vmem:[%s259 + $0x900] sm:$0xff]
        %v2564 = vld [vmem:[%s259 + $0x908] sm:$0xff]
        %v2565 = vld [vmem:[%s259 + $0x910] sm:$0xff]
        %v2566 = vld [vmem:[%s259 + $0x918] sm:$0xff]
        %v2567 = vld [vmem:[%s259 + $0x920] sm:$0xff]
        %v2568 = vld [vmem:[%s259 + $0x928] sm:$0xff]
        %v2569 = vld [vmem:[%s259 + $0x930] sm:$0xff]
        %v2570 = vld [vmem:[%s259 + $0x938] sm:$0xff]
        %v2571 = vld [vmem:[%s259 + $0x940] sm:$0xff]
        %v2572 = vld [vmem:[%s259 + $0x948] sm:$0xff]
        %v2573 = vld [vmem:[%s259 + $0x950] sm:$0xff]
        %v2574 = vld [vmem:[%s259 + $0x958] sm:$0xff]
        %v2575 = vld [vmem:[%s259 + $0x960] sm:$0xff]
        %v2576 = vld [vmem:[%s259 + $0x968] sm:$0xff]
        %v2577 = vld [vmem:[%s259 + $0x970] sm:$0xff]
        %v2578 = vld [vmem:[%s259 + $0x978] sm:$0xff]
        %v2579 = vld [vmem:[%s259 + $0x980] sm:$0xff]
        %v2580 = vld [vmem:[%s259 + $0x988] sm:$0xff]
        %v2581 = vld [vmem:[%s259 + $0x990] sm:$0xff]
        %v2582 = vld [vmem:[%s259 + $0x998] sm:$0xff]
        %v2583 = vld [vmem:[%s259 + $0x9a0] sm:$0xff]
        %v2584 = vld [vmem:[%s259 + $0x9a8] sm:$0xff]
        %v2585 = vld [vmem:[%s259 + $0x9b0] sm:$0xff]
        %v2586 = vld [vmem:[%s259 + $0x9b8] sm:$0xff]
        %v2587 = vld [vmem:[%s259 + $0x9c0] sm:$0xff]
        %v2588 = vld [vmem:[%s259 + $0x9c8] sm:$0xff]
        %v2589 = vld [vmem:[%s259 + $0x9d0] sm:$0xff]
        %v2590 = vld [vmem:[%s259 + $0x9d8] sm:$0xff]
        %v2591 = vld [vmem:[%s259 + $0x9e0] sm:$0xff]
        %v2592 = vld [vmem:[%s259 + $0x9e8] sm:$0xff]
        %v2593 = vld [vmem:[%s259 + $0x9f0] sm:$0xff]
        %v2594 = vld [vmem:[%s259 + $0x9f8] sm:$0xff]
        %v2595 = vld [vmem:[%s259 + $0xa00] sm:$0xff]
        %v2596 = vld [vmem:[%s259 + $0xa08] sm:$0xff]
        %v2597 = vld [vmem:[%s259 + $0xa10] sm:$0xff]
        %v2598 = vld [vmem:[%s259 + $0xa18] sm:$0xff]
        %v2599 = vld [vmem:[%s259 + $0xa20] sm:$0xff]
        %v2600 = vld [vmem:[%s259 + $0xa28] sm:$0xff]
        %v2601 = vld [vmem:[%s259 + $0xa30] sm:$0xff]
        %v2602 = vld [vmem:[%s259 + $0xa38] sm:$0xff]
        %v2603 = vld [vmem:[%s259 + $0xa40] sm:$0xff]
        %v2604 = vld [vmem:[%s259 + $0xa48] sm:$0xff]
        %v2605 = vld [vmem:[%s259 + $0xa50] sm:$0xff]
        %v2606 = vld [vmem:[%s259 + $0xa58] sm:$0xff]
        %v2607 = vld [vmem:[%s259 + $0xa60] sm:$0xff]
        %v2608 = vld [vmem:[%s259 + $0xa68] sm:$0xff]
        %v2609 = vld [vmem:[%s259 + $0xa70] sm:$0xff]
        %v2610 = vld [vmem:[%s259 + $0xa78] sm:$0xff]
        %v2611 = vld [vmem:[%s259 + $0xa80] sm:$0xff]
        %v2612 = vld [vmem:[%s259 + $0xa88] sm:$0xff]
        %v2613 = vld [vmem:[%s259 + $0xa90] sm:$0xff]
        %v2614 = vld [vmem:[%s259 + $0xa98] sm:$0xff]
        %v2615 = vld [vmem:[%s259 + $0xaa0] sm:$0xff]
        %v2616 = vld [vmem:[%s259 + $0xaa8] sm:$0xff]
        %v2617 = vld [vmem:[%s259 + $0xab0] sm:$0xff]
        %v2618 = vld [vmem:[%s259 + $0xab8] sm:$0xff]
        %v2619 = vld [vmem:[%s259 + $0xac0] sm:$0xff]
        %v2620 = vld [vmem:[%s259 + $0xac8] sm:$0xff]
        %v2621 = vld [vmem:[%s259 + $0xad0] sm:$0xff]
        %v2622 = vld [vmem:[%s259 + $0xad8] sm:$0xff]
        %v2623 = vld [vmem:[%s259 + $0xae0] sm:$0xff]
        %v2624 = vld [vmem:[%s259 + $0xae8] sm:$0xff]
        %v2625 = vld [vmem:[%s259 + $0xaf0] sm:$0xff]
        %v2626 = vld [vmem:[%s259 + $0xaf8] sm:$0xff]
        %v2627 = vld [vmem:[%s259 + $0xb00] sm:$0xff]
        %v2628 = vld [vmem:[%s259 + $0xb08] sm:$0xff]
        %v2629 = vld [vmem:[%s259 + $0xb10] sm:$0xff]
        %v2630 = vld [vmem:[%s259 + $0xb18] sm:$0xff]
        %v2631 = vld [vmem:[%s259 + $0xb20] sm:$0xff]
        %v2632 = vld [vmem:[%s259 + $0xb28] sm:$0xff]
        %v2633 = vld [vmem:[%s259 + $0xb30] sm:$0xff]
        %v2634 = vld [vmem:[%s259 + $0xb38] sm:$0xff]
        %v2635 = vld [vmem:[%s259 + $0xb40] sm:$0xff]
        %v2636 = vld [vmem:[%s259 + $0xb48] sm:$0xff]
        %v2637 = vld [vmem:[%s259 + $0xb50] sm:$0xff]
        %v2638 = vld [vmem:[%s259 + $0xb58] sm:$0xff]
        %v2639 = vld [vmem:[%s259 + $0xb60] sm:$0xff]
        %v2640 = vld [vmem:[%s259 + $0xb68] sm:$0xff]
        %v2641 = vld [vmem:[%s259 + $0xb70] sm:$0xff]
        %v2642 = vld [vmem:[%s259 + $0xb78] sm:$0xff]
        %v2643 = vld [vmem:[%s259 + $0xb80] sm:$0xff]
        %v2644 = vld [vmem:[%s259 + $0xb88] sm:$0xff]
        %v2645 = vld [vmem:[%s259 + $0xb90] sm:$0xff]
        %v2646 = vld [vmem:[%s259 + $0xb98] sm:$0xff]
        %v2647 = vld [vmem:[%s259 + $0xba0] sm:$0xff]
        %v2648 = vld [vmem:[%s259 + $0xba8] sm:$0xff]
        %v2649 = vld [vmem:[%s259 + $0xbb0] sm:$0xff]
        %v2650 = vld [vmem:[%s259 + $0xbb8] sm:$0xff]
        %v2651 = vld [vmem:[%s259 + $0xbc0] sm:$0xff]
        %v2652 = vld [vmem:[%s259 + $0xbc8] sm:$0xff]
        %v2653 = vld [vmem:[%s259 + $0xbd0] sm:$0xff]
        %v2654 = vld [vmem:[%s259 + $0xbd8] sm:$0xff]
        %v2655 = vld [vmem:[%s259 + $0xbe0] sm:$0xff]
        %v2656 = vld [vmem:[%s259 + $0xbe8] sm:$0xff]
        %v2657 = vld [vmem:[%s259 + $0xbf0] sm:$0xff]
        %v2658 = vld [vmem:[%s259 + $0xbf8] sm:$0xff]
        %v2659 = vld [vmem:[%s268] sm:$0x3f]
        %v2661 = vlaneseq
        %v2662 = vshrl.u32 %v2661, 7
        %v2663 = vsub.s32 0, %v2662
        %v2664 = vrot.slane %v2659, %v2663
        %v2665 = vlaneseq
        %v2666 = vshrl.u32 %v2665, 7
        %v2667 = vsub.s32 1, %v2666
        %v2668 = vrot.slane %v2659, %v2667
        %v2669 = vlaneseq
        %v2670 = vshrl.u32 %v2669, 7
        %v2671 = vsub.s32 2, %v2670
        %v2672 = vrot.slane %v2659, %v2671
        %v2673 = vlaneseq
        %v2674 = vshrl.u32 %v2673, 7
        %v2675 = vsub.s32 3, %v2674
        %v2676 = vrot.slane %v2659, %v2675
        %v2677 = vlaneseq
        %v2678 = vshrl.u32 %v2677, 7
        %v2679 = vsub.s32 4, %v2678
        %v2680 = vrot.slane %v2659, %v2679
        %v2681 = vlaneseq
        %v2682 = vshrl.u32 %v2681, 7
        %v2683 = vsub.s32 5, %v2682
        %v2684 = vrot.slane %v2659, %v2683
        %v3075 = vunpack.c.l.b16 %v2275
        %v3076 = vunpack.c.h.b16 %v2275
        %v3077 = vunpack.c.l.b16 %v2276
        %v3078 = vunpack.c.h.b16 %v2276
        %v3079 = vunpack.c.l.b16 %v2277
        %v3080 = vunpack.c.h.b16 %v2277
        %v3081 = vunpack.c.l.b16 %v2278
        %v3082 = vunpack.c.h.b16 %v2278
        %v3083 = vunpack.c.l.b16 %v2279
        %v3084 = vunpack.c.h.b16 %v2279
        %v3085 = vunpack.c.l.b16 %v2280
        %v3086 = vunpack.c.h.b16 %v2280
        %v3087 = vunpack.c.l.b16 %v2281
        %v3088 = vunpack.c.h.b16 %v2281
        %v3089 = vunpack.c.l.b16 %v2282
        %v3090 = vunpack.c.h.b16 %v2282
        %v3091 = vunpack.c.l.b16 %v2283
        %v3092 = vunpack.c.h.b16 %v2283
        %v3093 = vunpack.c.l.b16 %v2284
        %v3094 = vunpack.c.h.b16 %v2284
        %v3095 = vunpack.c.l.b16 %v2285
        %v3096 = vunpack.c.h.b16 %v2285
        %v3097 = vunpack.c.l.b16 %v2286
        %v3098 = vunpack.c.h.b16 %v2286
        %v3099 = vunpack.c.l.b16 %v2287
        %v3100 = vunpack.c.h.b16 %v2287
        %v3101 = vunpack.c.l.b16 %v2288
        %v3102 = vunpack.c.h.b16 %v2288
        %v3103 = vunpack.c.l.b16 %v2289
        %v3104 = vunpack.c.h.b16 %v2289
        %v3105 = vunpack.c.l.b16 %v2290
        %v3106 = vunpack.c.h.b16 %v2290
        %v3107 = vunpack.c.l.b16 %v2291
        %v3108 = vunpack.c.h.b16 %v2291
        %v3109 = vunpack.c.l.b16 %v2292
        %v3110 = vunpack.c.h.b16 %v2292
        %v3111 = vunpack.c.l.b16 %v2293
        %v3112 = vunpack.c.h.b16 %v2293
        %v3113 = vunpack.c.l.b16 %v2294
        %v3114 = vunpack.c.h.b16 %v2294
        %v3115 = vunpack.c.l.b16 %v2295
        %v3116 = vunpack.c.h.b16 %v2295
        %v3117 = vunpack.c.l.b16 %v2296
        %v3118 = vunpack.c.h.b16 %v2296
        %v3119 = vunpack.c.l.b16 %v2297
        %v3120 = vunpack.c.h.b16 %v2297
        %v3121 = vunpack.c.l.b16 %v2298
        %v3122 = vunpack.c.h.b16 %v2298
        %v3123 = vunpack.c.l.b16 %v2299
        %v3124 = vunpack.c.h.b16 %v2299
        %v3125 = vunpack.c.l.b16 %v2300
        %v3126 = vunpack.c.h.b16 %v2300
        %v3127 = vunpack.c.l.b16 %v2301
        %v3128 = vunpack.c.h.b16 %v2301
        %v3129 = vunpack.c.l.b16 %v2302
        %v3130 = vunpack.c.h.b16 %v2302
        %v3131 = vunpack.c.l.b16 %v2303
        %v3132 = vunpack.c.h.b16 %v2303
        %v3133 = vunpack.c.l.b16 %v2304
        %v3134 = vunpack.c.h.b16 %v2304
        %v3135 = vunpack.c.l.b16 %v2305
        %v3136 = vunpack.c.h.b16 %v2305
        %v3137 = vunpack.c.l.b16 %v2306
        %v3138 = vunpack.c.h.b16 %v2306
        %v3139 = vunpack.c.l.b16 %v2307
        %v3140 = vunpack.c.h.b16 %v2307
        %v3141 = vunpack.c.l.b16 %v2308
        %v3142 = vunpack.c.h.b16 %v2308
        %v3143 = vunpack.c.l.b16 %v2309
        %v3144 = vunpack.c.h.b16 %v2309
        %v3145 = vunpack.c.l.b16 %v2310
        %v3146 = vunpack.c.h.b16 %v2310
        %v3147 = vunpack.c.l.b16 %v2311
        %v3148 = vunpack.c.h.b16 %v2311
        %v3149 = vunpack.c.l.b16 %v2312
        %v3150 = vunpack.c.h.b16 %v2312
        %v3151 = vunpack.c.l.b16 %v2313
        %v3152 = vunpack.c.h.b16 %v2313
        %v3153 = vunpack.c.l.b16 %v2314
        %v3154 = vunpack.c.h.b16 %v2314
        %v3155 = vunpack.c.l.b16 %v2315
        %v3156 = vunpack.c.h.b16 %v2315
        %v3157 = vunpack.c.l.b16 %v2316
        %v3158 = vunpack.c.h.b16 %v2316
        %v3159 = vunpack.c.l.b16 %v2317
        %v3160 = vunpack.c.h.b16 %v2317
        %v3161 = vunpack.c.l.b16 %v2318
        %v3162 = vunpack.c.h.b16 %v2318
        %v3163 = vunpack.c.l.b16 %v2319
        %v3164 = vunpack.c.h.b16 %v2319
        %v3165 = vunpack.c.l.b16 %v2320
        %v3166 = vunpack.c.h.b16 %v2320
        %v3167 = vunpack.c.l.b16 %v2321
        %v3168 = vunpack.c.h.b16 %v2321
        %v3169 = vunpack.c.l.b16 %v2322
        %v3170 = vunpack.c.h.b16 %v2322
        %v3171 = vunpack.c.l.b16 %v2323
        %v3172 = vunpack.c.h.b16 %v2323
        %v3173 = vunpack.c.l.b16 %v2324
        %v3174 = vunpack.c.h.b16 %v2324
        %v3175 = vunpack.c.l.b16 %v2325
        %v3176 = vunpack.c.h.b16 %v2325
        %v3177 = vunpack.c.l.b16 %v2326
        %v3178 = vunpack.c.h.b16 %v2326
        %v3179 = vunpack.c.l.b16 %v2327
        %v3180 = vunpack.c.h.b16 %v2327
        %v3181 = vunpack.c.l.b16 %v2328
        %v3182 = vunpack.c.h.b16 %v2328
        %v3183 = vunpack.c.l.b16 %v2329
        %v3184 = vunpack.c.h.b16 %v2329
        %v3185 = vunpack.c.l.b16 %v2330
        %v3186 = vunpack.c.h.b16 %v2330
        %v3187 = vunpack.c.l.b16 %v2331
        %v3188 = vunpack.c.h.b16 %v2331
        %v3189 = vunpack.c.l.b16 %v2332
        %v3190 = vunpack.c.h.b16 %v2332
        %v3191 = vunpack.c.l.b16 %v2333
        %v3192 = vunpack.c.h.b16 %v2333
        %v3193 = vunpack.c.l.b16 %v2334
        %v3194 = vunpack.c.h.b16 %v2334
        %v3195 = vunpack.c.l.b16 %v2335
        %v3196 = vunpack.c.h.b16 %v2335
        %v3197 = vunpack.c.l.b16 %v2336
        %v3198 = vunpack.c.h.b16 %v2336
        %v3199 = vunpack.c.l.b16 %v2337
        %v3200 = vunpack.c.h.b16 %v2337
        %v3201 = vunpack.c.l.b16 %v2338
        %v3202 = vunpack.c.h.b16 %v2338
        %v3203 = vunpack.c.l.b16 %v2339
        %v3204 = vunpack.c.h.b16 %v2339
        %v3205 = vunpack.c.l.b16 %v2340
        %v3206 = vunpack.c.h.b16 %v2340
        %v3207 = vunpack.c.l.b16 %v2341
        %v3208 = vunpack.c.h.b16 %v2341
        %v3209 = vunpack.c.l.b16 %v2342
        %v3210 = vunpack.c.h.b16 %v2342
        %v3211 = vunpack.c.l.b16 %v2343
        %v3212 = vunpack.c.h.b16 %v2343
        %v3213 = vunpack.c.l.b16 %v2344
        %v3214 = vunpack.c.h.b16 %v2344
        %v3215 = vunpack.c.l.b16 %v2345
        %v3216 = vunpack.c.h.b16 %v2345
        %v3217 = vunpack.c.l.b16 %v2346
        %v3218 = vunpack.c.h.b16 %v2346
        %v3219 = vunpack.c.l.b16 %v2347
        %v3220 = vunpack.c.h.b16 %v2347
        %v3221 = vunpack.c.l.b16 %v2348
        %v3222 = vunpack.c.h.b16 %v2348
        %v3223 = vunpack.c.l.b16 %v2349
        %v3224 = vunpack.c.h.b16 %v2349
        %v3225 = vunpack.c.l.b16 %v2350
        %v3226 = vunpack.c.h.b16 %v2350
        %v3227 = vunpack.c.l.b16 %v2351
        %v3228 = vunpack.c.h.b16 %v2351
        %v3229 = vunpack.c.l.b16 %v2352
        %v3230 = vunpack.c.h.b16 %v2352
        %v3231 = vunpack.c.l.b16 %v2353
        %v3232 = vunpack.c.h.b16 %v2353
        %v3233 = vunpack.c.l.b16 %v2354
        %v3234 = vunpack.c.h.b16 %v2354
        %v3235 = vunpack.c.l.b16 %v2355
        %v3236 = vunpack.c.h.b16 %v2355
        %v3237 = vunpack.c.l.b16 %v2356
        %v3238 = vunpack.c.h.b16 %v2356
        %v3239 = vunpack.c.l.b16 %v2357
        %v3240 = vunpack.c.h.b16 %v2357
        %v3241 = vunpack.c.l.b16 %v2358
        %v3242 = vunpack.c.h.b16 %v2358
        %v3243 = vunpack.c.l.b16 %v2359
        %v3244 = vunpack.c.h.b16 %v2359
        %v3245 = vunpack.c.l.b16 %v2360
        %v3246 = vunpack.c.h.b16 %v2360
        %v3247 = vunpack.c.l.b16 %v2361
        %v3248 = vunpack.c.h.b16 %v2361
        %v3249 = vunpack.c.l.b16 %v2362
        %v3250 = vunpack.c.h.b16 %v2362
        %v3251 = vunpack.c.l.b16 %v2363
        %v3252 = vunpack.c.h.b16 %v2363
        %v3253 = vunpack.c.l.b16 %v2364
        %v3254 = vunpack.c.h.b16 %v2364
        %v3255 = vunpack.c.l.b16 %v2365
        %v3256 = vunpack.c.h.b16 %v2365
        %v3257 = vunpack.c.l.b16 %v2366
        %v3258 = vunpack.c.h.b16 %v2366
        %v3259 = vunpack.c.l.b16 %v2367
        %v3260 = vunpack.c.h.b16 %v2367
        %v3261 = vunpack.c.l.b16 %v2368
        %v3262 = vunpack.c.h.b16 %v2368
        %v3263 = vunpack.c.l.b16 %v2369
        %v3264 = vunpack.c.h.b16 %v2369
        %v3265 = vunpack.c.l.b16 %v2370
        %v3266 = vunpack.c.h.b16 %v2370
        %v3267 = vunpack.c.l.b16 %v2371
        %v3268 = vunpack.c.h.b16 %v2371
        %v3269 = vunpack.c.l.b16 %v2372
        %v3270 = vunpack.c.h.b16 %v2372
        %v3271 = vunpack.c.l.b16 %v2373
        %v3272 = vunpack.c.h.b16 %v2373
        %v3273 = vunpack.c.l.b16 %v2374
        %v3274 = vunpack.c.h.b16 %v2374
        %v3275 = vunpack.c.l.b16 %v2375
        %v3276 = vunpack.c.h.b16 %v2375
        %v3277 = vunpack.c.l.b16 %v2376
        %v3278 = vunpack.c.h.b16 %v2376
        %v3279 = vunpack.c.l.b16 %v2377
        %v3280 = vunpack.c.h.b16 %v2377
        %v3281 = vunpack.c.l.b16 %v2378
        %v3282 = vunpack.c.h.b16 %v2378
        %v3283 = vunpack.c.l.b16 %v2379
        %v3284 = vunpack.c.h.b16 %v2379
        %v3285 = vunpack.c.l.b16 %v2380
        %v3286 = vunpack.c.h.b16 %v2380
        %v3287 = vunpack.c.l.b16 %v2381
        %v3288 = vunpack.c.h.b16 %v2381
        %v3289 = vunpack.c.l.b16 %v2382
        %v3290 = vunpack.c.h.b16 %v2382
        %v3291 = vunpack.c.l.b16 %v2383
        %v3292 = vunpack.c.h.b16 %v2383
        %v3293 = vunpack.c.l.b16 %v2384
        %v3294 = vunpack.c.h.b16 %v2384
        %v3295 = vunpack.c.l.b16 %v2385
        %v3296 = vunpack.c.h.b16 %v2385
        %v3297 = vunpack.c.l.b16 %v2386
        %v3298 = vunpack.c.h.b16 %v2386
        %v3299 = vunpack.c.l.b16 %v2387
        %v3300 = vunpack.c.h.b16 %v2387
        %v3301 = vunpack.c.l.b16 %v2388
        %v3302 = vunpack.c.h.b16 %v2388
        %v3303 = vunpack.c.l.b16 %v2389
        %v3304 = vunpack.c.h.b16 %v2389
        %v3305 = vunpack.c.l.b16 %v2390
        %v3306 = vunpack.c.h.b16 %v2390
        %v3307 = vunpack.c.l.b16 %v2391
        %v3308 = vunpack.c.h.b16 %v2391
        %v3309 = vunpack.c.l.b16 %v2392
        %v3310 = vunpack.c.h.b16 %v2392
        %v3311 = vunpack.c.l.b16 %v2393
        %v3312 = vunpack.c.h.b16 %v2393
        %v3313 = vunpack.c.l.b16 %v2394
        %v3314 = vunpack.c.h.b16 %v2394
        %v3315 = vunpack.c.l.b16 %v2395
        %v3316 = vunpack.c.h.b16 %v2395
        %v3317 = vunpack.c.l.b16 %v2396
        %v3318 = vunpack.c.h.b16 %v2396
        %v3319 = vunpack.c.l.b16 %v2397
        %v3320 = vunpack.c.h.b16 %v2397
        %v3321 = vunpack.c.l.b16 %v2398
        %v3322 = vunpack.c.h.b16 %v2398
        %v3323 = vunpack.c.l.b16 %v2399
        %v3324 = vunpack.c.h.b16 %v2399
        %v3325 = vunpack.c.l.b16 %v2400
        %v3326 = vunpack.c.h.b16 %v2400
        %v3327 = vunpack.c.l.b16 %v2401
        %v3328 = vunpack.c.h.b16 %v2401
        %v3329 = vunpack.c.l.b16 %v2402
        %v3330 = vunpack.c.h.b16 %v2402
        %v3331 = vunpack.c.l.b16 %v2403
        %v3332 = vunpack.c.h.b16 %v2403
        %v3333 = vunpack.c.l.b16 %v2404
        %v3334 = vunpack.c.h.b16 %v2404
        %v3335 = vunpack.c.l.b16 %v2405
        %v3336 = vunpack.c.h.b16 %v2405
        %v3337 = vunpack.c.l.b16 %v2406
        %v3338 = vunpack.c.h.b16 %v2406
        %v3339 = vunpack.c.l.b16 %v2407
        %v3340 = vunpack.c.h.b16 %v2407
        %v3341 = vunpack.c.l.b16 %v2408
        %v3342 = vunpack.c.h.b16 %v2408
        %v3343 = vunpack.c.l.b16 %v2409
        %v3344 = vunpack.c.h.b16 %v2409
        %v3345 = vunpack.c.l.b16 %v2410
        %v3346 = vunpack.c.h.b16 %v2410
        %v3347 = vunpack.c.l.b16 %v2411
        %v3348 = vunpack.c.h.b16 %v2411
        %v3349 = vunpack.c.l.b16 %v2412
        %v3350 = vunpack.c.h.b16 %v2412
        %v3351 = vunpack.c.l.b16 %v2413
        %v3352 = vunpack.c.h.b16 %v2413
        %v3353 = vunpack.c.l.b16 %v2414
        %v3354 = vunpack.c.h.b16 %v2414
        %v3355 = vunpack.c.l.b16 %v2415
        %v3356 = vunpack.c.h.b16 %v2415
        %v3357 = vunpack.c.l.b16 %v2416
        %v3358 = vunpack.c.h.b16 %v2416
        %v3359 = vunpack.c.l.b16 %v2417
        %v3360 = vunpack.c.h.b16 %v2417
        %v3361 = vunpack.c.l.b16 %v2418
        %v3362 = vunpack.c.h.b16 %v2418
        %v3363 = vunpack.c.l.b16 %v2419
        %v3364 = vunpack.c.h.b16 %v2419
        %v3365 = vunpack.c.l.b16 %v2420
        %v3366 = vunpack.c.h.b16 %v2420
        %v3367 = vunpack.c.l.b16 %v2421
        %v3368 = vunpack.c.h.b16 %v2421
        %v3369 = vunpack.c.l.b16 %v2422
        %v3370 = vunpack.c.h.b16 %v2422
        %v3371 = vunpack.c.l.b16 %v2423
        %v3372 = vunpack.c.h.b16 %v2423
        %v3373 = vunpack.c.l.b16 %v2424
        %v3374 = vunpack.c.h.b16 %v2424
        %v3375 = vunpack.c.l.b16 %v2425
        %v3376 = vunpack.c.h.b16 %v2425
        %v3377 = vunpack.c.l.b16 %v2426
        %v3378 = vunpack.c.h.b16 %v2426
        %v3379 = vunpack.c.l.b16 %v2427
        %v3380 = vunpack.c.h.b16 %v2427
        %v3381 = vunpack.c.l.b16 %v2428
        %v3382 = vunpack.c.h.b16 %v2428
        %v3383 = vunpack.c.l.b16 %v2429
        %v3384 = vunpack.c.h.b16 %v2429
        %v3385 = vunpack.c.l.b16 %v2430
        %v3386 = vunpack.c.h.b16 %v2430
        %v3387 = vunpack.c.l.b16 %v2431
        %v3388 = vunpack.c.h.b16 %v2431
        %v3389 = vunpack.c.l.b16 %v2432
        %v3390 = vunpack.c.h.b16 %v2432
        %v3391 = vunpack.c.l.b16 %v2433
        %v3392 = vunpack.c.h.b16 %v2433
        %v3393 = vunpack.c.l.b16 %v2434
        %v3394 = vunpack.c.h.b16 %v2434
        %v3395 = vunpack.c.l.b16 %v2435
        %v3396 = vunpack.c.h.b16 %v2435
        %v3397 = vunpack.c.l.b16 %v2436
        %v3398 = vunpack.c.h.b16 %v2436
        %v3399 = vunpack.c.l.b16 %v2437
        %v3400 = vunpack.c.h.b16 %v2437
        %v3401 = vunpack.c.l.b16 %v2438
        %v3402 = vunpack.c.h.b16 %v2438
        %v3403 = vunpack.c.l.b16 %v2439
        %v3404 = vunpack.c.h.b16 %v2439
        %v3405 = vunpack.c.l.b16 %v2440
        %v3406 = vunpack.c.h.b16 %v2440
        %v3407 = vunpack.c.l.b16 %v2441
        %v3408 = vunpack.c.h.b16 %v2441
        %v3409 = vunpack.c.l.b16 %v2442
        %v3410 = vunpack.c.h.b16 %v2442
        %v3411 = vunpack.c.l.b16 %v2443
        %v3412 = vunpack.c.h.b16 %v2443
        %v3413 = vunpack.c.l.b16 %v2444
        %v3414 = vunpack.c.h.b16 %v2444
        %v3415 = vunpack.c.l.b16 %v2445
        %v3416 = vunpack.c.h.b16 %v2445
        %v3417 = vunpack.c.l.b16 %v2446
        %v3418 = vunpack.c.h.b16 %v2446
        %v3419 = vunpack.c.l.b16 %v2447
        %v3420 = vunpack.c.h.b16 %v2447
        %v3421 = vunpack.c.l.b16 %v2448
        %v3422 = vunpack.c.h.b16 %v2448
        %v3423 = vunpack.c.l.b16 %v2449
        %v3424 = vunpack.c.h.b16 %v2449
        %v3425 = vunpack.c.l.b16 %v2450
        %v3426 = vunpack.c.h.b16 %v2450
        %v3427 = vunpack.c.l.b16 %v2451
        %v3428 = vunpack.c.h.b16 %v2451
        %v3429 = vunpack.c.l.b16 %v2452
        %v3430 = vunpack.c.h.b16 %v2452
        %v3431 = vunpack.c.l.b16 %v2453
        %v3432 = vunpack.c.h.b16 %v2453
        %v3433 = vunpack.c.l.b16 %v2454
        %v3434 = vunpack.c.h.b16 %v2454
        %v3435 = vunpack.c.l.b16 %v2455
        %v3436 = vunpack.c.h.b16 %v2455
        %v3437 = vunpack.c.l.b16 %v2456
        %v3438 = vunpack.c.h.b16 %v2456
        %v3439 = vunpack.c.l.b16 %v2457
        %v3440 = vunpack.c.h.b16 %v2457
        %v3441 = vunpack.c.l.b16 %v2458
        %v3442 = vunpack.c.h.b16 %v2458
        %v3443 = vunpack.c.l.b16 %v2459
        %v3444 = vunpack.c.h.b16 %v2459
        %v3445 = vunpack.c.l.b16 %v2460
        %v3446 = vunpack.c.h.b16 %v2460
        %v3447 = vunpack.c.l.b16 %v2461
        %v3448 = vunpack.c.h.b16 %v2461
        %v3449 = vunpack.c.l.b16 %v2462
        %v3450 = vunpack.c.h.b16 %v2462
        %v3451 = vunpack.c.l.b16 %v2463
        %v3452 = vunpack.c.h.b16 %v2463
        %v3453 = vunpack.c.l.b16 %v2464
        %v3454 = vunpack.c.h.b16 %v2464
        %v3455 = vunpack.c.l.b16 %v2465
        %v3456 = vunpack.c.h.b16 %v2465
        %v3457 = vunpack.c.l.b16 %v2466
        %v3458 = vunpack.c.h.b16 %v2466
        %v3459 = vunpack.c.l.b16 %v2467
        %v3460 = vunpack.c.h.b16 %v2467
        %v3461 = vunpack.c.l.b16 %v2468
        %v3462 = vunpack.c.h.b16 %v2468
        %v3463 = vunpack.c.l.b16 %v2469
        %v3464 = vunpack.c.h.b16 %v2469
        %v3465 = vunpack.c.l.b16 %v2470
        %v3466 = vunpack.c.h.b16 %v2470
        %v3467 = vunpack.c.l.b16 %v2471
        %v3468 = vunpack.c.h.b16 %v2471
        %v3469 = vunpack.c.l.b16 %v2472
        %v3470 = vunpack.c.h.b16 %v2472
        %v3471 = vunpack.c.l.b16 %v2473
        %v3472 = vunpack.c.h.b16 %v2473
        %v3473 = vunpack.c.l.b16 %v2474
        %v3474 = vunpack.c.h.b16 %v2474
        %v3475 = vunpack.c.l.b16 %v2475
        %v3476 = vunpack.c.h.b16 %v2475
        %v3477 = vunpack.c.l.b16 %v2476
        %v3478 = vunpack.c.h.b16 %v2476
        %v3479 = vunpack.c.l.b16 %v2477
        %v3480 = vunpack.c.h.b16 %v2477
        %v3481 = vunpack.c.l.b16 %v2478
        %v3482 = vunpack.c.h.b16 %v2478
        %v3483 = vunpack.c.l.b16 %v2479
        %v3484 = vunpack.c.h.b16 %v2479
        %v3485 = vunpack.c.l.b16 %v2480
        %v3486 = vunpack.c.h.b16 %v2480
        %v3487 = vunpack.c.l.b16 %v2481
        %v3488 = vunpack.c.h.b16 %v2481
        %v3489 = vunpack.c.l.b16 %v2482
        %v3490 = vunpack.c.h.b16 %v2482
        %v3491 = vunpack.c.l.b16 %v2483
        %v3492 = vunpack.c.h.b16 %v2483
        %v3493 = vunpack.c.l.b16 %v2484
        %v3494 = vunpack.c.h.b16 %v2484
        %v3495 = vunpack.c.l.b16 %v2485
        %v3496 = vunpack.c.h.b16 %v2485
        %v3497 = vunpack.c.l.b16 %v2486
        %v3498 = vunpack.c.h.b16 %v2486
        %v3499 = vunpack.c.l.b16 %v2487
        %v3500 = vunpack.c.h.b16 %v2487
        %v3501 = vunpack.c.l.b16 %v2488
        %v3502 = vunpack.c.h.b16 %v2488
        %v3503 = vunpack.c.l.b16 %v2489
        %v3504 = vunpack.c.h.b16 %v2489
        %v3505 = vunpack.c.l.b16 %v2490
        %v3506 = vunpack.c.h.b16 %v2490
        %v3507 = vunpack.c.l.b16 %v2491
        %v3508 = vunpack.c.h.b16 %v2491
        %v3509 = vunpack.c.l.b16 %v2492
        %v3510 = vunpack.c.h.b16 %v2492
        %v3511 = vunpack.c.l.b16 %v2493
        %v3512 = vunpack.c.h.b16 %v2493
        %v3513 = vunpack.c.l.b16 %v2494
        %v3514 = vunpack.c.h.b16 %v2494
        %v3515 = vunpack.c.l.b16 %v2495
        %v3516 = vunpack.c.h.b16 %v2495
        %v3517 = vunpack.c.l.b16 %v2496
        %v3518 = vunpack.c.h.b16 %v2496
        %v3519 = vunpack.c.l.b16 %v2497
        %v3520 = vunpack.c.h.b16 %v2497
        %v3521 = vunpack.c.l.b16 %v2498
        %v3522 = vunpack.c.h.b16 %v2498
        %v3523 = vunpack.c.l.b16 %v2499
        %v3524 = vunpack.c.h.b16 %v2499
        %v3525 = vunpack.c.l.b16 %v2500
        %v3526 = vunpack.c.h.b16 %v2500
        %v3527 = vunpack.c.l.b16 %v2501
        %v3528 = vunpack.c.h.b16 %v2501
        %v3529 = vunpack.c.l.b16 %v2502
        %v3530 = vunpack.c.h.b16 %v2502
        %v3531 = vunpack.c.l.b16 %v2503
        %v3532 = vunpack.c.h.b16 %v2503
        %v3533 = vunpack.c.l.b16 %v2504
        %v3534 = vunpack.c.h.b16 %v2504
        %v3535 = vunpack.c.l.b16 %v2505
        %v3536 = vunpack.c.h.b16 %v2505
        %v3537 = vunpack.c.l.b16 %v2506
        %v3538 = vunpack.c.h.b16 %v2506
        %v3539 = vunpack.c.l.b16 %v2507
        %v3540 = vunpack.c.h.b16 %v2507
        %v3541 = vunpack.c.l.b16 %v2508
        %v3542 = vunpack.c.h.b16 %v2508
        %v3543 = vunpack.c.l.b16 %v2509
        %v3544 = vunpack.c.h.b16 %v2509
        %v3545 = vunpack.c.l.b16 %v2510
        %v3546 = vunpack.c.h.b16 %v2510
        %v3547 = vunpack.c.l.b16 %v2511
        %v3548 = vunpack.c.h.b16 %v2511
        %v3549 = vunpack.c.l.b16 %v2512
        %v3550 = vunpack.c.h.b16 %v2512
        %v3551 = vunpack.c.l.b16 %v2513
        %v3552 = vunpack.c.h.b16 %v2513
        %v3553 = vunpack.c.l.b16 %v2514
        %v3554 = vunpack.c.h.b16 %v2514
        %v3555 = vunpack.c.l.b16 %v2515
        %v3556 = vunpack.c.h.b16 %v2515
        %v3557 = vunpack.c.l.b16 %v2516
        %v3558 = vunpack.c.h.b16 %v2516
        %v3559 = vunpack.c.l.b16 %v2517
        %v3560 = vunpack.c.h.b16 %v2517
        %v3561 = vunpack.c.l.b16 %v2518
        %v3562 = vunpack.c.h.b16 %v2518
        %v3563 = vunpack.c.l.b16 %v2519
        %v3564 = vunpack.c.h.b16 %v2519
        %v3565 = vunpack.c.l.b16 %v2520
        %v3566 = vunpack.c.h.b16 %v2520
        %v3567 = vunpack.c.l.b16 %v2521
        %v3568 = vunpack.c.h.b16 %v2521
        %v3569 = vunpack.c.l.b16 %v2522
        %v3570 = vunpack.c.h.b16 %v2522
        %v3571 = vunpack.c.l.b16 %v2523
        %v3572 = vunpack.c.h.b16 %v2523
        %v3573 = vunpack.c.l.b16 %v2524
        %v3574 = vunpack.c.h.b16 %v2524
        %v3575 = vunpack.c.l.b16 %v2525
        %v3576 = vunpack.c.h.b16 %v2525
        %v3577 = vunpack.c.l.b16 %v2526
        %v3578 = vunpack.c.h.b16 %v2526
        %v3579 = vunpack.c.l.b16 %v2527
        %v3580 = vunpack.c.h.b16 %v2527
        %v3581 = vunpack.c.l.b16 %v2528
        %v3582 = vunpack.c.h.b16 %v2528
        %v3583 = vunpack.c.l.b16 %v2529
        %v3584 = vunpack.c.h.b16 %v2529
        %v3585 = vunpack.c.l.b16 %v2530
        %v3586 = vunpack.c.h.b16 %v2530
        %v3587 = vunpack.c.l.b16 %v2531
        %v3588 = vunpack.c.h.b16 %v2531
        %v3589 = vunpack.c.l.b16 %v2532
        %v3590 = vunpack.c.h.b16 %v2532
        %v3591 = vunpack.c.l.b16 %v2533
        %v3592 = vunpack.c.h.b16 %v2533
        %v3593 = vunpack.c.l.b16 %v2534
        %v3594 = vunpack.c.h.b16 %v2534
        %v3595 = vunpack.c.l.b16 %v2535
        %v3596 = vunpack.c.h.b16 %v2535
        %v3597 = vunpack.c.l.b16 %v2536
        %v3598 = vunpack.c.h.b16 %v2536
        %v3599 = vunpack.c.l.b16 %v2537
        %v3600 = vunpack.c.h.b16 %v2537
        %v3601 = vunpack.c.l.b16 %v2538
        %v3602 = vunpack.c.h.b16 %v2538
        %v3603 = vunpack.c.l.b16 %v2539
        %v3604 = vunpack.c.h.b16 %v2539
        %v3605 = vunpack.c.l.b16 %v2540
        %v3606 = vunpack.c.h.b16 %v2540
        %v3607 = vunpack.c.l.b16 %v2541
        %v3608 = vunpack.c.h.b16 %v2541
        %v3609 = vunpack.c.l.b16 %v2542
        %v3610 = vunpack.c.h.b16 %v2542
        %v3611 = vunpack.c.l.b16 %v2543
        %v3612 = vunpack.c.h.b16 %v2543
        %v3613 = vunpack.c.l.b16 %v2544
        %v3614 = vunpack.c.h.b16 %v2544
        %v3615 = vunpack.c.l.b16 %v2545
        %v3616 = vunpack.c.h.b16 %v2545
        %v3617 = vunpack.c.l.b16 %v2546
        %v3618 = vunpack.c.h.b16 %v2546
        %v3619 = vunpack.c.l.b16 %v2547
        %v3620 = vunpack.c.h.b16 %v2547
        %v3621 = vunpack.c.l.b16 %v2548
        %v3622 = vunpack.c.h.b16 %v2548
        %v3623 = vunpack.c.l.b16 %v2549
        %v3624 = vunpack.c.h.b16 %v2549
        %v3625 = vunpack.c.l.b16 %v2550
        %v3626 = vunpack.c.h.b16 %v2550
        %v3627 = vunpack.c.l.b16 %v2551
        %v3628 = vunpack.c.h.b16 %v2551
        %v3629 = vunpack.c.l.b16 %v2552
        %v3630 = vunpack.c.h.b16 %v2552
        %v3631 = vunpack.c.l.b16 %v2553
        %v3632 = vunpack.c.h.b16 %v2553
        %v3633 = vunpack.c.l.b16 %v2554
        %v3634 = vunpack.c.h.b16 %v2554
        %v3635 = vunpack.c.l.b16 %v2555
        %v3636 = vunpack.c.h.b16 %v2555
        %v3637 = vunpack.c.l.b16 %v2556
        %v3638 = vunpack.c.h.b16 %v2556
        %v3639 = vunpack.c.l.b16 %v2557
        %v3640 = vunpack.c.h.b16 %v2557
        %v3641 = vunpack.c.l.b16 %v2558
        %v3642 = vunpack.c.h.b16 %v2558
        %v3643 = vunpack.c.l.b16 %v2559
        %v3644 = vunpack.c.h.b16 %v2559
        %v3645 = vunpack.c.l.b16 %v2560
        %v3646 = vunpack.c.h.b16 %v2560
        %v3647 = vunpack.c.l.b16 %v2561
        %v3648 = vunpack.c.h.b16 %v2561
        %v3649 = vunpack.c.l.b16 %v2562
        %v3650 = vunpack.c.h.b16 %v2562
        %v3651 = vunpack.c.l.b16 %v2563
        %v3652 = vunpack.c.h.b16 %v2563
        %v3653 = vunpack.c.l.b16 %v2564
        %v3654 = vunpack.c.h.b16 %v2564
        %v3655 = vunpack.c.l.b16 %v2565
        %v3656 = vunpack.c.h.b16 %v2565
        %v3657 = vunpack.c.l.b16 %v2566
        %v3658 = vunpack.c.h.b16 %v2566
        %v3659 = vunpack.c.l.b16 %v2567
        %v3660 = vunpack.c.h.b16 %v2567
        %v3661 = vunpack.c.l.b16 %v2568
        %v3662 = vunpack.c.h.b16 %v2568
        %v3663 = vunpack.c.l.b16 %v2569
        %v3664 = vunpack.c.h.b16 %v2569
        %v3665 = vunpack.c.l.b16 %v2570
        %v3666 = vunpack.c.h.b16 %v2570
        %v3667 = vunpack.c.l.b16 %v2571
        %v3668 = vunpack.c.h.b16 %v2571
        %v3669 = vunpack.c.l.b16 %v2572
        %v3670 = vunpack.c.h.b16 %v2572
        %v3671 = vunpack.c.l.b16 %v2573
        %v3672 = vunpack.c.h.b16 %v2573
        %v3673 = vunpack.c.l.b16 %v2574
        %v3674 = vunpack.c.h.b16 %v2574
        %v3675 = vunpack.c.l.b16 %v2575
        %v3676 = vunpack.c.h.b16 %v2575
        %v3677 = vunpack.c.l.b16 %v2576
        %v3678 = vunpack.c.h.b16 %v2576
        %v3679 = vunpack.c.l.b16 %v2577
        %v3680 = vunpack.c.h.b16 %v2577
        %v3681 = vunpack.c.l.b16 %v2578
        %v3682 = vunpack.c.h.b16 %v2578
        %v3683 = vunpack.c.l.b16 %v2579
        %v3684 = vunpack.c.h.b16 %v2579
        %v3685 = vunpack.c.l.b16 %v2580
        %v3686 = vunpack.c.h.b16 %v2580
        %v3687 = vunpack.c.l.b16 %v2581
        %v3688 = vunpack.c.h.b16 %v2581
        %v3689 = vunpack.c.l.b16 %v2582
        %v3690 = vunpack.c.h.b16 %v2582
        %v3691 = vunpack.c.l.b16 %v2583
        %v3692 = vunpack.c.h.b16 %v2583
        %v3693 = vunpack.c.l.b16 %v2584
        %v3694 = vunpack.c.h.b16 %v2584
        %v3695 = vunpack.c.l.b16 %v2585
        %v3696 = vunpack.c.h.b16 %v2585
        %v3697 = vunpack.c.l.b16 %v2586
        %v3698 = vunpack.c.h.b16 %v2586
        %v3699 = vunpack.c.l.b16 %v2587
        %v3700 = vunpack.c.h.b16 %v2587
        %v3701 = vunpack.c.l.b16 %v2588
        %v3702 = vunpack.c.h.b16 %v2588
        %v3703 = vunpack.c.l.b16 %v2589
        %v3704 = vunpack.c.h.b16 %v2589
        %v3705 = vunpack.c.l.b16 %v2590
        %v3706 = vunpack.c.h.b16 %v2590
        %v3707 = vunpack.c.l.b16 %v2591
        %v3708 = vunpack.c.h.b16 %v2591
        %v3709 = vunpack.c.l.b16 %v2592
        %v3710 = vunpack.c.h.b16 %v2592
        %v3711 = vunpack.c.l.b16 %v2593
        %v3712 = vunpack.c.h.b16 %v2593
        %v3713 = vunpack.c.l.b16 %v2594
        %v3714 = vunpack.c.h.b16 %v2594
        %v3715 = vunpack.c.l.b16 %v2595
        %v3716 = vunpack.c.h.b16 %v2595
        %v3717 = vunpack.c.l.b16 %v2596
        %v3718 = vunpack.c.h.b16 %v2596
        %v3719 = vunpack.c.l.b16 %v2597
        %v3720 = vunpack.c.h.b16 %v2597
        %v3721 = vunpack.c.l.b16 %v2598
        %v3722 = vunpack.c.h.b16 %v2598
        %v3723 = vunpack.c.l.b16 %v2599
        %v3724 = vunpack.c.h.b16 %v2599
        %v3725 = vunpack.c.l.b16 %v2600
        %v3726 = vunpack.c.h.b16 %v2600
        %v3727 = vunpack.c.l.b16 %v2601
        %v3728 = vunpack.c.h.b16 %v2601
        %v3729 = vunpack.c.l.b16 %v2602
        %v3730 = vunpack.c.h.b16 %v2602
        %v3731 = vunpack.c.l.b16 %v2603
        %v3732 = vunpack.c.h.b16 %v2603
        %v3733 = vunpack.c.l.b16 %v2604
        %v3734 = vunpack.c.h.b16 %v2604
        %v3735 = vunpack.c.l.b16 %v2605
        %v3736 = vunpack.c.h.b16 %v2605
        %v3737 = vunpack.c.l.b16 %v2606
        %v3738 = vunpack.c.h.b16 %v2606
        %v3739 = vunpack.c.l.b16 %v2607
        %v3740 = vunpack.c.h.b16 %v2607
        %v3741 = vunpack.c.l.b16 %v2608
        %v3742 = vunpack.c.h.b16 %v2608
        %v3743 = vunpack.c.l.b16 %v2609
        %v3744 = vunpack.c.h.b16 %v2609
        %v3745 = vunpack.c.l.b16 %v2610
        %v3746 = vunpack.c.h.b16 %v2610
        %v3747 = vunpack.c.l.b16 %v2611
        %v3748 = vunpack.c.h.b16 %v2611
        %v3749 = vunpack.c.l.b16 %v2612
        %v3750 = vunpack.c.h.b16 %v2612
        %v3751 = vunpack.c.l.b16 %v2613
        %v3752 = vunpack.c.h.b16 %v2613
        %v3753 = vunpack.c.l.b16 %v2614
        %v3754 = vunpack.c.h.b16 %v2614
        %v3755 = vunpack.c.l.b16 %v2615
        %v3756 = vunpack.c.h.b16 %v2615
        %v3757 = vunpack.c.l.b16 %v2616
        %v3758 = vunpack.c.h.b16 %v2616
        %v3759 = vunpack.c.l.b16 %v2617
        %v3760 = vunpack.c.h.b16 %v2617
        %v3761 = vunpack.c.l.b16 %v2618
        %v3762 = vunpack.c.h.b16 %v2618
        %v3763 = vunpack.c.l.b16 %v2619
        %v3764 = vunpack.c.h.b16 %v2619
        %v3765 = vunpack.c.l.b16 %v2620
        %v3766 = vunpack.c.h.b16 %v2620
        %v3767 = vunpack.c.l.b16 %v2621
        %v3768 = vunpack.c.h.b16 %v2621
        %v3769 = vunpack.c.l.b16 %v2622
        %v3770 = vunpack.c.h.b16 %v2622
        %v3771 = vunpack.c.l.b16 %v2623
        %v3772 = vunpack.c.h.b16 %v2623
        %v3773 = vunpack.c.l.b16 %v2624
        %v3774 = vunpack.c.h.b16 %v2624
        %v3775 = vunpack.c.l.b16 %v2625
        %v3776 = vunpack.c.h.b16 %v2625
        %v3777 = vunpack.c.l.b16 %v2626
        %v3778 = vunpack.c.h.b16 %v2626
        %v3779 = vunpack.c.l.b16 %v2627
        %v3780 = vunpack.c.h.b16 %v2627
        %v3781 = vunpack.c.l.b16 %v2628
        %v3782 = vunpack.c.h.b16 %v2628
        %v3783 = vunpack.c.l.b16 %v2629
        %v3784 = vunpack.c.h.b16 %v2629
        %v3785 = vunpack.c.l.b16 %v2630
        %v3786 = vunpack.c.h.b16 %v2630
        %v3787 = vunpack.c.l.b16 %v2631
        %v3788 = vunpack.c.h.b16 %v2631
        %v3789 = vunpack.c.l.b16 %v2632
        %v3790 = vunpack.c.h.b16 %v2632
        %v3791 = vunpack.c.l.b16 %v2633
        %v3792 = vunpack.c.h.b16 %v2633
        %v3793 = vunpack.c.l.b16 %v2634
        %v3794 = vunpack.c.h.b16 %v2634
        %v3795 = vunpack.c.l.b16 %v2635
        %v3796 = vunpack.c.h.b16 %v2635
        %v3797 = vunpack.c.l.b16 %v2636
        %v3798 = vunpack.c.h.b16 %v2636
        %v3799 = vunpack.c.l.b16 %v2637
        %v3800 = vunpack.c.h.b16 %v2637
        %v3801 = vunpack.c.l.b16 %v2638
        %v3802 = vunpack.c.h.b16 %v2638
        %v3803 = vunpack.c.l.b16 %v2639
        %v3804 = vunpack.c.h.b16 %v2639
        %v3805 = vunpack.c.l.b16 %v2640
        %v3806 = vunpack.c.h.b16 %v2640
        %v3807 = vunpack.c.l.b16 %v2641
        %v3808 = vunpack.c.h.b16 %v2641
        %v3809 = vunpack.c.l.b16 %v2642
        %v3810 = vunpack.c.h.b16 %v2642
        %v3811 = vunpack.c.l.b16 %v2643
        %v3812 = vunpack.c.h.b16 %v2643
        %v3813 = vunpack.c.l.b16 %v2644
        %v3814 = vunpack.c.h.b16 %v2644
        %v3815 = vunpack.c.l.b16 %v2645
        %v3816 = vunpack.c.h.b16 %v2645
        %v3817 = vunpack.c.l.b16 %v2646
        %v3818 = vunpack.c.h.b16 %v2646
        %v3819 = vunpack.c.l.b16 %v2647
        %v3820 = vunpack.c.h.b16 %v2647
        %v3821 = vunpack.c.l.b16 %v2648
        %v3822 = vunpack.c.h.b16 %v2648
        %v3823 = vunpack.c.l.b16 %v2649
        %v3824 = vunpack.c.h.b16 %v2649
        %v3825 = vunpack.c.l.b16 %v2650
        %v3826 = vunpack.c.h.b16 %v2650
        %v3827 = vunpack.c.l.b16 %v2651
        %v3828 = vunpack.c.h.b16 %v2651
        %v3829 = vunpack.c.l.b16 %v2652
        %v3830 = vunpack.c.h.b16 %v2652
        %v3831 = vunpack.c.l.b16 %v2653
        %v3832 = vunpack.c.h.b16 %v2653
        %v3833 = vunpack.c.l.b16 %v2654
        %v3834 = vunpack.c.h.b16 %v2654
        %v3835 = vunpack.c.l.b16 %v2655
        %v3836 = vunpack.c.h.b16 %v2655
        %v3837 = vunpack.c.l.b16 %v2656
        %v3838 = vunpack.c.h.b16 %v2656
        %v3839 = vunpack.c.l.b16 %v2657
        %v3840 = vunpack.c.h.b16 %v2657
        %v3841 = vunpack.c.l.b16 %v2658
        %v3842 = vunpack.c.h.b16 %v2658
        %v3843 = vpack.c.b16 %v3081, %v3075
        %v3844 = vpack.c.b16 %v3082, %v3076
        %v3845 = vpack.c.b16 %v3083, %v3077
        %v3846 = vpack.c.b16 %v3084, %v3078
        %v3847 = vpack.c.b16 %v3085, %v3079
        %v3848 = vpack.c.b16 %v3086, %v3080
        %v3849 = vpack.c.b16 %v3093, %v3087
        %v3850 = vpack.c.b16 %v3094, %v3088
        %v3851 = vpack.c.b16 %v3095, %v3089
        %v3852 = vpack.c.b16 %v3096, %v3090
        %v3853 = vpack.c.b16 %v3097, %v3091
        %v3854 = vpack.c.b16 %v3098, %v3092
        %v3855 = vpack.c.b16 %v3105, %v3099
        %v3856 = vpack.c.b16 %v3106, %v3100
        %v3857 = vpack.c.b16 %v3107, %v3101
        %v3858 = vpack.c.b16 %v3108, %v3102
        %v3859 = vpack.c.b16 %v3109, %v3103
        %v3860 = vpack.c.b16 %v3110, %v3104
        %v3861 = vpack.c.b16 %v3117, %v3111
        %v3862 = vpack.c.b16 %v3118, %v3112
        %v3863 = vpack.c.b16 %v3119, %v3113
        %v3864 = vpack.c.b16 %v3120, %v3114
        %v3865 = vpack.c.b16 %v3121, %v3115
        %v3866 = vpack.c.b16 %v3122, %v3116
        %v3867 = vpack.c.b16 %v3129, %v3123
        %v3868 = vpack.c.b16 %v3130, %v3124
        %v3869 = vpack.c.b16 %v3131, %v3125
        %v3870 = vpack.c.b16 %v3132, %v3126
        %v3871 = vpack.c.b16 %v3133, %v3127
        %v3872 = vpack.c.b16 %v3134, %v3128
        %v3873 = vpack.c.b16 %v3141, %v3135
        %v3874 = vpack.c.b16 %v3142, %v3136
        %v3875 = vpack.c.b16 %v3143, %v3137
        %v3876 = vpack.c.b16 %v3144, %v3138
        %v3877 = vpack.c.b16 %v3145, %v3139
        %v3878 = vpack.c.b16 %v3146, %v3140
        %v3879 = vpack.c.b16 %v3153, %v3147
        %v3880 = vpack.c.b16 %v3154, %v3148
        %v3881 = vpack.c.b16 %v3155, %v3149
        %v3882 = vpack.c.b16 %v3156, %v3150
        %v3883 = vpack.c.b16 %v3157, %v3151
        %v3884 = vpack.c.b16 %v3158, %v3152
        %v3885 = vpack.c.b16 %v3165, %v3159
        %v3886 = vpack.c.b16 %v3166, %v3160
        %v3887 = vpack.c.b16 %v3167, %v3161
        %v3888 = vpack.c.b16 %v3168, %v3162
        %v3889 = vpack.c.b16 %v3169, %v3163
        %v3890 = vpack.c.b16 %v3170, %v3164
        %v3891 = vpack.c.b16 %v3177, %v3171
        %v3892 = vpack.c.b16 %v3178, %v3172
        %v3893 = vpack.c.b16 %v3179, %v3173
        %v3894 = vpack.c.b16 %v3180, %v3174
        %v3895 = vpack.c.b16 %v3181, %v3175
        %v3896 = vpack.c.b16 %v3182, %v3176
        %v3897 = vpack.c.b16 %v3189, %v3183
        %v3898 = vpack.c.b16 %v3190, %v3184
        %v3899 = vpack.c.b16 %v3191, %v3185
        %v3900 = vpack.c.b16 %v3192, %v3186
        %v3901 = vpack.c.b16 %v3193, %v3187
        %v3902 = vpack.c.b16 %v3194, %v3188
        %v3903 = vpack.c.b16 %v3201, %v3195
        %v3904 = vpack.c.b16 %v3202, %v3196
        %v3905 = vpack.c.b16 %v3203, %v3197
        %v3906 = vpack.c.b16 %v3204, %v3198
        %v3907 = vpack.c.b16 %v3205, %v3199
        %v3908 = vpack.c.b16 %v3206, %v3200
        %v3909 = vpack.c.b16 %v3213, %v3207
        %v3910 = vpack.c.b16 %v3214, %v3208
        %v3911 = vpack.c.b16 %v3215, %v3209
        %v3912 = vpack.c.b16 %v3216, %v3210
        %v3913 = vpack.c.b16 %v3217, %v3211
        %v3914 = vpack.c.b16 %v3218, %v3212
        %v3915 = vpack.c.b16 %v3225, %v3219
        %v3916 = vpack.c.b16 %v3226, %v3220
        %v3917 = vpack.c.b16 %v3227, %v3221
        %v3918 = vpack.c.b16 %v3228, %v3222
        %v3919 = vpack.c.b16 %v3229, %v3223
        %v3920 = vpack.c.b16 %v3230, %v3224
        %v3921 = vpack.c.b16 %v3237, %v3231
        %v3922 = vpack.c.b16 %v3238, %v3232
        %v3923 = vpack.c.b16 %v3239, %v3233
        %v3924 = vpack.c.b16 %v3240, %v3234
        %v3925 = vpack.c.b16 %v3241, %v3235
        %v3926 = vpack.c.b16 %v3242, %v3236
        %v3927 = vpack.c.b16 %v3249, %v3243
        %v3928 = vpack.c.b16 %v3250, %v3244
        %v3929 = vpack.c.b16 %v3251, %v3245
        %v3930 = vpack.c.b16 %v3252, %v3246
        %v3931 = vpack.c.b16 %v3253, %v3247
        %v3932 = vpack.c.b16 %v3254, %v3248
        %v3933 = vpack.c.b16 %v3261, %v3255
        %v3934 = vpack.c.b16 %v3262, %v3256
        %v3935 = vpack.c.b16 %v3263, %v3257
        %v3936 = vpack.c.b16 %v3264, %v3258
        %v3937 = vpack.c.b16 %v3265, %v3259
        %v3938 = vpack.c.b16 %v3266, %v3260
        %v3939 = vpack.c.b16 %v3273, %v3267
        %v3940 = vpack.c.b16 %v3274, %v3268
        %v3941 = vpack.c.b16 %v3275, %v3269
        %v3942 = vpack.c.b16 %v3276, %v3270
        %v3943 = vpack.c.b16 %v3277, %v3271
        %v3944 = vpack.c.b16 %v3278, %v3272
        %v3945 = vpack.c.b16 %v3285, %v3279
        %v3946 = vpack.c.b16 %v3286, %v3280
        %v3947 = vpack.c.b16 %v3287, %v3281
        %v3948 = vpack.c.b16 %v3288, %v3282
        %v3949 = vpack.c.b16 %v3289, %v3283
        %v3950 = vpack.c.b16 %v3290, %v3284
        %v3951 = vpack.c.b16 %v3297, %v3291
        %v3952 = vpack.c.b16 %v3298, %v3292
        %v3953 = vpack.c.b16 %v3299, %v3293
        %v3954 = vpack.c.b16 %v3300, %v3294
        %v3955 = vpack.c.b16 %v3301, %v3295
        %v3956 = vpack.c.b16 %v3302, %v3296
        %v3957 = vpack.c.b16 %v3309, %v3303
        %v3958 = vpack.c.b16 %v3310, %v3304
        %v3959 = vpack.c.b16 %v3311, %v3305
        %v3960 = vpack.c.b16 %v3312, %v3306
        %v3961 = vpack.c.b16 %v3313, %v3307
        %v3962 = vpack.c.b16 %v3314, %v3308
        %v3963 = vpack.c.b16 %v3321, %v3315
        %v3964 = vpack.c.b16 %v3322, %v3316
        %v3965 = vpack.c.b16 %v3323, %v3317
        %v3966 = vpack.c.b16 %v3324, %v3318
        %v3967 = vpack.c.b16 %v3325, %v3319
        %v3968 = vpack.c.b16 %v3326, %v3320
        %v3969 = vpack.c.b16 %v3333, %v3327
        %v3970 = vpack.c.b16 %v3334, %v3328
        %v3971 = vpack.c.b16 %v3335, %v3329
        %v3972 = vpack.c.b16 %v3336, %v3330
        %v3973 = vpack.c.b16 %v3337, %v3331
        %v3974 = vpack.c.b16 %v3338, %v3332
        %v3975 = vpack.c.b16 %v3345, %v3339
        %v3976 = vpack.c.b16 %v3346, %v3340
        %v3977 = vpack.c.b16 %v3347, %v3341
        %v3978 = vpack.c.b16 %v3348, %v3342
        %v3979 = vpack.c.b16 %v3349, %v3343
        %v3980 = vpack.c.b16 %v3350, %v3344
        %v3981 = vpack.c.b16 %v3357, %v3351
        %v3982 = vpack.c.b16 %v3358, %v3352
        %v3983 = vpack.c.b16 %v3359, %v3353
        %v3984 = vpack.c.b16 %v3360, %v3354
        %v3985 = vpack.c.b16 %v3361, %v3355
        %v3986 = vpack.c.b16 %v3362, %v3356
        %v3987 = vpack.c.b16 %v3369, %v3363
        %v3988 = vpack.c.b16 %v3370, %v3364
        %v3989 = vpack.c.b16 %v3371, %v3365
        %v3990 = vpack.c.b16 %v3372, %v3366
        %v3991 = vpack.c.b16 %v3373, %v3367
        %v3992 = vpack.c.b16 %v3374, %v3368
        %v3993 = vpack.c.b16 %v3381, %v3375
        %v3994 = vpack.c.b16 %v3382, %v3376
        %v3995 = vpack.c.b16 %v3383, %v3377
        %v3996 = vpack.c.b16 %v3384, %v3378
        %v3997 = vpack.c.b16 %v3385, %v3379
        %v3998 = vpack.c.b16 %v3386, %v3380
        %v3999 = vpack.c.b16 %v3393, %v3387
        %v4000 = vpack.c.b16 %v3394, %v3388
        %v4001 = vpack.c.b16 %v3395, %v3389
        %v4002 = vpack.c.b16 %v3396, %v3390
        %v4003 = vpack.c.b16 %v3397, %v3391
        %v4004 = vpack.c.b16 %v3398, %v3392
        %v4005 = vpack.c.b16 %v3405, %v3399
        %v4006 = vpack.c.b16 %v3406, %v3400
        %v4007 = vpack.c.b16 %v3407, %v3401
        %v4008 = vpack.c.b16 %v3408, %v3402
        %v4009 = vpack.c.b16 %v3409, %v3403
        %v4010 = vpack.c.b16 %v3410, %v3404
        %v4011 = vpack.c.b16 %v3417, %v3411
        %v4012 = vpack.c.b16 %v3418, %v3412
        %v4013 = vpack.c.b16 %v3419, %v3413
        %v4014 = vpack.c.b16 %v3420, %v3414
        %v4015 = vpack.c.b16 %v3421, %v3415
        %v4016 = vpack.c.b16 %v3422, %v3416
        %v4017 = vpack.c.b16 %v3429, %v3423
        %v4018 = vpack.c.b16 %v3430, %v3424
        %v4019 = vpack.c.b16 %v3431, %v3425
        %v4020 = vpack.c.b16 %v3432, %v3426
        %v4021 = vpack.c.b16 %v3433, %v3427
        %v4022 = vpack.c.b16 %v3434, %v3428
        %v4023 = vpack.c.b16 %v3441, %v3435
        %v4024 = vpack.c.b16 %v3442, %v3436
        %v4025 = vpack.c.b16 %v3443, %v3437
        %v4026 = vpack.c.b16 %v3444, %v3438
        %v4027 = vpack.c.b16 %v3445, %v3439
        %v4028 = vpack.c.b16 %v3446, %v3440
        %v4029 = vpack.c.b16 %v3453, %v3447
        %v4030 = vpack.c.b16 %v3454, %v3448
        %v4031 = vpack.c.b16 %v3455, %v3449
        %v4032 = vpack.c.b16 %v3456, %v3450
        %v4033 = vpack.c.b16 %v3457, %v3451
        %v4034 = vpack.c.b16 %v3458, %v3452
        %v4035 = vpack.c.b16 %v3465, %v3459
        %v4036 = vpack.c.b16 %v3466, %v3460
        %v4037 = vpack.c.b16 %v3467, %v3461
        %v4038 = vpack.c.b16 %v3468, %v3462
        %v4039 = vpack.c.b16 %v3469, %v3463
        %v4040 = vpack.c.b16 %v3470, %v3464
        %v4041 = vpack.c.b16 %v3477, %v3471
        %v4042 = vpack.c.b16 %v3478, %v3472
        %v4043 = vpack.c.b16 %v3479, %v3473
        %v4044 = vpack.c.b16 %v3480, %v3474
        %v4045 = vpack.c.b16 %v3481, %v3475
        %v4046 = vpack.c.b16 %v3482, %v3476
        %v4047 = vpack.c.b16 %v3489, %v3483
        %v4048 = vpack.c.b16 %v3490, %v3484
        %v4049 = vpack.c.b16 %v3491, %v3485
        %v4050 = vpack.c.b16 %v3492, %v3486
        %v4051 = vpack.c.b16 %v3493, %v3487
        %v4052 = vpack.c.b16 %v3494, %v3488
        %v4053 = vpack.c.b16 %v3501, %v3495
        %v4054 = vpack.c.b16 %v3502, %v3496
        %v4055 = vpack.c.b16 %v3503, %v3497
        %v4056 = vpack.c.b16 %v3504, %v3498
        %v4057 = vpack.c.b16 %v3505, %v3499
        %v4058 = vpack.c.b16 %v3506, %v3500
        %v4059 = vpack.c.b16 %v3513, %v3507
        %v4060 = vpack.c.b16 %v3514, %v3508
        %v4061 = vpack.c.b16 %v3515, %v3509
        %v4062 = vpack.c.b16 %v3516, %v3510
        %v4063 = vpack.c.b16 %v3517, %v3511
        %v4064 = vpack.c.b16 %v3518, %v3512
        %v4065 = vpack.c.b16 %v3525, %v3519
        %v4066 = vpack.c.b16 %v3526, %v3520
        %v4067 = vpack.c.b16 %v3527, %v3521
        %v4068 = vpack.c.b16 %v3528, %v3522
        %v4069 = vpack.c.b16 %v3529, %v3523
        %v4070 = vpack.c.b16 %v3530, %v3524
        %v4071 = vpack.c.b16 %v3537, %v3531
        %v4072 = vpack.c.b16 %v3538, %v3532
        %v4073 = vpack.c.b16 %v3539, %v3533
        %v4074 = vpack.c.b16 %v3540, %v3534
        %v4075 = vpack.c.b16 %v3541, %v3535
        %v4076 = vpack.c.b16 %v3542, %v3536
        %v4077 = vpack.c.b16 %v3549, %v3543
        %v4078 = vpack.c.b16 %v3550, %v3544
        %v4079 = vpack.c.b16 %v3551, %v3545
        %v4080 = vpack.c.b16 %v3552, %v3546
        %v4081 = vpack.c.b16 %v3553, %v3547
        %v4082 = vpack.c.b16 %v3554, %v3548
        %v4083 = vpack.c.b16 %v3561, %v3555
        %v4084 = vpack.c.b16 %v3562, %v3556
        %v4085 = vpack.c.b16 %v3563, %v3557
        %v4086 = vpack.c.b16 %v3564, %v3558
        %v4087 = vpack.c.b16 %v3565, %v3559
        %v4088 = vpack.c.b16 %v3566, %v3560
        %v4089 = vpack.c.b16 %v3573, %v3567
        %v4090 = vpack.c.b16 %v3574, %v3568
        %v4091 = vpack.c.b16 %v3575, %v3569
        %v4092 = vpack.c.b16 %v3576, %v3570
        %v4093 = vpack.c.b16 %v3577, %v3571
        %v4094 = vpack.c.b16 %v3578, %v3572
        %v4095 = vpack.c.b16 %v3585, %v3579
        %v4096 = vpack.c.b16 %v3586, %v3580
        %v4097 = vpack.c.b16 %v3587, %v3581
        %v4098 = vpack.c.b16 %v3588, %v3582
        %v4099 = vpack.c.b16 %v3589, %v3583
        %v4100 = vpack.c.b16 %v3590, %v3584
        %v4101 = vpack.c.b16 %v3597, %v3591
        %v4102 = vpack.c.b16 %v3598, %v3592
        %v4103 = vpack.c.b16 %v3599, %v3593
        %v4104 = vpack.c.b16 %v3600, %v3594
        %v4105 = vpack.c.b16 %v3601, %v3595
        %v4106 = vpack.c.b16 %v3602, %v3596
        %v4107 = vpack.c.b16 %v3609, %v3603
        %v4108 = vpack.c.b16 %v3610, %v3604
        %v4109 = vpack.c.b16 %v3611, %v3605
        %v4110 = vpack.c.b16 %v3612, %v3606
        %v4111 = vpack.c.b16 %v3613, %v3607
        %v4112 = vpack.c.b16 %v3614, %v3608
        %v4113 = vpack.c.b16 %v3621, %v3615
        %v4114 = vpack.c.b16 %v3622, %v3616
        %v4115 = vpack.c.b16 %v3623, %v3617
        %v4116 = vpack.c.b16 %v3624, %v3618
        %v4117 = vpack.c.b16 %v3625, %v3619
        %v4118 = vpack.c.b16 %v3626, %v3620
        %v4119 = vpack.c.b16 %v3633, %v3627
        %v4120 = vpack.c.b16 %v3634, %v3628
        %v4121 = vpack.c.b16 %v3635, %v3629
        %v4122 = vpack.c.b16 %v3636, %v3630
        %v4123 = vpack.c.b16 %v3637, %v3631
        %v4124 = vpack.c.b16 %v3638, %v3632
        %v4125 = vpack.c.b16 %v3645, %v3639
        %v4126 = vpack.c.b16 %v3646, %v3640
        %v4127 = vpack.c.b16 %v3647, %v3641
        %v4128 = vpack.c.b16 %v3648, %v3642
        %v4129 = vpack.c.b16 %v3649, %v3643
        %v4130 = vpack.c.b16 %v3650, %v3644
        %v4131 = vpack.c.b16 %v3657, %v3651
        %v4132 = vpack.c.b16 %v3658, %v3652
        %v4133 = vpack.c.b16 %v3659, %v3653
        %v4134 = vpack.c.b16 %v3660, %v3654
        %v4135 = vpack.c.b16 %v3661, %v3655
        %v4136 = vpack.c.b16 %v3662, %v3656
        %v4137 = vpack.c.b16 %v3669, %v3663
        %v4138 = vpack.c.b16 %v3670, %v3664
        %v4139 = vpack.c.b16 %v3671, %v3665
        %v4140 = vpack.c.b16 %v3672, %v3666
        %v4141 = vpack.c.b16 %v3673, %v3667
        %v4142 = vpack.c.b16 %v3674, %v3668
        %v4143 = vpack.c.b16 %v3681, %v3675
        %v4144 = vpack.c.b16 %v3682, %v3676
        %v4145 = vpack.c.b16 %v3683, %v3677
        %v4146 = vpack.c.b16 %v3684, %v3678
        %v4147 = vpack.c.b16 %v3685, %v3679
        %v4148 = vpack.c.b16 %v3686, %v3680
        %v4149 = vpack.c.b16 %v3693, %v3687
        %v4150 = vpack.c.b16 %v3694, %v3688
        %v4151 = vpack.c.b16 %v3695, %v3689
        %v4152 = vpack.c.b16 %v3696, %v3690
        %v4153 = vpack.c.b16 %v3697, %v3691
        %v4154 = vpack.c.b16 %v3698, %v3692
        %v4155 = vpack.c.b16 %v3705, %v3699
        %v4156 = vpack.c.b16 %v3706, %v3700
        %v4157 = vpack.c.b16 %v3707, %v3701
        %v4158 = vpack.c.b16 %v3708, %v3702
        %v4159 = vpack.c.b16 %v3709, %v3703
        %v4160 = vpack.c.b16 %v3710, %v3704
        %v4161 = vpack.c.b16 %v3717, %v3711
        %v4162 = vpack.c.b16 %v3718, %v3712
        %v4163 = vpack.c.b16 %v3719, %v3713
        %v4164 = vpack.c.b16 %v3720, %v3714
        %v4165 = vpack.c.b16 %v3721, %v3715
        %v4166 = vpack.c.b16 %v3722, %v3716
        %v4167 = vpack.c.b16 %v3729, %v3723
        %v4168 = vpack.c.b16 %v3730, %v3724
        %v4169 = vpack.c.b16 %v3731, %v3725
        %v4170 = vpack.c.b16 %v3732, %v3726
        %v4171 = vpack.c.b16 %v3733, %v3727
        %v4172 = vpack.c.b16 %v3734, %v3728
        %v4173 = vpack.c.b16 %v3741, %v3735
        %v4174 = vpack.c.b16 %v3742, %v3736
        %v4175 = vpack.c.b16 %v3743, %v3737
        %v4176 = vpack.c.b16 %v3744, %v3738
        %v4177 = vpack.c.b16 %v3745, %v3739
        %v4178 = vpack.c.b16 %v3746, %v3740
        %v4179 = vpack.c.b16 %v3753, %v3747
        %v4180 = vpack.c.b16 %v3754, %v3748
        %v4181 = vpack.c.b16 %v3755, %v3749
        %v4182 = vpack.c.b16 %v3756, %v3750
        %v4183 = vpack.c.b16 %v3757, %v3751
        %v4184 = vpack.c.b16 %v3758, %v3752
        %v4185 = vpack.c.b16 %v3765, %v3759
        %v4186 = vpack.c.b16 %v3766, %v3760
        %v4187 = vpack.c.b16 %v3767, %v3761
        %v4188 = vpack.c.b16 %v3768, %v3762
        %v4189 = vpack.c.b16 %v3769, %v3763
        %v4190 = vpack.c.b16 %v3770, %v3764
        %v4191 = vpack.c.b16 %v3777, %v3771
        %v4192 = vpack.c.b16 %v3778, %v3772
        %v4193 = vpack.c.b16 %v3779, %v3773
        %v4194 = vpack.c.b16 %v3780, %v3774
        %v4195 = vpack.c.b16 %v3781, %v3775
        %v4196 = vpack.c.b16 %v3782, %v3776
        %v4197 = vpack.c.b16 %v3789, %v3783
        %v4198 = vpack.c.b16 %v3790, %v3784
        %v4199 = vpack.c.b16 %v3791, %v3785
        %v4200 = vpack.c.b16 %v3792, %v3786
        %v4201 = vpack.c.b16 %v3793, %v3787
        %v4202 = vpack.c.b16 %v3794, %v3788
        %v4203 = vpack.c.b16 %v3801, %v3795
        %v4204 = vpack.c.b16 %v3802, %v3796
        %v4205 = vpack.c.b16 %v3803, %v3797
        %v4206 = vpack.c.b16 %v3804, %v3798
        %v4207 = vpack.c.b16 %v3805, %v3799
        %v4208 = vpack.c.b16 %v3806, %v3800
        %v4209 = vpack.c.b16 %v3813, %v3807
        %v4210 = vpack.c.b16 %v3814, %v3808
        %v4211 = vpack.c.b16 %v3815, %v3809
        %v4212 = vpack.c.b16 %v3816, %v3810
        %v4213 = vpack.c.b16 %v3817, %v3811
        %v4214 = vpack.c.b16 %v3818, %v3812
        %v4215 = vpack.c.b16 %v3825, %v3819
        %v4216 = vpack.c.b16 %v3826, %v3820
        %v4217 = vpack.c.b16 %v3827, %v3821
        %v4218 = vpack.c.b16 %v3828, %v3822
        %v4219 = vpack.c.b16 %v3829, %v3823
        %v4220 = vpack.c.b16 %v3830, %v3824
        %v4221 = vpack.c.b16 %v3837, %v3831
        %v4222 = vpack.c.b16 %v3838, %v3832
        %v4223 = vpack.c.b16 %v3839, %v3833
        %v4224 = vpack.c.b16 %v3840, %v3834
        %v4225 = vpack.c.b16 %v3841, %v3835
        %v4226 = vpack.c.b16 %v3842, %v3836
        %4611 = vmatprep.subr.bf16.mxu0 %v3844
        %4612 = vmatpush1.bf16.msra.mxu0 %v3843
        %4613 = vmatprep.subr.bf16.mxu0 %v3850
        %4614 = vmatpush1.bf16.msra.mxu0 %v3849
        %4615 = vmatprep.subr.bf16.mxu0 %v3856
        %4616 = vmatpush1.bf16.msra.mxu0 %v3855
        %4617 = vmatprep.subr.bf16.mxu0 %v3862
        %4618 = vmatpush1.bf16.msra.mxu0 %v3861
        %4619 = vmatprep.subr.bf16.mxu0 %v3868
        %4620 = vmatpush1.bf16.msra.mxu0 %v3867
        %4621 = vmatprep.subr.bf16.mxu0 %v3874
        %4622 = vmatpush1.bf16.msra.mxu0 %v3873
        %4623 = vmatprep.subr.bf16.mxu0 %v3880
        %4624 = vmatpush1.bf16.msra.mxu0 %v3879
        %4625 = vmatprep.subr.bf16.mxu0 %v3886
        %4626 = vmatpush1.bf16.msra.mxu0 %v3885
        %4627 = vmatprep.subr.bf16.mxu0 %v3892
        %4628 = vmatpush1.bf16.msra.mxu0 %v3891
        %4629 = vmatprep.subr.bf16.mxu0 %v3898
        %4630 = vmatpush1.bf16.msra.mxu0 %v3897
        %4631 = vmatprep.subr.bf16.mxu0 %v3904
        %4632 = vmatpush1.bf16.msra.mxu0 %v3903
        %4633 = vmatprep.subr.bf16.mxu0 %v3910
        %4634 = vmatpush1.bf16.msra.mxu0 %v3909
        %4635 = vmatprep.subr.bf16.mxu0 %v3916
        %4636 = vmatpush1.bf16.msra.mxu0 %v3915
        %4637 = vmatprep.subr.bf16.mxu0 %v3922
        %4638 = vmatpush1.bf16.msra.mxu0 %v3921
        %4639 = vmatprep.subr.bf16.mxu0 %v3928
        %4640 = vmatpush1.bf16.msra.mxu0 %v3927
        %4641 = vmatprep.subr.bf16.mxu0 %v3934
        %4642 = vmatpush1.bf16.msra.mxu0 %v3933
        %4643 = vmatprep.mubr.bf16.mxu0 %v2268
        %4644 = vmatmul.mubr.bf16.gmra.mrb[0].mxu0 %v2267
        %v4645 = vpop.f32.mrb[0].mxu0
        %v4646 = vadd.f32 %v2664, %v4645
        %v4647 = vpop.f32.mrb[0].mxu0
        %v4648 = vadd.f32 %v2668, %v4647
        %v4649 = vpop.f32.mrb[0].mxu0
        %v4650 = vpop.f32.mrb[0].mxu0
        %4651 = vdwg.mxu0
        %4652 = vmatprep.subr.bf16.mxu0 %v3940
        %4653 = vmatpush1.bf16.msra.mxu0 %v3939
        %4654 = vmatprep.subr.bf16.mxu0 %v3946
        %4655 = vmatpush1.bf16.msra.mxu0 %v3945
        %4656 = vmatprep.subr.bf16.mxu0 %v3952
        %4657 = vmatpush1.bf16.msra.mxu0 %v3951
        %4658 = vmatprep.subr.bf16.mxu0 %v3958
        %4659 = vmatpush1.bf16.msra.mxu0 %v3957
        %4660 = vmatprep.subr.bf16.mxu0 %v3964
        %4661 = vmatpush1.bf16.msra.mxu0 %v3963
        %4662 = vmatprep.subr.bf16.mxu0 %v3970
        %4663 = vmatpush1.bf16.msra.mxu0 %v3969
        %4664 = vmatprep.subr.bf16.mxu0 %v3976
        %4665 = vmatpush1.bf16.msra.mxu0 %v3975
        %4666 = vmatprep.subr.bf16.mxu0 %v3982
        %4667 = vmatpush1.bf16.msra.mxu0 %v3981
        %4668 = vmatprep.subr.bf16.mxu0 %v3988
        %4669 = vmatpush1.bf16.msra.mxu0 %v3987
        %4670 = vmatprep.subr.bf16.mxu0 %v3994
        %4671 = vmatpush1.bf16.msra.mxu0 %v3993
        %4672 = vmatprep.subr.bf16.mxu0 %v4000
        %4673 = vmatpush1.bf16.msra.mxu0 %v3999
        %4674 = vmatprep.subr.bf16.mxu0 %v4006
        %4675 = vmatpush1.bf16.msra.mxu0 %v4005
        %4676 = vmatprep.subr.bf16.mxu0 %v4012
        %4677 = vmatpush1.bf16.msra.mxu0 %v4011
        %4678 = vmatprep.subr.bf16.mxu0 %v4018
        %4679 = vmatpush1.bf16.msra.mxu0 %v4017
        %4680 = vmatprep.subr.bf16.mxu0 %v4024
        %4681 = vmatpush1.bf16.msra.mxu0 %v4023
        %4682 = vmatprep.subr.bf16.mxu0 %v4030
        %4683 = vmatpush1.bf16.msra.mxu0 %v4029
        %4684 = vmatprep.mubr.bf16.mxu0 %v2270
        %4685 = vmatmul.mubr.bf16.gmra.mrb[0].mxu0 %v2269
        %v4686 = vpop.f32.mrb[0].mxu0
        %v4687 = vadd.f32 %v4646, %v4686
        %v4688 = vpop.f32.mrb[0].mxu0
        %v4689 = vadd.f32 %v4648, %v4688
        %v4690 = vpop.f32.mrb[0].mxu0
        %v4691 = vpop.f32.mrb[0].mxu0
        %4692 = vdwg.mxu0
        %4693 = vmatprep.subr.bf16.mxu0 %v4036
        %4694 = vmatpush1.bf16.msra.mxu0 %v4035
        %4695 = vmatprep.subr.bf16.mxu0 %v4042
        %4696 = vmatpush1.bf16.msra.mxu0 %v4041
        %4697 = vmatprep.subr.bf16.mxu0 %v4048
        %4698 = vmatpush1.bf16.msra.mxu0 %v4047
        %4699 = vmatprep.subr.bf16.mxu0 %v4054
        %4700 = vmatpush1.bf16.msra.mxu0 %v4053
        %4701 = vmatprep.subr.bf16.mxu0 %v4060
        %4702 = vmatpush1.bf16.msra.mxu0 %v4059
        %4703 = vmatprep.subr.bf16.mxu0 %v4066
        %4704 = vmatpush1.bf16.msra.mxu0 %v4065
        %4705 = vmatprep.subr.bf16.mxu0 %v4072
        %4706 = vmatpush1.bf16.msra.mxu0 %v4071
        %4707 = vmatprep.subr.bf16.mxu0 %v4078
        %4708 = vmatpush1.bf16.msra.mxu0 %v4077
        %4709 = vmatprep.subr.bf16.mxu0 %v4084
        %4710 = vmatpush1.bf16.msra.mxu0 %v4083
        %4711 = vmatprep.subr.bf16.mxu0 %v4090
        %4712 = vmatpush1.bf16.msra.mxu0 %v4089
        %4713 = vmatprep.subr.bf16.mxu0 %v4096
        %4714 = vmatpush1.bf16.msra.mxu0 %v4095
        %4715 = vmatprep.subr.bf16.mxu0 %v4102
        %4716 = vmatpush1.bf16.msra.mxu0 %v4101
        %4717 = vmatprep.subr.bf16.mxu0 %v4108
        %4718 = vmatpush1.bf16.msra.mxu0 %v4107
        %4719 = vmatprep.subr.bf16.mxu0 %v4114
        %4720 = vmatpush1.bf16.msra.mxu0 %v4113
        %4721 = vmatprep.subr.bf16.mxu0 %v4120
        %4722 = vmatpush1.bf16.msra.mxu0 %v4119
        %4723 = vmatprep.subr.bf16.mxu0 %v4126
        %4724 = vmatpush1.bf16.msra.mxu0 %v4125
        %4725 = vmatprep.mubr.bf16.mxu0 %v2272
        %4726 = vmatmul.mubr.bf16.gmra.mrb[0].mxu0 %v2271
        %v4727 = vpop.f32.mrb[0].mxu0
        %v4728 = vadd.f32 %v4687, %v4727
        %v4729 = vpop.f32.mrb[0].mxu0
        %v4730 = vadd.f32 %v4689, %v4729
        %v4731 = vpop.f32.mrb[0].mxu0
        %v4732 = vpop.f32.mrb[0].mxu0
        %4733 = vdwg.mxu0
        %4734 = vmatprep.subr.bf16.mxu0 %v4132
        %4735 = vmatpush1.bf16.msra.mxu0 %v4131
        %4736 = vmatprep.subr.bf16.mxu0 %v4138
        %4737 = vmatpush1.bf16.msra.mxu0 %v4137
        %4738 = vmatprep.subr.bf16.mxu0 %v4144
        %4739 = vmatpush1.bf16.msra.mxu0 %v4143
        %4740 = vmatprep.subr.bf16.mxu0 %v4150
        %4741 = vmatpush1.bf16.msra.mxu0 %v4149
        %4742 = vmatprep.subr.bf16.mxu0 %v4156
        %4743 = vmatpush1.bf16.msra.mxu0 %v4155
        %4744 = vmatprep.subr.bf16.mxu0 %v4162
        %4745 = vmatpush1.bf16.msra.mxu0 %v4161
        %4746 = vmatprep.subr.bf16.mxu0 %v4168
        %4747 = vmatpush1.bf16.msra.mxu0 %v4167
        %4748 = vmatprep.subr.bf16.mxu0 %v4174
        %4749 = vmatpush1.bf16.msra.mxu0 %v4173
        %4750 = vmatprep.subr.bf16.mxu0 %v4180
        %4751 = vmatpush1.bf16.msra.mxu0 %v4179
        %4752 = vmatprep.subr.bf16.mxu0 %v4186
        %4753 = vmatpush1.bf16.msra.mxu0 %v4185
        %4754 = vmatprep.subr.bf16.mxu0 %v4192
        %4755 = vmatpush1.bf16.msra.mxu0 %v4191
        %4756 = vmatprep.subr.bf16.mxu0 %v4198
        %4757 = vmatpush1.bf16.msra.mxu0 %v4197
        %4758 = vmatprep.subr.bf16.mxu0 %v4204
        %4759 = vmatpush1.bf16.msra.mxu0 %v4203
        %4760 = vmatprep.subr.bf16.mxu0 %v4210
        %4761 = vmatpush1.bf16.msra.mxu0 %v4209
        %4762 = vmatprep.subr.bf16.mxu0 %v4216
        %4763 = vmatpush1.bf16.msra.mxu0 %v4215
        %4764 = vmatprep.subr.bf16.mxu0 %v4222
        %4765 = vmatpush1.bf16.msra.mxu0 %v4221
        %4766 = vmatprep.mubr.bf16.mxu0 %v2274
        %4767 = vmatmul.mubr.bf16.gmra.mrb[0].mxu0 %v2273
        %v4768 = vpop.f32.mrb[0].mxu0
        %v4769 = vadd.f32 %v4728, %v4768
        %v4770 = vpop.f32.mrb[0].mxu0
        %v4771 = vadd.f32 %v4730, %v4770
        %v4772 = vpop.f32.mrb[0].mxu0
        %v4773 = vpop.f32.mrb[0].mxu0
        %4774 = vdwg.mxu0
        %4775 = vmatprep.subr.bf16.mxu0 %v3846
        %4776 = vmatpush1.bf16.msra.mxu0 %v3845
        %4777 = vmatprep.subr.bf16.mxu0 %v3852
        %4778 = vmatpush1.bf16.msra.mxu0 %v3851
        %4779 = vmatprep.subr.bf16.mxu0 %v3858
        %4780 = vmatpush1.bf16.msra.mxu0 %v3857
        %4781 = vmatprep.subr.bf16.mxu0 %v3864
        %4782 = vmatpush1.bf16.msra.mxu0 %v3863
        %4783 = vmatprep.subr.bf16.mxu0 %v3870
        %4784 = vmatpush1.bf16.msra.mxu0 %v3869
        %4785 = vmatprep.subr.bf16.mxu0 %v3876
        %4786 = vmatpush1.bf16.msra.mxu0 %v3875
        %4787 = vmatprep.subr.bf16.mxu0 %v3882
        %4788 = vmatpush1.bf16.msra.mxu0 %v3881
        %4789 = vmatprep.subr.bf16.mxu0 %v3888
        %4790 = vmatpush1.bf16.msra.mxu0 %v3887
        %4791 = vmatprep.subr.bf16.mxu0 %v3894
        %4792 = vmatpush1.bf16.msra.mxu0 %v3893
        %4793 = vmatprep.subr.bf16.mxu0 %v3900
        %4794 = vmatpush1.bf16.msra.mxu0 %v3899
        %4795 = vmatprep.subr.bf16.mxu0 %v3906
        %4796 = vmatpush1.bf16.msra.mxu0 %v3905
        %4797 = vmatprep.subr.bf16.mxu0 %v3912
        %4798 = vmatpush1.bf16.msra.mxu0 %v3911
        %4799 = vmatprep.subr.bf16.mxu0 %v3918
        %4800 = vmatpush1.bf16.msra.mxu0 %v3917
        %4801 = vmatprep.subr.bf16.mxu0 %v3924
        %4802 = vmatpush1.bf16.msra.mxu0 %v3923
        %4803 = vmatprep.subr.bf16.mxu0 %v3930
        %4804 = vmatpush1.bf16.msra.mxu0 %v3929
        %4805 = vmatprep.subr.bf16.mxu0 %v3936
        %4806 = vmatpush1.bf16.msra.mxu0 %v3935
        %4807 = vmatprep.mubr.bf16.mxu0 %v2268
        %4808 = vmatmul.mubr.bf16.gmra.mrb[0].mxu0 %v2267
        %v4809 = vpop.f32.mrb[0].mxu0
        %v4810 = vadd.f32 %v2672, %v4809
        %v4811 = vpop.f32.mrb[0].mxu0
        %v4812 = vadd.f32 %v2676, %v4811
        %v4813 = vpop.f32.mrb[0].mxu0
        %v4814 = vpop.f32.mrb[0].mxu0
        %4815 = vdwg.mxu0
        %4816 = vmatprep.subr.bf16.mxu0 %v3942
        %4817 = vmatpush1.bf16.msra.mxu0 %v3941
        %4818 = vmatprep.subr.bf16.mxu0 %v3948
        %4819 = vmatpush1.bf16.msra.mxu0 %v3947
        %4820 = vmatprep.subr.bf16.mxu0 %v3954
        %4821 = vmatpush1.bf16.msra.mxu0 %v3953
        %4822 = vmatprep.subr.bf16.mxu0 %v3960
        %4823 = vmatpush1.bf16.msra.mxu0 %v3959
        %4824 = vmatprep.subr.bf16.mxu0 %v3966
        %4825 = vmatpush1.bf16.msra.mxu0 %v3965
        %4826 = vmatprep.subr.bf16.mxu0 %v3972
        %4827 = vmatpush1.bf16.msra.mxu0 %v3971
        %4828 = vmatprep.subr.bf16.mxu0 %v3978
        %4829 = vmatpush1.bf16.msra.mxu0 %v3977
        %4830 = vmatprep.subr.bf16.mxu0 %v3984
        %4831 = vmatpush1.bf16.msra.mxu0 %v3983
        %4832 = vmatprep.subr.bf16.mxu0 %v3990
        %4833 = vmatpush1.bf16.msra.mxu0 %v3989
        %4834 = vmatprep.subr.bf16.mxu0 %v3996
        %4835 = vmatpush1.bf16.msra.mxu0 %v3995
        %4836 = vmatprep.subr.bf16.mxu0 %v4002
        %4837 = vmatpush1.bf16.msra.mxu0 %v4001
        %4838 = vmatprep.subr.bf16.mxu0 %v4008
        %4839 = vmatpush1.bf16.msra.mxu0 %v4007
        %4840 = vmatprep.subr.bf16.mxu0 %v4014
        %4841 = vmatpush1.bf16.msra.mxu0 %v4013
        %4842 = vmatprep.subr.bf16.mxu0 %v4020
        %4843 = vmatpush1.bf16.msra.mxu0 %v4019
        %4844 = vmatprep.subr.bf16.mxu0 %v4026
        %4845 = vmatpush1.bf16.msra.mxu0 %v4025
        %4846 = vmatprep.subr.bf16.mxu0 %v4032
        %4847 = vmatpush1.bf16.msra.mxu0 %v4031
        %4848 = vmatprep.mubr.bf16.mxu0 %v2270
        %4849 = vmatmul.mubr.bf16.gmra.mrb[0].mxu0 %v2269
        %v4850 = vpop.f32.mrb[0].mxu0
        %v4851 = vadd.f32 %v4810, %v4850
        %v4852 = vpop.f32.mrb[0].mxu0
        %v4853 = vadd.f32 %v4812, %v4852
        %v4854 = vpop.f32.mrb[0].mxu0
        %v4855 = vpop.f32.mrb[0].mxu0
        %4856 = vdwg.mxu0
        %4857 = vmatprep.subr.bf16.mxu0 %v4038
        %4858 = vmatpush1.bf16.msra.mxu0 %v4037
        %4859 = vmatprep.subr.bf16.mxu0 %v4044
        %4860 = vmatpush1.bf16.msra.mxu0 %v4043
        %4861 = vmatprep.subr.bf16.mxu0 %v4050
        %4862 = vmatpush1.bf16.msra.mxu0 %v4049
        %4863 = vmatprep.subr.bf16.mxu0 %v4056
        %4864 = vmatpush1.bf16.msra.mxu0 %v4055
        %4865 = vmatprep.subr.bf16.mxu0 %v4062
        %4866 = vmatpush1.bf16.msra.mxu0 %v4061
        %4867 = vmatprep.subr.bf16.mxu0 %v4068
        %4868 = vmatpush1.bf16.msra.mxu0 %v4067
        %4869 = vmatprep.subr.bf16.mxu0 %v4074
        %4870 = vmatpush1.bf16.msra.mxu0 %v4073
        %4871 = vmatprep.subr.bf16.mxu0 %v4080
        %4872 = vmatpush1.bf16.msra.mxu0 %v4079
        %4873 = vmatprep.subr.bf16.mxu0 %v4086
        %4874 = vmatpush1.bf16.msra.mxu0 %v4085
        %4875 = vmatprep.subr.bf16.mxu0 %v4092
        %4876 = vmatpush1.bf16.msra.mxu0 %v4091
        %4877 = vmatprep.subr.bf16.mxu0 %v4098
        %4878 = vmatpush1.bf16.msra.mxu0 %v4097
        %4879 = vmatprep.subr.bf16.mxu0 %v4104
        %4880 = vmatpush1.bf16.msra.mxu0 %v4103
        %4881 = vmatprep.subr.bf16.mxu0 %v4110
        %4882 = vmatpush1.bf16.msra.mxu0 %v4109
        %4883 = vmatprep.subr.bf16.mxu0 %v4116
        %4884 = vmatpush1.bf16.msra.mxu0 %v4115
        %4885 = vmatprep.subr.bf16.mxu0 %v4122
        %4886 = vmatpush1.bf16.msra.mxu0 %v4121
        %4887 = vmatprep.subr.bf16.mxu0 %v4128
        %4888 = vmatpush1.bf16.msra.mxu0 %v4127
        %4889 = vmatprep.mubr.bf16.mxu0 %v2272
        %4890 = vmatmul.mubr.bf16.gmra.mrb[0].mxu0 %v2271
        %v4891 = vpop.f32.mrb[0].mxu0
        %v4892 = vadd.f32 %v4851, %v4891
        %v4893 = vpop.f32.mrb[0].mxu0
        %v4894 = vadd.f32 %v4853, %v4893
        %v4895 = vpop.f32.mrb[0].mxu0
        %v4896 = vpop.f32.mrb[0].mxu0
        %4897 = vdwg.mxu0
        %4898 = vmatprep.subr.bf16.mxu0 %v4134
        %4899 = vmatpush1.bf16.msra.mxu0 %v4133
        %4900 = vmatprep.subr.bf16.mxu0 %v4140
        %4901 = vmatpush1.bf16.msra.mxu0 %v4139
        %4902 = vmatprep.subr.bf16.mxu0 %v4146
        %4903 = vmatpush1.bf16.msra.mxu0 %v4145
        %4904 = vmatprep.subr.bf16.mxu0 %v4152
        %4905 = vmatpush1.bf16.msra.mxu0 %v4151
        %4906 = vmatprep.subr.bf16.mxu0 %v4158
        %4907 = vmatpush1.bf16.msra.mxu0 %v4157
        %4908 = vmatprep.subr.bf16.mxu0 %v4164
        %4909 = vmatpush1.bf16.msra.mxu0 %v4163
        %4910 = vmatprep.subr.bf16.mxu0 %v4170
        %4911 = vmatpush1.bf16.msra.mxu0 %v4169
        %4912 = vmatprep.subr.bf16.mxu0 %v4176
        %4913 = vmatpush1.bf16.msra.mxu0 %v4175
        %4914 = vmatprep.subr.bf16.mxu0 %v4182
        %4915 = vmatpush1.bf16.msra.mxu0 %v4181
        %4916 = vmatprep.subr.bf16.mxu0 %v4188
        %4917 = vmatpush1.bf16.msra.mxu0 %v4187
        %4918 = vmatprep.subr.bf16.mxu0 %v4194
        %4919 = vmatpush1.bf16.msra.mxu0 %v4193
        %4920 = vmatprep.subr.bf16.mxu0 %v4200
        %4921 = vmatpush1.bf16.msra.mxu0 %v4199
        %4922 = vmatprep.subr.bf16.mxu0 %v4206
        %4923 = vmatpush1.bf16.msra.mxu0 %v4205
        %4924 = vmatprep.subr.bf16.mxu0 %v4212
        %4925 = vmatpush1.bf16.msra.mxu0 %v4211
        %4926 = vmatprep.subr.bf16.mxu0 %v4218
        %4927 = vmatpush1.bf16.msra.mxu0 %v4217
        %4928 = vmatprep.subr.bf16.mxu0 %v4224
        %4929 = vmatpush1.bf16.msra.mxu0 %v4223
        %4930 = vmatprep.mubr.bf16.mxu0 %v2274
        %4931 = vmatmul.mubr.bf16.gmra.mrb[0].mxu0 %v2273
        %v4932 = vpop.f32.mrb[0].mxu0
        %v4933 = vadd.f32 %v4892, %v4932
        %v4934 = vpop.f32.mrb[0].mxu0
        %v4935 = vadd.f32 %v4894, %v4934
        %v4936 = vpop.f32.mrb[0].mxu0
        %v4937 = vpop.f32.mrb[0].mxu0
        %4938 = vdwg.mxu0
        %4939 = vmatprep.subr.bf16.mxu0 %v3848
        %4940 = vmatpush1.bf16.msra.mxu0 %v3847
        %4941 = vmatprep.subr.bf16.mxu0 %v3854
        %4942 = vmatpush1.bf16.msra.mxu0 %v3853
        %4943 = vmatprep.subr.bf16.mxu0 %v3860
        %4944 = vmatpush1.bf16.msra.mxu0 %v3859
        %4945 = vmatprep.subr.bf16.mxu0 %v3866
        %4946 = vmatpush1.bf16.msra.mxu0 %v3865
        %4947 = vmatprep.subr.bf16.mxu0 %v3872
        %4948 = vmatpush1.bf16.msra.mxu0 %v3871
        %4949 = vmatprep.subr.bf16.mxu0 %v3878
        %4950 = vmatpush1.bf16.msra.mxu0 %v3877
        %4951 = vmatprep.subr.bf16.mxu0 %v3884
        %4952 = vmatpush1.bf16.msra.mxu0 %v3883
        %4953 = vmatprep.subr.bf16.mxu0 %v3890
        %4954 = vmatpush1.bf16.msra.mxu0 %v3889
        %4955 = vmatprep.subr.bf16.mxu0 %v3896
        %4956 = vmatpush1.bf16.msra.mxu0 %v3895
        %4957 = vmatprep.subr.bf16.mxu0 %v3902
        %4958 = vmatpush1.bf16.msra.mxu0 %v3901
        %4959 = vmatprep.subr.bf16.mxu0 %v3908
        %4960 = vmatpush1.bf16.msra.mxu0 %v3907
        %4961 = vmatprep.subr.bf16.mxu0 %v3914
        %4962 = vmatpush1.bf16.msra.mxu0 %v3913
        %4963 = vmatprep.subr.bf16.mxu0 %v3920
        %4964 = vmatpush1.bf16.msra.mxu0 %v3919
        %4965 = vmatprep.subr.bf16.mxu0 %v3926
        %4966 = vmatpush1.bf16.msra.mxu0 %v3925
        %4967 = vmatprep.subr.bf16.mxu0 %v3932
        %4968 = vmatpush1.bf16.msra.mxu0 %v3931
        %4969 = vmatprep.subr.bf16.mxu0 %v3938
        %4970 = vmatpush1.bf16.msra.mxu0 %v3937
        %4971 = vmatprep.mubr.bf16.mxu0 %v2268
        %4972 = vmatmul.mubr.bf16.gmra.mrb[0].mxu0 %v2267
        %v4973 = vpop.f32.mrb[0].mxu0
        %v4974 = vadd.f32 %v2680, %v4973
        %v4975 = vpop.f32.mrb[0].mxu0
        %v4976 = vadd.f32 %v2684, %v4975
        %v4977 = vpop.f32.mrb[0].mxu0
        %v4978 = vpop.f32.mrb[0].mxu0
        %4979 = vdwg.mxu0
        %4980 = vmatprep.subr.bf16.mxu0 %v3944
        %4981 = vmatpush1.bf16.msra.mxu0 %v3943
        %4982 = vmatprep.subr.bf16.mxu0 %v3950
        %4983 = vmatpush1.bf16.msra.mxu0 %v3949
        %4984 = vmatprep.subr.bf16.mxu0 %v3956
        %4985 = vmatpush1.bf16.msra.mxu0 %v3955
        %4986 = vmatprep.subr.bf16.mxu0 %v3962
        %4987 = vmatpush1.bf16.msra.mxu0 %v3961
        %4988 = vmatprep.subr.bf16.mxu0 %v3968
        %4989 = vmatpush1.bf16.msra.mxu0 %v3967
        %4990 = vmatprep.subr.bf16.mxu0 %v3974
        %4991 = vmatpush1.bf16.msra.mxu0 %v3973
        %4992 = vmatprep.subr.bf16.mxu0 %v3980
        %4993 = vmatpush1.bf16.msra.mxu0 %v3979
        %4994 = vmatprep.subr.bf16.mxu0 %v3986
        %4995 = vmatpush1.bf16.msra.mxu0 %v3985
        %4996 = vmatprep.subr.bf16.mxu0 %v3992
        %4997 = vmatpush1.bf16.msra.mxu0 %v3991
        %4998 = vmatprep.subr.bf16.mxu0 %v3998
        %4999 = vmatpush1.bf16.msra.mxu0 %v3997
        %5000 = vmatprep.subr.bf16.mxu0 %v4004
        %5001 = vmatpush1.bf16.msra.mxu0 %v4003
        %5002 = vmatprep.subr.bf16.mxu0 %v4010
        %5003 = vmatpush1.bf16.msra.mxu0 %v4009
        %5004 = vmatprep.subr.bf16.mxu0 %v4016
        %5005 = vmatpush1.bf16.msra.mxu0 %v4015
        %5006 = vmatprep.subr.bf16.mxu0 %v4022
        %5007 = vmatpush1.bf16.msra.mxu0 %v4021
        %5008 = vmatprep.subr.bf16.mxu0 %v4028
        %5009 = vmatpush1.bf16.msra.mxu0 %v4027
        %5010 = vmatprep.subr.bf16.mxu0 %v4034
        %5011 = vmatpush1.bf16.msra.mxu0 %v4033
        %5012 = vmatprep.mubr.bf16.mxu0 %v2270
        %5013 = vmatmul.mubr.bf16.gmra.mrb[0].mxu0 %v2269
        %v5014 = vpop.f32.mrb[0].mxu0
        %v5015 = vadd.f32 %v4974, %v5014
        %v5016 = vpop.f32.mrb[0].mxu0
        %v5017 = vadd.f32 %v4976, %v5016
        %v5018 = vpop.f32.mrb[0].mxu0
        %v5019 = vpop.f32.mrb[0].mxu0
        %5020 = vdwg.mxu0
        %5021 = vmatprep.subr.bf16.mxu0 %v4040
        %5022 = vmatpush1.bf16.msra.mxu0 %v4039
        %5023 = vmatprep.subr.bf16.mxu0 %v4046
        %5024 = vmatpush1.bf16.msra.mxu0 %v4045
        %5025 = vmatprep.subr.bf16.mxu0 %v4052
        %5026 = vmatpush1.bf16.msra.mxu0 %v4051
        %5027 = vmatprep.subr.bf16.mxu0 %v4058
        %5028 = vmatpush1.bf16.msra.mxu0 %v4057
        %5029 = vmatprep.subr.bf16.mxu0 %v4064
        %5030 = vmatpush1.bf16.msra.mxu0 %v4063
        %5031 = vmatprep.subr.bf16.mxu0 %v4070
        %5032 = vmatpush1.bf16.msra.mxu0 %v4069
        %5033 = vmatprep.subr.bf16.mxu0 %v4076
        %5034 = vmatpush1.bf16.msra.mxu0 %v4075
        %5035 = vmatprep.subr.bf16.mxu0 %v4082
        %5036 = vmatpush1.bf16.msra.mxu0 %v4081
        %5037 = vmatprep.subr.bf16.mxu0 %v4088
        %5038 = vmatpush1.bf16.msra.mxu0 %v4087
        %5039 = vmatprep.subr.bf16.mxu0 %v4094
        %5040 = vmatpush1.bf16.msra.mxu0 %v4093
        %5041 = vmatprep.subr.bf16.mxu0 %v4100
        %5042 = vmatpush1.bf16.msra.mxu0 %v4099
        %5043 = vmatprep.subr.bf16.mxu0 %v4106
        %5044 = vmatpush1.bf16.msra.mxu0 %v4105
        %5045 = vmatprep.subr.bf16.mxu0 %v4112
        %5046 = vmatpush1.bf16.msra.mxu0 %v4111
        %5047 = vmatprep.subr.bf16.mxu0 %v4118
        %5048 = vmatpush1.bf16.msra.mxu0 %v4117
        %5049 = vmatprep.subr.bf16.mxu0 %v4124
        %5050 = vmatpush1.bf16.msra.mxu0 %v4123
        %5051 = vmatprep.subr.bf16.mxu0 %v4130
        %5052 = vmatpush1.bf16.msra.mxu0 %v4129
        %5053 = vmatprep.mubr.bf16.mxu0 %v2272
        %5054 = vmatmul.mubr.bf16.gmra.mrb[0].mxu0 %v2271
        %v5055 = vpop.f32.mrb[0].mxu0
        %v5056 = vadd.f32 %v5015, %v5055
        %v5057 = vpop.f32.mrb[0].mxu0
        %v5058 = vadd.f32 %v5017, %v5057
        %v5059 = vpop.f32.mrb[0].mxu0
        %v5060 = vpop.f32.mrb[0].mxu0
        %5061 = vdwg.mxu0
        %5062 = vmatprep.subr.bf16.mxu0 %v4136
        %5063 = vmatpush1.bf16.msra.mxu0 %v4135
        %5064 = vmatprep.subr.bf16.mxu0 %v4142
        %5065 = vmatpush1.bf16.msra.mxu0 %v4141
        %5066 = vmatprep.subr.bf16.mxu0 %v4148
        %5067 = vmatpush1.bf16.msra.mxu0 %v4147
        %5068 = vmatprep.subr.bf16.mxu0 %v4154
        %5069 = vmatpush1.bf16.msra.mxu0 %v4153
        %5070 = vmatprep.subr.bf16.mxu0 %v4160
        %5071 = vmatpush1.bf16.msra.mxu0 %v4159
        %5072 = vmatprep.subr.bf16.mxu0 %v4166
        %5073 = vmatpush1.bf16.msra.mxu0 %v4165
        %5074 = vmatprep.subr.bf16.mxu0 %v4172
        %5075 = vmatpush1.bf16.msra.mxu0 %v4171
        %5076 = vmatprep.subr.bf16.mxu0 %v4178
        %5077 = vmatpush1.bf16.msra.mxu0 %v4177
        %5078 = vmatprep.subr.bf16.mxu0 %v4184
        %5079 = vmatpush1.bf16.msra.mxu0 %v4183
        %5080 = vmatprep.subr.bf16.mxu0 %v4190
        %5081 = vmatpush1.bf16.msra.mxu0 %v4189
        %5082 = vmatprep.subr.bf16.mxu0 %v4196
        %5083 = vmatpush1.bf16.msra.mxu0 %v4195
        %5084 = vmatprep.subr.bf16.mxu0 %v4202
        %5085 = vmatpush1.bf16.msra.mxu0 %v4201
        %5086 = vmatprep.subr.bf16.mxu0 %v4208
        %5087 = vmatpush1.bf16.msra.mxu0 %v4207
        %5088 = vmatprep.subr.bf16.mxu0 %v4214
        %5089 = vmatpush1.bf16.msra.mxu0 %v4213
        %5090 = vmatprep.subr.bf16.mxu0 %v4220
        %5091 = vmatpush1.bf16.msra.mxu0 %v4219
        %5092 = vmatprep.subr.bf16.mxu0 %v4226
        %5093 = vmatpush1.bf16.msra.mxu0 %v4225
        %5094 = vmatprep.mubr.bf16.mxu0 %v2274
        %5095 = vmatmul.mubr.bf16.gmra.mrb[0].mxu0 %v2273
        %v5096 = vpop.f32.mrb[0].mxu0
        %v5097 = vadd.f32 %v5056, %v5096
        %v5098 = vpop.f32.mrb[0].mxu0
        %v5099 = vadd.f32 %v5058, %v5098
        %v5100 = vpop.f32.mrb[0].mxu0
        %v5101 = vpop.f32.mrb[0].mxu0
        %5102 = vdwg.mxu0
        %v5103 = vtanh.pop %v4769
        %v5104 = vtanh.pop %v4771
        %v5105 = vtanh.pop %v4933
        %v5106 = vtanh.pop %v4935
        %v5107 = vtanh.pop %v5097
        %v5108 = vtanh.pop %v5099
        %v5115 = vcombine.low %v5103, %v5104
        %v5116 = vcombine.low %v5105, %v5106
        %v5118 = vunpack.c.l.s4 1983009808
        %v5119 = vunpack.c.0.s8 %v5118
        %v5120 = vlaneseq
        %v5121 = vshrl.u32 %v5120, 7
        %v5122 = vsub.s32 %v5119, %v5121
        %v5123 = vrot.slane %v5115, %v5122
        %v5125 = vunpack.c.l.s4 1983009808
        %v5126 = vunpack.c.0.s8 %v5125
        %v5127 = vlaneseq
        %v5128 = vshrl.u32 %v5127, 7
        %v5129 = vsub.s32 %v5126, %v5128
        %v5130 = vrot.slane %v5116, %v5129
        %v5131 = vcombine.low %v5123, %v5130
        %v5132 = vcombine.low %v5107, %v5108
        %v5134 = vunpack.c.l.s4 1983009808
        %v5135 = vunpack.c.0.s8 %v5134
        %v5136 = vlaneseq
        %v5137 = vshrl.u32 %v5136, 7
        %v5138 = vsub.s32 %v5135, %v5137
        %v5139 = vrot.slane %v5132, %v5138
        %5142 = vst [vmem:[%s305] sm:$0xff] %v5131
        %5143 = vst [vmem:[%s305 + $0x8] sm:$0xf] %v5139
        %s5144 = smul.u32 6, %s18
        %p5145 = scmp.lt.s32.totalorder %s5144, 23
        %s5146 = scalar_select %p5145, %s5144, 23
        %s5147 = smul.addr %s5146, 2
        %s5148 = scalar_lea.vmem %s5, %s5147
        // Predicated region
        $region57: #{single_view_to_3d_point.1} parent=39 // pred_check
          %p5149 = pneg %p151
        $region58: #{single_view_to_3d_point.1} parent=39 // pred_check_branch
          %5151 = sbr.rel (%p5149) target = $region60
        $region59: #{single_view_to_3d_point.1} parent=39 // pred_region
          %s5152 = smul.u32 6, %s18
        $region60: #{single_view_to_3d_point.1} parent=39 // pred_fallthru
          _
      $region40: #{single_view_to_3d_point.1} parent=5 // pred_fallthru
        _
      %p5153 = scmp.le.s32.totalorder 2, %s13
      // Predicated region
      $region61: #{single_view_to_3d_point.1} parent=5 // pred_check
        %p5154 = pneg %p5153
      $region62: #{single_view_to_3d_point.1} parent=5 // pred_check_branch
        %5156 = sbr.rel (%p5154) target = $region64
      $region63: #{single_view_to_3d_point.1} parent=5 // pred_region
        %s5157 = ssub.s32 %s13, 2
        // Predicated region
        $region65: #{single_view_to_3d_point.1} parent=63 // pred_check
          %p5158 = pneg %p157
        $region66: #{single_view_to_3d_point.1} parent=63 // pred_check_branch
          %5160 = sbr.rel (%p5158) target = $region68
        $region67: #{single_view_to_3d_point.1} parent=63 // pred_region
          %s5161 = smul.u32 6, %s19
          %p5162 = scmp.lt.s32.totalorder %s5161, 23
          %s5163 = scalar_select %p5162, %s5161, 23
          %s5164 = smul.addr %s5163, 2
          %s5165 = scalar_lea.vmem %s5, %s5164
        $region68: #{single_view_to_3d_point.1} parent=63 // pred_fallthru
          _
      $region64: #{single_view_to_3d_point.1} parent=5 // pred_fallthru
        _
    $region6: #{single_view_to_3d_point.1} parent=1 // loop_footer
      %s17 = sadd.s32 1, %s13
    $region7: #{single_view_to_3d_point.1} parent=1 // loop_footer_branch
      %12 = sbr.rel target = $region3
    $region8: #{single_view_to_3d_point.1} parent=1 // loop_exit
      _
    %5166 = vsyncpa [#allocation3], 1
    %s5167 = scalar_lea.sflag [#allocation3], 1
    %5168 = vsyncpa %s5167, 1
    %5169 = vsyncpa [#allocation5], 1

</llo_original>
